<compile_context>
chip_gen: v7x
topology: tpu7x:2x2x1
jax: 0.10.0
libtpu: 0.0.40
codegen_flags: <defaults>
</compile_context>

<pallas_src>
import functools
from math import sqrt

import jax
import jax.numpy as jnp
from jax import lax
from jax.experimental import pallas as pl
from jax.experimental.pallas import tpu as pltpu

C = 128           # hidden channel width (fixed by NetS)
KSIZE = 3         # conv kernel size
NUM_LAYERS = 8


def fused_nets_kernel(x_ref, w_ref, o_ref, b_ref, acc_ref, *, D, H, W, dc):
    """One (batch, layer) grid step of the fused 8-layer conv stack.

    x_ref:   (1, D, H, W, 1)              network input (layer-0 seed + residual), f32
    w_ref:   (L, 9, 3*C, C)               ALL layers' folded weights (VMEM-resident), bf16
    o_ref:   (1, D, H, W, C)              lane-dense output block (channel 0 = real output)
    b_ref:   (D+2, H+2, W, 3*C)           scratch: zero-padded, kw-folded, ReLU'd acts, bf16
    acc_ref: (D*H*W, C)                   scratch: carried activation / accumulator, f32
    """
    layer = pl.program_id(1)
    HW = H * W
    M = D * HW
    rows = dc * HW                 # rows per chunk (~128)
    n_chunks = D // dc

    # ---------------- per-batch-item init (runs on every core's first layer) ----------
    @pl.when(layer == 0)
    def _init():
        # Zero only the halo border slabs (the interior is rewritten every layer).
        zdh = jnp.zeros((1, H + 2, W, KSIZE * C), jnp.bfloat16)
        b_ref[0:1, :, :, :] = zdh
        b_ref[D + 1:D + 2, :, :, :] = zdh
        zhh = jnp.zeros((D + 2, 1, W, KSIZE * C), jnp.bfloat16)
        b_ref[:, 0:1, :, :] = zhh
        b_ref[:, H + 1:H + 2, :, :] = zhh
        # Seed the carried activation with x broadcast across lanes (layer-0 folded
        # weight is zero for channels 1..C-1, so redundant lanes never contribute).
        x_col = x_ref[0].reshape(M, 1)
        acc_ref[...] = jnp.broadcast_to(x_col, (M, C))

    # ------------- phase 1: ReLU + kw-fold into the patch buffer (chunked over D) -----
    def build_chunk(ci, carry):
        dbase = ci * dc
        row0 = pl.multiple_of(ci * rows, rows)
        a = jnp.maximum(acc_ref[pl.ds(row0, rows), :], 0.0)           # ReLU once, f32
        r = a.astype(jnp.bfloat16).reshape(dc, H, W, C)               # bf16 MXU operand
        zc = jnp.zeros((dc, H, 1, C), jnp.bfloat16)
        left = jnp.concatenate([zc, r[:, :, :W - 1, :]], axis=2)      # taps at kw = 0
        right = jnp.concatenate([r[:, :, 1:, :], zc], axis=2)         # taps at kw = 2
        b_ref[pl.ds(1 + dbase, dc), 1:H + 1, :, 0 * C:1 * C] = left
        b_ref[pl.ds(1 + dbase, dc), 1:H + 1, :, 1 * C:2 * C] = r      # taps at kw = 1
        b_ref[pl.ds(1 + dbase, dc), 1:H + 1, :, 2 * C:3 * C] = right
        return carry

    lax.fori_loop(0, n_chunks, build_chunk, 0)

    # ------------- phase 2: 9 (kd,kh) taps, register-accumulated per chunk ------------
    def matmul_chunk(ci, carry):
        dbase = ci * dc
        row0 = pl.multiple_of(ci * rows, rows)
        acc = None
        for kd in range(KSIZE):
            for kh in range(KSIZE):
                patch = b_ref[pl.ds(dbase + kd, dc), kh:kh + H, :, :]
                patch = patch.reshape(rows, KSIZE * C)                # bf16 (rows, 3C)
                wmat = w_ref[layer, kd * KSIZE + kh]                  # bf16 (3C, C)
                contrib = jnp.dot(patch, wmat, preferred_element_type=jnp.float32)
                acc = contrib if acc is None else acc + contrib
        acc_ref[pl.ds(row0, rows), :] = acc                           # one store per chunk
        return carry

    lax.fori_loop(0, n_chunks, matmul_chunk, 0)

    # ---------------- finalize: fused residual add (+ relu(x), see note above) --------
    @pl.when(layer == NUM_LAYERS - 1)
    def _finalize():
        x_col = x_ref[0].reshape(M, 1)
        # nn.ReLU(inplace=True) mutated the aliased input on layer 0, so PyTorch's
        # residual adds relu(x).
        out = acc_ref[...] + jnp.maximum(x_col, 0.0)
        o_ref[...] = out.reshape(1, D, H, W, C)


def fold_weights(weights):
    """Per-layer DHWIO weights -> bf16 (L, 9, 3*C, C): kd/kh merged, kw folded into K.

    Layer 0 (Cin=1) is zero-padded along Cin, layer 7 (Cout=1) along Cout, so every
    layer uses the same lane-dense (3*C, C) matmul shape inside the kernel.
    """
    ws = []
    for w in weights:
        _, _, _, ci, co = w.shape
        w = jnp.pad(w, ((0, 0), (0, 0), (0, 0), (0, C - ci), (0, C - co)))
        ws.append(w)
    wf = jnp.stack(ws)                                            # (L, 3, 3, 3, C, C)
    wf = wf.reshape(NUM_LAYERS, KSIZE * KSIZE, KSIZE * C, C)      # K index = kw*C + ci
    return wf.astype(jnp.bfloat16)


@jax.jit
def net_s_forward(x_ncdhw, w_folded):
    """x_ncdhw: (N, 1, D, H, W) -> (N, 1, D, H, W), same semantics as NetS.forward."""
    N, _, D, H, W = x_ncdhw.shape
    x = jnp.transpose(x_ncdhw, (0, 2, 3, 4, 1))                   # NCDHW -> NDHWC (C=1)

    # D-chunk size: ~128 rows per chunk, dividing D.
    HW = H * W
    dc = min(D, max(1, 128 // HW))
    while D % dc:
        dc -= 1

    kern = functools.partial(fused_nets_kernel, D=D, H=H, W=W, dc=dc)
    out_full = pl.pallas_call(
        kern,
        out_shape=jax.ShapeDtypeStruct((N, D, H, W, C), jnp.float32),
        grid=(N, NUM_LAYERS),
        in_specs=[
            pl.BlockSpec((1, D, H, W, 1), lambda n, l: (n, 0, 0, 0, 0)),
            # Full folded weight stays VMEM-resident (constant block index => one DMA).
            pl.BlockSpec((NUM_LAYERS, KSIZE * KSIZE, KSIZE * C, C),
                         lambda n, l: (0, 0, 0, 0)),
        ],
        out_specs=pl.BlockSpec((1, D, H, W, C), lambda n, l: (n, 0, 0, 0, 0)),
        scratch_shapes=[
            pltpu.VMEM((D + 2, H + 2, W, KSIZE * C), jnp.bfloat16),   # patch buffer
            pltpu.VMEM((D * H * W, C), jnp.float32),                  # carried activation
        ],
        compiler_params=pltpu.CompilerParams(
            dimension_semantics=("parallel", "arbitrary"),
            vmem_limit_bytes=32 << 20,
        ),
    )(x, w_folded)

    out = out_full[..., 0:1]                                      # real output channel
    return jnp.transpose(out, (0, 4, 1, 2, 3))                    # back to NCDHW


def init_weights(key):
    """Deterministic He-style init matching NetS._initialize_weights (synthetic)."""
    weights = []
    for i in range(NUM_LAYERS):
        in_ch = 1 if i == 0 else C
        out_ch = C if i < NUM_LAYERS - 1 else 1
        n = KSIZE * KSIZE * out_ch      # kernel_size[0] * kernel_size[1] * out_channels
        std = sqrt(2.0 / n)
        key, sub = jax.random.split(key)
        w = std * jax.random.normal(sub, (KSIZE, KSIZE, KSIZE, in_ch, out_ch), jnp.float32)
        weights.append(w)
    return weights


def net_s_reference(x_ncdhw, weights):
    """Pure-JAX (f32 activations) reference for validation."""
    x = jnp.transpose(x_ncdhw, (0, 2, 3, 4, 1))
    out = x
    for w in weights:
        out = jax.lax.conv_general_dilated(
            jnp.maximum(out, 0.0), w,
            window_strides=(1, 1, 1), padding="SAME",
            dimension_numbers=("NDHWC", "DHWIO", "NDHWC"))
    # inplace ReLU aliased the input in the PyTorch module -> residual is relu(x).
    out = out + jnp.maximum(x, 0.0)
    return jnp.transpose(out, (0, 4, 1, 2, 3))


if __name__ == "__main__":
    key = jax.random.PRNGKey(0)
    key, xkey = jax.random.split(key)
    # Small shapes: batch=2, 1 input channel, 8x8x8 volume (module dictates 128 hidden ch).
    x = jax.random.normal(xkey, (2, 1, 8, 8, 8), jnp.float32)
    weights = init_weights(key)
    # Use bf16-representable weights (identical for kernel and reference) so the only
    # bf16 effect under test is the kernel's activation rounding.
    weights = [w.astype(jnp.bfloat16).astype(jnp.float32) for w in weights]
    w_folded = fold_weights(weights)        # one-time weight repack (outside the hot path)

    out = jax.block_until_ready(net_s_forward(x, w_folded))
    ref = net_s_reference(x, weights)

    assert out.shape == x.shape
    err = float(jnp.max(jnp.abs(out - ref)))
    scale = float(jnp.max(jnp.abs(ref)))
    # bf16 MXU operands through 8 stacked convs (f32 accumulation): allow ~2% of the
    # output dynamic range.
    assert err <= 2e-2 * scale + 1e-2, (err, scale)

    print("KERNEL_OK")
</pallas_src>

<mosaic_0001>
module attributes {stable_mosaic.version = 11 : i64} {
  func.func @fused_nets_kernel(%arg0: i32, %arg1: i32, %arg2: memref<1x8x8x8x1xf32, #tpu.memory_space<vmem>>, %arg3: memref<8x9x384x128xbf16, #tpu.memory_space<vmem>>, %arg4: memref<1x8x8x8x128xf32, #tpu.memory_space<vmem>>, %arg5: memref<10x10x8x384xbf16, #tpu.memory_space<vmem>>, %arg6: memref<512x128xf32, #tpu.memory_space<vmem>>) attributes {dimension_semantics = [#tpu.dimension_semantics<parallel>, #tpu.dimension_semantics<arbitrary>], iteration_bounds = array<i64: 2, 8>, scalar_prefetch = 0 : i64, scratch_operands = 2 : i64, tpu.core_type = #tpu.core_type<tc>, window_params = [{transform_indices = @transform_0, window_bounds = array<i64: 1, 8, 8, 8, 1>}, {pipeline_mode = #tpu.pipeline_mode<synchronous>, transform_indices = @transform_1, window_bounds = array<i64: 8, 9, 384, 128>}, {transform_indices = @transform_2, window_bounds = array<i64: 1, 8, 8, 8, 128>}]} {
    %c0_i32 = arith.constant 0 : i32
    %0 = arith.cmpi eq, %arg1, %c0_i32 : i32
    %1 = arith.extui %0 : i1 to i32
    %c0_i32_0 = arith.constant 0 : i32
    %2 = arith.cmpi ne, %1, %c0_i32_0 : i32
    scf.if %2 {
      %cst = arith.constant 0.000000e+00 : bf16
      %8 = vector.broadcast %cst : bf16 to vector<1x10x8x384xbf16>
      %c0 = arith.constant 0 : index
      %c0_8 = arith.constant 0 : index
      %c0_9 = arith.constant 0 : index
      %c0_10 = arith.constant 0 : index
      %9 = vector.load %arg5[%c0, %c0_8, %c0_9, %c0_10] : memref<10x10x8x384xbf16, #tpu.memory_space<vmem>>, vector<1x10x8x384xbf16>
      tpu.vector_store %arg5[%c0, %c0_8, %c0_9, %c0_10], %8 {strides = array<i32>} : memref<10x10x8x384xbf16, #tpu.memory_space<vmem>>, vector<1x10x8x384xbf16>,
      %c9 = arith.constant 9 : index
      %c0_11 = arith.constant 0 : index
      %c0_12 = arith.constant 0 : index
      %c0_13 = arith.constant 0 : index
      %10 = vector.load %arg5[%c9, %c0_11, %c0_12, %c0_13] : memref<10x10x8x384xbf16, #tpu.memory_space<vmem>>, vector<1x10x8x384xbf16>
      tpu.vector_store %arg5[%c9, %c0_11, %c0_12, %c0_13], %8 {strides = array<i32>} : memref<10x10x8x384xbf16, #tpu.memory_space<vmem>>, vector<1x10x8x384xbf16>,
      %cst_14 = arith.constant 0.000000e+00 : bf16
      %11 = vector.broadcast %cst_14 : bf16 to vector<10x1x8x384xbf16>
      %c0_15 = arith.constant 0 : index
      %c0_16 = arith.constant 0 : index
      %c0_17 = arith.constant 0 : index
      %c0_18 = arith.constant 0 : index
      %12 = vector.load %arg5[%c0_15, %c0_16, %c0_17, %c0_18] : memref<10x10x8x384xbf16, #tpu.memory_space<vmem>>, vector<10x1x8x384xbf16>
      tpu.vector_store %arg5[%c0_15, %c0_16, %c0_17, %c0_18], %11 {strides = array<i32>} : memref<10x10x8x384xbf16, #tpu.memory_space<vmem>>, vector<10x1x8x384xbf16>,
      %c0_19 = arith.constant 0 : index
      %c9_20 = arith.constant 9 : index
      %c0_21 = arith.constant 0 : index
      %c0_22 = arith.constant 0 : index
      %13 = vector.load %arg5[%c0_19, %c9_20, %c0_21, %c0_22] : memref<10x10x8x384xbf16, #tpu.memory_space<vmem>>, vector<10x1x8x384xbf16>
      tpu.vector_store %arg5[%c0_19, %c9_20, %c0_21, %c0_22], %11 {strides = array<i32>} : memref<10x10x8x384xbf16, #tpu.memory_space<vmem>>, vector<10x1x8x384xbf16>,
      %c0_23 = arith.constant 0 : index
      %c0_24 = arith.constant 0 : index
      %c0_25 = arith.constant 0 : index
      %c0_26 = arith.constant 0 : index
      %c0_27 = arith.constant 0 : index
      %14 = vector.load %arg2[%c0_23, %c0_24, %c0_25, %c0_26, %c0_27] : memref<1x8x8x8x1xf32, #tpu.memory_space<vmem>>, vector<1x8x8x8x1xf32>
      %15 = vector.shape_cast %14 : vector<1x8x8x8x1xf32> to vector<8x8x8x1xf32>
      %16 = vector.shape_cast %15 : vector<8x8x8x1xf32> to vector<512x1xf32>
      %17 = vector.shape_cast %16 : vector<512x1xf32> to vector<512x1xf32>
      %18 = vector.broadcast %17 : vector<512x1xf32> to vector<512x128xf32>
      %c0_28 = arith.constant 0 : index
      %c0_29 = arith.constant 0 : index
      %19 = vector.load %arg6[%c0_28, %c0_29] : memref<512x128xf32, #tpu.memory_space<vmem>>, vector<512x128xf32>
      tpu.vector_store %arg6[%c0_28, %c0_29], %18 {strides = array<i32>} : memref<512x128xf32, #tpu.memory_space<vmem>>, vector<512x128xf32>,
    } else {
    }
    %c0_i32_1 = arith.constant 0 : i32
    %c4_i32 = arith.constant 4 : i32
    %3 = arith.addi %c0_i32_1, %c4_i32 : i32
    %c1_i32 = arith.constant 1 : i32
    scf.for %arg7 = %c0_i32_1 to %3 step %c1_i32  : i32 {
      %c2_i32 = arith.constant 2 : i32
      %8 = arith.muli %arg7, %c2_i32 : i32
      %c128_i32 = arith.constant 128 : i32
      %9 = arith.muli %arg7, %c128_i32 : i32
      %10 = tpu.assume_multiple %9, 128 : i32
      %11 = arith.index_cast %10 : i32 to index
      %c0 = arith.constant 0 : index
      %12 = vector.load %arg6[%11, %c0] : memref<512x128xf32, #tpu.memory_space<vmem>>, vector<128x128xf32>
      %cst = arith.constant 0.000000e+00 : f32
      %13 = vector.broadcast %cst : f32 to vector<128x128xf32>
      %14 = arith.maximumf %12, %13 : vector<128x128xf32>
      %15 = arith.truncf %14 : vector<128x128xf32> to vector<128x128xbf16>
      %16 = vector.shape_cast %15 : vector<128x128xbf16> to vector<2x8x8x128xbf16>
      %cst_8 = arith.constant 0.000000e+00 : bf16
      %17 = vector.broadcast %cst_8 : bf16 to vector<2x8x1x128xbf16>
      %18 = vector.extract_strided_slice %16 {offsets = [0, 0, 0, 0], sizes = [2, 8, 7, 128], strides = [1, 1, 1, 1]} : vector<2x8x8x128xbf16> to vector<2x8x7x128xbf16>
      %19 = tpu.concatenate %17, %18 in 2 : vector<2x8x1x128xbf16>, vector<2x8x7x128xbf16> -> vector<2x8x8x128xbf16>
      %20 = vector.extract_strided_slice %16 {offsets = [0, 0, 1, 0], sizes = [2, 8, 7, 128], strides = [1, 1, 1, 1]} : vector<2x8x8x128xbf16> to vector<2x8x7x128xbf16>
      %21 = tpu.concatenate %20, %17 in 2 : vector<2x8x7x128xbf16>, vector<2x8x1x128xbf16> -> vector<2x8x8x128xbf16>
      %c1_i32_9 = arith.constant 1 : i32
      %22 = arith.addi %c1_i32_9, %8 : i32
      %23 = arith.index_cast %22 : i32 to index
      %c1 = arith.constant 1 : index
      %c0_10 = arith.constant 0 : index
      %c0_11 = arith.constant 0 : index
      %24 = vector.load %arg5[%23, %c1, %c0_10, %c0_11] : memref<10x10x8x384xbf16, #tpu.memory_space<vmem>>, vector<2x8x8x128xbf16>
      tpu.vector_store %arg5[%23, %c1, %c0_10, %c0_11], %19 {strides = array<i32>} : memref<10x10x8x384xbf16, #tpu.memory_space<vmem>>, vector<2x8x8x128xbf16>,
      %c1_i32_12 = arith.constant 1 : i32
      %25 = arith.addi %c1_i32_12, %8 : i32
      %26 = arith.index_cast %25 : i32 to index
      %c1_13 = arith.constant 1 : index
      %c0_14 = arith.constant 0 : index
      %c128 = arith.constant 128 : index
      %27 = vector.load %arg5[%26, %c1_13, %c0_14, %c128] : memref<10x10x8x384xbf16, #tpu.memory_space<vmem>>, vector<2x8x8x128xbf16>
      tpu.vector_store %arg5[%26, %c1_13, %c0_14, %c128], %16 {strides = array<i32>} : memref<10x10x8x384xbf16, #tpu.memory_space<vmem>>, vector<2x8x8x128xbf16>,
      %c1_i32_15 = arith.constant 1 : i32
      %28 = arith.addi %c1_i32_15, %8 : i32
      %29 = arith.index_cast %28 : i32 to index
      %c1_16 = arith.constant 1 : index
      %c0_17 = arith.constant 0 : index
      %c256 = arith.constant 256 : index
      %30 = vector.load %arg5[%29, %c1_16, %c0_17, %c256] : memref<10x10x8x384xbf16, #tpu.memory_space<vmem>>, vector<2x8x8x128xbf16>
      tpu.vector_store %arg5[%29, %c1_16, %c0_17, %c256], %21 {strides = array<i32>} : memref<10x10x8x384xbf16, #tpu.memory_space<vmem>>, vector<2x8x8x128xbf16>,
    }
    %c4_i32_2 = arith.constant 4 : i32
    %c0_i32_3 = arith.constant 0 : i32
    %c4_i32_4 = arith.constant 4 : i32
    %4 = arith.addi %c0_i32_3, %c4_i32_4 : i32
    %c1_i32_5 = arith.constant 1 : i32
    scf.for %arg7 = %c0_i32_3 to %4 step %c1_i32_5  : i32 {
      %c2_i32 = arith.constant 2 : i32
      %8 = arith.muli %arg7, %c2_i32 : i32
      %c128_i32 = arith.constant 128 : i32
      %9 = arith.muli %arg7, %c128_i32 : i32
      %10 = tpu.assume_multiple %9, 128 : i32
      %c0_i32_8 = arith.constant 0 : i32
      %11 = arith.addi %8, %c0_i32_8 : i32
      %12 = arith.index_cast %11 : i32 to index
      %c0 = arith.constant 0 : index
      %c0_9 = arith.constant 0 : index
      %c0_10 = arith.constant 0 : index
      %13 = vector.load %arg5[%12, %c0, %c0_9, %c0_10] : memref<10x10x8x384xbf16, #tpu.memory_space<vmem>>, vector<2x8x8x384xbf16>
      %14 = vector.shape_cast %13 : vector<2x8x8x384xbf16> to vector<128x384xbf16>
      %15 = arith.index_cast %arg1 : i32 to index
      %c0_11 = arith.constant 0 : index
      %c0_12 = arith.constant 0 : index
      %c0_13 = arith.constant 0 : index
      %16 = vector.load %arg3[%15, %c0_11, %c0_12, %c0_13] : memref<8x9x384x128xbf16, #tpu.memory_space<vmem>>, vector<1x1x384x128xbf16>
      %17 = vector.shape_cast %16 : vector<1x1x384x128xbf16> to vector<384x128xbf16>
      %cst = arith.constant dense<0.000000e+00> : vector<128x128xf32>
      %18 = tpu.matmul %14, %17, %cst {dimension_numbers = #tpu.dot_dimension_numbers<[1], [0], [0], [1], [0, 0, 1, 1], [], []>} : vector<128x384xbf16>, vector<384x128xbf16>, vector<128x128xf32> -> vector<128x128xf32>
      %c0_i32_14 = arith.constant 0 : i32
      %19 = arith.addi %8, %c0_i32_14 : i32
      %20 = arith.index_cast %19 : i32 to index
      %c1 = arith.constant 1 : index
      %c0_15 = arith.constant 0 : index
      %c0_16 = arith.constant 0 : index
      %21 = vector.load %arg5[%20, %c1, %c0_15, %c0_16] : memref<10x10x8x384xbf16, #tpu.memory_space<vmem>>, vector<2x8x8x384xbf16>
      %22 = vector.shape_cast %21 : vector<2x8x8x384xbf16> to vector<128x384xbf16>
      %23 = arith.index_cast %arg1 : i32 to index
      %c1_17 = arith.constant 1 : index
      %c0_18 = arith.constant 0 : index
      %c0_19 = arith.constant 0 : index
      %24 = vector.load %arg3[%23, %c1_17, %c0_18, %c0_19] : memref<8x9x384x128xbf16, #tpu.memory_space<vmem>>, vector<1x1x384x128xbf16>
      %25 = vector.shape_cast %24 : vector<1x1x384x128xbf16> to vector<384x128xbf16>
      %cst_20 = arith.constant dense<0.000000e+00> : vector<128x128xf32>
      %26 = tpu.matmul %22, %25, %cst_20 {dimension_numbers = #tpu.dot_dimension_numbers<[1], [0], [0], [1], [0, 0, 1, 1], [], []>} : vector<128x384xbf16>, vector<384x128xbf16>, vector<128x128xf32> -> vector<128x128xf32>
      %27 = arith.addf %18, %26 : vector<128x128xf32>
      %c0_i32_21 = arith.constant 0 : i32
      %28 = arith.addi %8, %c0_i32_21 : i32
      %29 = arith.index_cast %28 : i32 to index
      %c2 = arith.constant 2 : index
      %c0_22 = arith.constant 0 : index
      %c0_23 = arith.constant 0 : index
      %30 = vector.load %arg5[%29, %c2, %c0_22, %c0_23] : memref<10x10x8x384xbf16, #tpu.memory_space<vmem>>, vector<2x8x8x384xbf16>
      %31 = vector.shape_cast %30 : vector<2x8x8x384xbf16> to vector<128x384xbf16>
      %32 = arith.index_cast %arg1 : i32 to index
      %c2_24 = arith.constant 2 : index
      %c0_25 = arith.constant 0 : index
      %c0_26 = arith.constant 0 : index
      %33 = vector.load %arg3[%32, %c2_24, %c0_25, %c0_26] : memref<8x9x384x128xbf16, #tpu.memory_space<vmem>>, vector<1x1x384x128xbf16>
      %34 = vector.shape_cast %33 : vector<1x1x384x128xbf16> to vector<384x128xbf16>
      %cst_27 = arith.constant dense<0.000000e+00> : vector<128x128xf32>
      %35 = tpu.matmul %31, %34, %cst_27 {dimension_numbers = #tpu.dot_dimension_numbers<[1], [0], [0], [1], [0, 0, 1, 1], [], []>} : vector<128x384xbf16>, vector<384x128xbf16>, vector<128x128xf32> -> vector<128x128xf32>
      %36 = arith.addf %27, %35 : vector<128x128xf32>
      %c1_i32_28 = arith.constant 1 : i32
      %37 = arith.addi %8, %c1_i32_28 : i32
      %38 = arith.index_cast %37 : i32 to index
      %c0_29 = arith.constant 0 : index
      %c0_30 = arith.constant 0 : index
      %c0_31 = arith.constant 0 : index
      %39 = vector.load %arg5[%38, %c0_29, %c0_30, %c0_31] : memref<10x10x8x384xbf16, #tpu.memory_space<vmem>>, vector<2x8x8x384xbf16>
      %40 = vector.shape_cast %39 : vector<2x8x8x384xbf16> to vector<128x384xbf16>
      %41 = arith.index_cast %arg1 : i32 to index
      %c3 = arith.constant 3 : index
      %c0_32 = arith.constant 0 : index
      %c0_33 = arith.constant 0 : index
      %42 = vector.load %arg3[%41, %c3, %c0_32, %c0_33] : memref<8x9x384x128xbf16, #tpu.memory_space<vmem>>, vector<1x1x384x128xbf16>
      %43 = vector.shape_cast %42 : vector<1x1x384x128xbf16> to vector<384x128xbf16>
      %cst_34 = arith.constant dense<0.000000e+00> : vector<128x128xf32>
      %44 = tpu.matmul %40, %43, %cst_34 {dimension_numbers = #tpu.dot_dimension_numbers<[1], [0], [0], [1], [0, 0, 1, 1], [], []>} : vector<128x384xbf16>, vector<384x128xbf16>, vector<128x128xf32> -> vector<128x128xf32>
      %45 = arith.addf %36, %44 : vector<128x128xf32>
      %c1_i32_35 = arith.constant 1 : i32
      %46 = arith.addi %8, %c1_i32_35 : i32
      %47 = arith.index_cast %46 : i32 to index
      %c1_36 = arith.constant 1 : index
      %c0_37 = arith.constant 0 : index
      %c0_38 = arith.constant 0 : index
      %48 = vector.load %arg5[%47, %c1_36, %c0_37, %c0_38] : memref<10x10x8x384xbf16, #tpu.memory_space<vmem>>, vector<2x8x8x384xbf16>
      %49 = vector.shape_cast %48 : vector<2x8x8x384xbf16> to vector<128x384xbf16>
      %50 = arith.index_cast %arg1 : i32 to index
      %c4 = arith.constant 4 : index
      %c0_39 = arith.constant 0 : index
      %c0_40 = arith.constant 0 : index
      %51 = vector.load %arg3[%50, %c4, %c0_39, %c0_40] : memref<8x9x384x128xbf16, #tpu.memory_space<vmem>>, vector<1x1x384x128xbf16>
      %52 = vector.shape_cast %51 : vector<1x1x384x128xbf16> to vector<384x128xbf16>
      %cst_41 = arith.constant dense<0.000000e+00> : vector<128x128xf32>
      %53 = tpu.matmul %49, %52, %cst_41 {dimension_numbers = #tpu.dot_dimension_numbers<[1], [0], [0], [1], [0, 0, 1, 1], [], []>} : vector<128x384xbf16>, vector<384x128xbf16>, vector<128x128xf32> -> vector<128x128xf32>
      %54 = arith.addf %45, %53 : vector<128x128xf32>
      %c1_i32_42 = arith.constant 1 : i32
      %55 = arith.addi %8, %c1_i32_42 : i32
      %56 = arith.index_cast %55 : i32 to index
      %c2_43 = arith.constant 2 : index
      %c0_44 = arith.constant 0 : index
      %c0_45 = arith.constant 0 : index
      %57 = vector.load %arg5[%56, %c2_43, %c0_44, %c0_45] : memref<10x10x8x384xbf16, #tpu.memory_space<vmem>>, vector<2x8x8x384xbf16>
      %58 = vector.shape_cast %57 : vector<2x8x8x384xbf16> to vector<128x384xbf16>
      %59 = arith.index_cast %arg1 : i32 to index
      %c5 = arith.constant 5 : index
      %c0_46 = arith.constant 0 : index
      %c0_47 = arith.constant 0 : index
      %60 = vector.load %arg3[%59, %c5, %c0_46, %c0_47] : memref<8x9x384x128xbf16, #tpu.memory_space<vmem>>, vector<1x1x384x128xbf16>
      %61 = vector.shape_cast %60 : vector<1x1x384x128xbf16> to vector<384x128xbf16>
      %cst_48 = arith.constant dense<0.000000e+00> : vector<128x128xf32>
      %62 = tpu.matmul %58, %61, %cst_48 {dimension_numbers = #tpu.dot_dimension_numbers<[1], [0], [0], [1], [0, 0, 1, 1], [], []>} : vector<128x384xbf16>, vector<384x128xbf16>, vector<128x128xf32> -> vector<128x128xf32>
      %63 = arith.addf %54, %62 : vector<128x128xf32>
      %c2_i32_49 = arith.constant 2 : i32
      %64 = arith.addi %8, %c2_i32_49 : i32
      %65 = arith.index_cast %64 : i32 to index
      %c0_50 = arith.constant 0 : index
      %c0_51 = arith.constant 0 : index
      %c0_52 = arith.constant 0 : index
      %66 = vector.load %arg5[%65, %c0_50, %c0_51, %c0_52] : memref<10x10x8x384xbf16, #tpu.memory_space<vmem>>, vector<2x8x8x384xbf16>
      %67 = vector.shape_cast %66 : vector<2x8x8x384xbf16> to vector<128x384xbf16>
      %68 = arith.index_cast %arg1 : i32 to index
      %c6 = arith.constant 6 : index
      %c0_53 = arith.constant 0 : index
      %c0_54 = arith.constant 0 : index
      %69 = vector.load %arg3[%68, %c6, %c0_53, %c0_54] : memref<8x9x384x128xbf16, #tpu.memory_space<vmem>>, vector<1x1x384x128xbf16>
      %70 = vector.shape_cast %69 : vector<1x1x384x128xbf16> to vector<384x128xbf16>
      %cst_55 = arith.constant dense<0.000000e+00> : vector<128x128xf32>
      %71 = tpu.matmul %67, %70, %cst_55 {dimension_numbers = #tpu.dot_dimension_numbers<[1], [0], [0], [1], [0, 0, 1, 1], [], []>} : vector<128x384xbf16>, vector<384x128xbf16>, vector<128x128xf32> -> vector<128x128xf32>
      %72 = arith.addf %63, %71 : vector<128x128xf32>
      %c2_i32_56 = arith.constant 2 : i32
      %73 = arith.addi %8, %c2_i32_56 : i32
      %74 = arith.index_cast %73 : i32 to index
      %c1_57 = arith.constant 1 : index
      %c0_58 = arith.constant 0 : index
      %c0_59 = arith.constant 0 : index
      %75 = vector.load %arg5[%74, %c1_57, %c0_58, %c0_59] : memref<10x10x8x384xbf16, #tpu.memory_space<vmem>>, vector<2x8x8x384xbf16>
      %76 = vector.shape_cast %75 : vector<2x8x8x384xbf16> to vector<128x384xbf16>
      %77 = arith.index_cast %arg1 : i32 to index
      %c7 = arith.constant 7 : index
      %c0_60 = arith.constant 0 : index
      %c0_61 = arith.constant 0 : index
      %78 = vector.load %arg3[%77, %c7, %c0_60, %c0_61] : memref<8x9x384x128xbf16, #tpu.memory_space<vmem>>, vector<1x1x384x128xbf16>
      %79 = vector.shape_cast %78 : vector<1x1x384x128xbf16> to vector<384x128xbf16>
      %cst_62 = arith.constant dense<0.000000e+00> : vector<128x128xf32>
      %80 = tpu.matmul %76, %79, %cst_62 {dimension_numbers = #tpu.dot_dimension_numbers<[1], [0], [0], [1], [0, 0, 1, 1], [], []>} : vector<128x384xbf16>, vector<384x128xbf16>, vector<128x128xf32> -> vector<128x128xf32>
      %81 = arith.addf %72, %80 : vector<128x128xf32>
      %c2_i32_63 = arith.constant 2 : i32
      %82 = arith.addi %8, %c2_i32_63 : i32
      %83 = arith.index_cast %82 : i32 to index
      %c2_64 = arith.constant 2 : index
      %c0_65 = arith.constant 0 : index
      %c0_66 = arith.constant 0 : index
      %84 = vector.load %arg5[%83, %c2_64, %c0_65, %c0_66] : memref<10x10x8x384xbf16, #tpu.memory_space<vmem>>, vector<2x8x8x384xbf16>
      %85 = vector.shape_cast %84 : vector<2x8x8x384xbf16> to vector<128x384xbf16>
      %86 = arith.index_cast %arg1 : i32 to index
      %c8 = arith.constant 8 : index
      %c0_67 = arith.constant 0 : index
      %c0_68 = arith.constant 0 : index
      %87 = vector.load %arg3[%86, %c8, %c0_67, %c0_68] : memref<8x9x384x128xbf16, #tpu.memory_space<vmem>>, vector<1x1x384x128xbf16>
      %88 = vector.shape_cast %87 : vector<1x1x384x128xbf16> to vector<384x128xbf16>
      %cst_69 = arith.constant dense<0.000000e+00> : vector<128x128xf32>
      %89 = tpu.matmul %85, %88, %cst_69 {dimension_numbers = #tpu.dot_dimension_numbers<[1], [0], [0], [1], [0, 0, 1, 1], [], []>} : vector<128x384xbf16>, vector<384x128xbf16>, vector<128x128xf32> -> vector<128x128xf32>
      %90 = arith.addf %81, %89 : vector<128x128xf32>
      %91 = arith.index_cast %10 : i32 to index
      %c0_70 = arith.constant 0 : index
      %92 = vector.load %arg6[%91, %c0_70] : memref<512x128xf32, #tpu.memory_space<vmem>>, vector<128x128xf32>
      tpu.vector_store %arg6[%91, %c0_70], %90 {strides = array<i32>} : memref<512x128xf32, #tpu.memory_space<vmem>>, vector<128x128xf32>,
    }
    %c4_i32_6 = arith.constant 4 : i32
    %c7_i32 = arith.constant 7 : i32
    %5 = arith.cmpi eq, %arg1, %c7_i32 : i32
    %6 = arith.extui %5 : i1 to i32
    %c0_i32_7 = arith.constant 0 : i32
    %7 = arith.cmpi ne, %6, %c0_i32_7 : i32
    scf.if %7 {
      %c0 = arith.constant 0 : index
      %c0_8 = arith.constant 0 : index
      %c0_9 = arith.constant 0 : index
      %c0_10 = arith.constant 0 : index
      %c0_11 = arith.constant 0 : index
      %8 = vector.load %arg2[%c0, %c0_8, %c0_9, %c0_10, %c0_11] : memref<1x8x8x8x1xf32, #tpu.memory_space<vmem>>, vector<1x8x8x8x1xf32>
      %9 = vector.shape_cast %8 : vector<1x8x8x8x1xf32> to vector<8x8x8x1xf32>
      %10 = vector.shape_cast %9 : vector<8x8x8x1xf32> to vector<512x1xf32>
      %c0_12 = arith.constant 0 : index
      %c0_13 = arith.constant 0 : index
      %11 = vector.load %arg6[%c0_12, %c0_13] : memref<512x128xf32, #tpu.memory_space<vmem>>, vector<512x128xf32>
      %cst = arith.constant 0.000000e+00 : f32
      %12 = vector.broadcast %cst : f32 to vector<512x1xf32>
      %13 = arith.maximumf %10, %12 : vector<512x1xf32>
      %14 = vector.broadcast %13 : vector<512x1xf32> to vector<512x128xf32>
      %15 = arith.addf %11, %14 : vector<512x128xf32>
      %16 = vector.shape_cast %15 : vector<512x128xf32> to vector<1x8x8x8x128xf32>
      %c0_14 = arith.constant 0 : index
      %c0_15 = arith.constant 0 : index
      %c0_16 = arith.constant 0 : index
      %c0_17 = arith.constant 0 : index
      %c0_18 = arith.constant 0 : index
      %17 = vector.load %arg4[%c0_14, %c0_15, %c0_16, %c0_17, %c0_18] : memref<1x8x8x8x128xf32, #tpu.memory_space<vmem>>, vector<1x8x8x8x128xf32>
      tpu.vector_store %arg4[%c0_14, %c0_15, %c0_16, %c0_17, %c0_18], %16 {strides = array<i32>} : memref<1x8x8x8x128xf32, #tpu.memory_space<vmem>>, vector<1x8x8x8x128xf32>,
    } else {
    }
    return
  }
  func.func @transform_0(%arg0: i32, %arg1: i32) -> (i32, i32, i32, i32, i32) {
    %c0_i32 = arith.constant 0 : i32
    %c0_i32_0 = arith.constant 0 : i32
    %c0_i32_1 = arith.constant 0 : i32
    %c0_i32_2 = arith.constant 0 : i32
    %c0_i32_3 = arith.constant 0 : i32
    return %arg0, %c0_i32, %c0_i32_0, %c0_i32_1, %c0_i32_2 : i32, i32, i32, i32, i32
  }
  func.func @transform_1(%arg0: i32, %arg1: i32) -> (i32, i32, i32, i32) {
    %c0_i32 = arith.constant 0 : i32
    %c0_i32_0 = arith.constant 0 : i32
    %c0_i32_1 = arith.constant 0 : i32
    %c0_i32_2 = arith.constant 0 : i32
    %c0_i32_3 = arith.constant 0 : i32
    return %c0_i32, %c0_i32_0, %c0_i32_1, %c0_i32_2 : i32, i32, i32, i32
  }
  func.func @transform_2(%arg0: i32, %arg1: i32) -> (i32, i32, i32, i32, i32) {
    %c0_i32 = arith.constant 0 : i32
    %c0_i32_0 = arith.constant 0 : i32
    %c0_i32_1 = arith.constant 0 : i32
    %c0_i32_2 = arith.constant 0 : i32
    %c0_i32_3 = arith.constant 0 : i32
    return %arg0, %c0_i32, %c0_i32_0, %c0_i32_1, %c0_i32_2 : i32, i32, i32, i32, i32
  }
}

</mosaic_0001>

<llo_original>
// kernel: net_s_forward.1
$region0: #{net_s_forward.1}
  #allocation0 [shape = 'u32[]', space=smem, size = 0x4, offset = 0x4, fixed_abs, tag = 'smem constant byte address 0x4 - core index']
  #allocation1 [shape = 'u32[144,128]{1,0:T(1,128)}', space=vmem, size = 0x12000, scoped, tag = 'internal scratch']
  #allocation2 [shape = 'bf16[10,10,8,384]{3,2,1,0:T(8,128)(2,1)}', space=vmem, size = 0x96000, scoped, tag = 'scratch operand']
  #allocation3 [shape = 'f32[512,128]{1,0:T(8,128)}', space=vmem, size = 0x40000, scoped, tag = 'scratch operand']
  %s0 = inlined_call_operand.vmem [shape: f32[2,8,8,8,1], index: 0, kind: input, shape index: {}]
  %s1 = inlined_call_operand.hbm [shape: bf16[8,9,384,128], index: 1, kind: input, shape index: {}]
  %s2 = inlined_call_operand.vmem [shape: f32[2,8,8,8,128], index: 2, kind: output, shape index: {}]
  %s3 = sld [smem:[#allocation0]]
  $region67: #{net_s_forward.1} parent=0
    _
  %s5 = ssub.s32 1, %s3
  %s6 = scalar_select 0, %s5, %s3
  $region1: #{net_s_forward.1} parent=0
    #allocation4 [shape = 'u8[7077888]{0}', space=vmem, size = 0x6c0000, scoped, tag = 'input window, operand 1, single buffered']
    #allocation5 [shape = 's32[2]{0}', space=sflag, size = 0x8, scoped, tag = 'scoped memory for net_s_forward.1']
    %7 = vsyncpa [#allocation5], 0
    loop: start=0, step=1, limit=18
    $region2: #{net_s_forward.1} parent=1 // loop_pre_header
      _
    $region3: #{net_s_forward.1} parent=1 // loop_header
      %s9 = sphi 0, %s13
      %p10 = scmp.ge.s32.totalorder %s9, 18
      %s16 = sphi 0, %s28
      %s17 = sphi 0, %s24
      %s18 = sphi 0, %s16
      %s19 = sphi 0, %s17
      %s20 = sphi 0, %s18
      %s21 = sphi 0, %s19
      %s31 = sphi 0, %s33
      %s34 = sphi 0, %s31
      %s35 = sphi 0, %s34
      %s51 = sphi 0, %s35
      %s55 = sphi 0, %s55
      %s57 = sphi 0, %s55
      %s58 = sphi 0, %s57
      %s72 = sphi 0, %s58
      %s78 = sphi 0, %s80
      %s81 = sphi 0, %s78
      %s82 = sphi 0, %s81
      %s98 = sphi 0, %s82
    $region4: #{net_s_forward.1} parent=1 // loop_header_branch
      %12 = sbr.rel (%p10) target = $region8
    $region5: #{net_s_forward.1} parent=1 // loop_body
      %s14 = ssub.s32 %s9, 1
      %s15 = ssub.s32 %s9, 2
      %s22 = sadd.s32 1, %s17
      %p23 = scmp.ge.s32.totalorder %s22, 8
      %s24 = scalar_select %p23, 0, %s22
      %s25 = sadd.s32 1, %s16
      %s26 = scalar_select %p23, %s25, %s16
      %p27 = scmp.ge.s32.totalorder %s26, 2
      %s28 = scalar_select %p27, 0, %s26
      %s29 = ssub.s32 %s16, %s28
      %p30 = scmp.eq.s32.totalorder %s29, 0
      %s32 = sadd.s32 %s31, 1
      %s33 = scalar_select %p30, %s31, %s32
      %p36 = pneg %p30
      %p37 = scmp.eq.s32.totalorder %s9, 15
      %p38 = por %p36, %p37
      %p39 = scmp.ne.s32.totalorder %s31, %s34
      %p40 = scmp.eq.s32.totalorder %s9, 0
      %p41 = por %p39, %p40
      %p42 = scmp.ne.s32.totalorder %s31, %s34
      %p43 = scmp.eq.s32.totalorder %s14, 15
      %p44 = por %p42, %p43
      %p45 = scmp.ne.s32.totalorder %s34, %s35
      %p46 = scmp.eq.s32.totalorder %s14, 0
      %p47 = por %p45, %p46
      %p48 = scmp.ne.s32.totalorder %s34, %s35
      %p49 = scmp.eq.s32.totalorder %s15, 15
      %p50 = por %p48, %p49
      %p52 = scmp.ne.s32.totalorder %s35, %s51
      %p53 = scmp.eq.s32.totalorder %s15, 0
      %p54 = por %p52, %p53
      %s56 = sadd.s32 %s55, 1
      %p59 = scmp.eq.s32.totalorder %s9, 15
      %p60 = scmp.ne.s32.totalorder %s55, %s57
      %p61 = scmp.eq.s32.totalorder %s9, 0
      %p62 = por %p60, %p61
      %p63 = scmp.ne.s32.totalorder %s55, %s57
      %p64 = scmp.eq.s32.totalorder %s14, 15
      %p65 = por %p63, %p64
      %p66 = scmp.ne.s32.totalorder %s57, %s58
      %p67 = scmp.eq.s32.totalorder %s14, 0
      %p68 = por %p66, %p67
      %p69 = scmp.ne.s32.totalorder %s57, %s58
      %p70 = scmp.eq.s32.totalorder %s15, 15
      %p71 = por %p69, %p70
      %p73 = scmp.ne.s32.totalorder %s58, %s72
      %p74 = scmp.eq.s32.totalorder %s15, 0
      %p75 = por %p73, %p74
      %s76 = ssub.s32 %s16, %s28
      %p77 = scmp.eq.s32.totalorder %s76, 0
      %s79 = sadd.s32 %s78, 1
      %s80 = scalar_select %p77, %s78, %s79
      %p83 = pneg %p77
      %p84 = scmp.eq.s32.totalorder %s9, 15
      %p85 = por %p83, %p84
      %p86 = scmp.ne.s32.totalorder %s78, %s81
      %p87 = scmp.eq.s32.totalorder %s9, 0
      %p88 = por %p86, %p87
      %p89 = scmp.ne.s32.totalorder %s78, %s81
      %p90 = scmp.eq.s32.totalorder %s14, 15
      %p91 = por %p89, %p90
      %p92 = scmp.ne.s32.totalorder %s81, %s82
      %p93 = scmp.eq.s32.totalorder %s14, 0
      %p94 = por %p92, %p93
      %p95 = scmp.ne.s32.totalorder %s81, %s82
      %p96 = scmp.eq.s32.totalorder %s15, 15
      %p97 = por %p95, %p96
      %p99 = scmp.ne.s32.totalorder %s82, %s98
      %p100 = scmp.eq.s32.totalorder %s15, 0
      %p101 = por %p99, %p100
      %p102 = scmp.le.s32.totalorder 1, %s9
      %p103 = scmp.lt.s32.totalorder %s9, 17
      %p104 = pnand %p102, %p103
      %p105 = pneg %p104
      // Predicated region
      $region9: #{net_s_forward.1} parent=5 // pred_check
        _
      $region10: #{net_s_forward.1} parent=5 // pred_check_branch
        %107 = sbr.rel (%p104) target = $region12
      $region11: #{net_s_forward.1} parent=5 // pred_region
        %s108 = ssub.s32 %s9, 1
        // Predicated region
        $region13: #{net_s_forward.1} parent=11 // pred_check
          %p109 = pneg %p68
        $region14: #{net_s_forward.1} parent=11 // pred_check_branch
          %111 = sbr.rel (%p109) target = $region16
        $region15: #{net_s_forward.1} parent=11 // pred_region
          %s113 = ssub.s32 221184, 221184
          %114 = vsyncadd [#allocation5], %s113
          %s115 = sshll.u32 [#allocation4], 4
          %s116 = int_to_ptr.vmem [resolvable:$true] %s115
          %121 = dma.hbm_to_vmem [thread:$0]  %s1, 221184, %s116, [#allocation5], 64, 64, 4
        $region16: #{net_s_forward.1} parent=11 // pred_fallthru
          _
      $region12: #{net_s_forward.1} parent=5 // pred_fallthru
        _
      %p122 = scmp.lt.s32.totalorder %s9, 16
      // Predicated region
      $region17: #{net_s_forward.1} parent=5 // pred_check
        %p123 = pneg %p122
      $region18: #{net_s_forward.1} parent=5 // pred_check_branch
        %125 = sbr.rel (%p123) target = $region20
      $region19: #{net_s_forward.1} parent=5 // pred_region
        // Predicated region
        $region21: #{net_s_forward.1} parent=19 // pred_check
          %p126 = pneg %p41
        $region22: #{net_s_forward.1} parent=19 // pred_check_branch
          %128 = sbr.rel (%p126) target = $region24
        $region23: #{net_s_forward.1} parent=19 // pred_region
          %p129 = scmp.lt.s32.totalorder %s16, 1
          %s130 = scalar_select %p129, %s16, 1
          %s131 = smul.addr %s130, 64
          %s132 = smul.addr %s131, 8
          %s133 = scalar_lea.vmem %s0, %s132
        $region24: #{net_s_forward.1} parent=19 // pred_fallthru
          _
      $region20: #{net_s_forward.1} parent=5 // pred_fallthru
        _
      %p134 = scmp.le.s32.totalorder 1, %s9
      %p135 = scmp.lt.s32.totalorder %s9, 17
      %p136 = pnand %p134, %p135
      %p137 = pneg %p136
      // Predicated region
      $region25: #{net_s_forward.1} parent=5 // pred_check
        _
      $region26: #{net_s_forward.1} parent=5 // pred_check_branch
        %139 = sbr.rel (%p136) target = $region28
      $region27: #{net_s_forward.1} parent=5 // pred_region
        %s140 = ssub.s32 %s9, 1
        // Predicated region
        $region29: #{net_s_forward.1} parent=27 // pred_check
          %p141 = pneg %p68
        $region30: #{net_s_forward.1} parent=27 // pred_check_branch
          %143 = sbr.rel (%p141) target = $region32
        $region31: #{net_s_forward.1} parent=27 // pred_region
          %144 = dma.done [#allocation5], 221184
        $region32: #{net_s_forward.1} parent=27 // pred_fallthru
          _
        %p145 = scmp.lt.s32.totalorder %s18, 1
        %s146 = scalar_select %p145, %s18, 1
        %s147 = smul.addr %s146, 64
        %s148 = smul.addr %s147, 8
        %s149 = scalar_lea.vmem %s0, %s148
        %p150 = pneg %p47
        %p151 = pneg %p44
        %p152 = pneg %p68
        %p153 = pneg %p65
        %p154 = pneg %p94
        %p155 = pneg %p91
        %p156 = scmp.lt.s32.totalorder %s18, 1
        %s157 = scalar_select %p156, %s18, 1
        %s158 = smul.addr %s157, 64
        %s159 = smul.addr %s158, 8
        %s160 = scalar_lea.vmem %s2, %s159
        %p161 = scmp.lt.s32.totalorder %s18, 1
        %s162 = scalar_select %p161, %s18, 1
        %s163 = smul.addr %s162, 64
        %s164 = smul.addr %s163, 8
        %s165 = scalar_lea.vmem %s0, %s164
        %p166 = scmp.lt.s32.totalorder %s18, 1
        %s167 = scalar_select %p166, %s18, 1
        %s168 = smul.addr %s167, 64
        %s169 = smul.addr %s168, 8
        %s170 = scalar_lea.vmem %s2, %s169
        %p172 = scmp.eq.s32.totalorder %s19, 0
        // Predicated region
        $region33: #{net_s_forward.1} parent=27 // pred_check
          %p173 = pneg %p172
        $region34: #{net_s_forward.1} parent=27 // pred_check_branch
          %175 = sbr.rel (%p173) target = $region36
        $region35: #{net_s_forward.1} parent=27 // pred_region
          %176 = vst [vmem:[#allocation2] sm:$0xff] 0
          %177 = vst [vmem:[#allocation2 + $0x8] sm:$0xf] 0
          %178 = vst [vmem:[#allocation2 + $0xc] sm:$0xff] 0
          %179 = vst [vmem:[#allocation2 + $0x14] sm:$0xf] 0
          %180 = vst [vmem:[#allocation2 + $0x18] sm:$0xff] 0
          %181 = vst [vmem:[#allocation2 + $0x20] sm:$0xf] 0
          %182 = vst [vmem:[#allocation2 + $0x24] sm:$0xff] 0
          %183 = vst [vmem:[#allocation2 + $0x2c] sm:$0xf] 0
          %184 = vst [vmem:[#allocation2 + $0x30] sm:$0xff] 0
          %185 = vst [vmem:[#allocation2 + $0x38] sm:$0xf] 0
          %186 = vst [vmem:[#allocation2 + $0x3c] sm:$0xff] 0
          %187 = vst [vmem:[#allocation2 + $0x44] sm:$0xf] 0
          %188 = vst [vmem:[#allocation2 + $0x48] sm:$0xff] 0
          %189 = vst [vmem:[#allocation2 + $0x50] sm:$0xf] 0
          %190 = vst [vmem:[#allocation2 + $0x54] sm:$0xff] 0
          %191 = vst [vmem:[#allocation2 + $0x5c] sm:$0xf] 0
          %192 = vst [vmem:[#allocation2 + $0x60] sm:$0xff] 0
          %193 = vst [vmem:[#allocation2 + $0x68] sm:$0xf] 0
          %194 = vst [vmem:[#allocation2 + $0x6c] sm:$0xff] 0
          %195 = vst [vmem:[#allocation2 + $0x74] sm:$0xf] 0
          %s196 = scalar_lea.vmem [#allocation2], 1080
          %197 = vst [vmem:[%s196] sm:$0xff] 0
          %198 = vst [vmem:[%s196 + $0x8] sm:$0xf] 0
          %199 = vst [vmem:[%s196 + $0xc] sm:$0xff] 0
          %200 = vst [vmem:[%s196 + $0x14] sm:$0xf] 0
          %201 = vst [vmem:[%s196 + $0x18] sm:$0xff] 0
          %202 = vst [vmem:[%s196 + $0x20] sm:$0xf] 0
          %203 = vst [vmem:[%s196 + $0x24] sm:$0xff] 0
          %204 = vst [vmem:[%s196 + $0x2c] sm:$0xf] 0
          %205 = vst [vmem:[%s196 + $0x30] sm:$0xff] 0
          %206 = vst [vmem:[%s196 + $0x38] sm:$0xf] 0
          %207 = vst [vmem:[%s196 + $0x3c] sm:$0xff] 0
          %208 = vst [vmem:[%s196 + $0x44] sm:$0xf] 0
          %209 = vst [vmem:[%s196 + $0x48] sm:$0xff] 0
          %210 = vst [vmem:[%s196 + $0x50] sm:$0xf] 0
          %211 = vst [vmem:[%s196 + $0x54] sm:$0xff] 0
          %212 = vst [vmem:[%s196 + $0x5c] sm:$0xf] 0
          %213 = vst [vmem:[%s196 + $0x60] sm:$0xff] 0
          %214 = vst [vmem:[%s196 + $0x68] sm:$0xf] 0
          %215 = vst [vmem:[%s196 + $0x6c] sm:$0xff] 0
          %216 = vst [vmem:[%s196 + $0x74] sm:$0xf] 0
          %217 = vst [vmem:[#allocation2] sm:$0xff] 0
          %218 = vst [vmem:[#allocation2 + $0x8] sm:$0xf] 0
          %219 = vst [vmem:[#allocation2 + $0x78] sm:$0xff] 0
          %220 = vst [vmem:[#allocation2 + $0x80] sm:$0xf] 0
          %221 = vst [vmem:[#allocation2 + $0xf0] sm:$0xff] 0
          %222 = vst [vmem:[#allocation2 + $0xf8] sm:$0xf] 0
          %223 = vst [vmem:[#allocation2 + $0x168] sm:$0xff] 0
          %224 = vst [vmem:[#allocation2 + $0x170] sm:$0xf] 0
          %225 = vst [vmem:[#allocation2 + $0x1e0] sm:$0xff] 0
          %226 = vst [vmem:[#allocation2 + $0x1e8] sm:$0xf] 0
          %227 = vst [vmem:[#allocation2 + $0x258] sm:$0xff] 0
          %228 = vst [vmem:[#allocation2 + $0x260] sm:$0xf] 0
          %229 = vst [vmem:[#allocation2 + $0x2d0] sm:$0xff] 0
          %230 = vst [vmem:[#allocation2 + $0x2d8] sm:$0xf] 0
          %231 = vst [vmem:[#allocation2 + $0x348] sm:$0xff] 0
          %232 = vst [vmem:[#allocation2 + $0x350] sm:$0xf] 0
          %233 = vst [vmem:[#allocation2 + $0x3c0] sm:$0xff] 0
          %234 = vst [vmem:[#allocation2 + $0x3c8] sm:$0xf] 0
          %235 = vst [vmem:[#allocation2 + $0x438] sm:$0xff] 0
          %236 = vst [vmem:[#allocation2 + $0x440] sm:$0xf] 0
          %s237 = scalar_lea.vmem [#allocation2], 108
          %238 = vst [vmem:[%s237] sm:$0xff] 0
          %239 = vst [vmem:[%s237 + $0x8] sm:$0xf] 0
          %240 = vst [vmem:[%s237 + $0x78] sm:$0xff] 0
          %241 = vst [vmem:[%s237 + $0x80] sm:$0xf] 0
          %242 = vst [vmem:[%s237 + $0xf0] sm:$0xff] 0
          %243 = vst [vmem:[%s237 + $0xf8] sm:$0xf] 0
          %244 = vst [vmem:[%s237 + $0x168] sm:$0xff] 0
          %245 = vst [vmem:[%s237 + $0x170] sm:$0xf] 0
          %246 = vst [vmem:[%s237 + $0x1e0] sm:$0xff] 0
          %247 = vst [vmem:[%s237 + $0x1e8] sm:$0xf] 0
          %248 = vst [vmem:[%s237 + $0x258] sm:$0xff] 0
          %249 = vst [vmem:[%s237 + $0x260] sm:$0xf] 0
          %250 = vst [vmem:[%s237 + $0x2d0] sm:$0xff] 0
          %251 = vst [vmem:[%s237 + $0x2d8] sm:$0xf] 0
          %252 = vst [vmem:[%s237 + $0x348] sm:$0xff] 0
          %253 = vst [vmem:[%s237 + $0x350] sm:$0xf] 0
          %254 = vst [vmem:[%s237 + $0x3c0] sm:$0xff] 0
          %255 = vst [vmem:[%s237 + $0x3c8] sm:$0xf] 0
          %256 = vst [vmem:[%s237 + $0x438] sm:$0xff] 0
          %257 = vst [vmem:[%s237 + $0x440] sm:$0xf] 0
          %v258 = vld [vmem:[%s165] sm:$0xff]
          %v259 = vld [vmem:[%s165 + $0x8] sm:$0xff]
          %v260 = vld [vmem:[%s165 + $0x10] sm:$0xff]
          %v261 = vld [vmem:[%s165 + $0x18] sm:$0xff]
          %v262 = vld [vmem:[%s165 + $0x20] sm:$0xff]
          %v263 = vld [vmem:[%s165 + $0x28] sm:$0xff]
          %v264 = vld [vmem:[%s165 + $0x30] sm:$0xff]
          %v265 = vld [vmem:[%s165 + $0x38] sm:$0xff]
          %v266 = vld [vmem:[%s165 + $0x40] sm:$0xff]
          %v267 = vld [vmem:[%s165 + $0x48] sm:$0xff]
          %v268 = vld [vmem:[%s165 + $0x50] sm:$0xff]
          %v269 = vld [vmem:[%s165 + $0x58] sm:$0xff]
          %v270 = vld [vmem:[%s165 + $0x60] sm:$0xff]
          %v271 = vld [vmem:[%s165 + $0x68] sm:$0xff]
          %v272 = vld [vmem:[%s165 + $0x70] sm:$0xff]
          %v273 = vld [vmem:[%s165 + $0x78] sm:$0xff]
          %v274 = vld [vmem:[%s165 + $0x80] sm:$0xff]
          %v275 = vld [vmem:[%s165 + $0x88] sm:$0xff]
          %v276 = vld [vmem:[%s165 + $0x90] sm:$0xff]
          %v277 = vld [vmem:[%s165 + $0x98] sm:$0xff]
          %v278 = vld [vmem:[%s165 + $0xa0] sm:$0xff]
          %v279 = vld [vmem:[%s165 + $0xa8] sm:$0xff]
          %v280 = vld [vmem:[%s165 + $0xb0] sm:$0xff]
          %v281 = vld [vmem:[%s165 + $0xb8] sm:$0xff]
          %v282 = vld [vmem:[%s165 + $0xc0] sm:$0xff]
          %v283 = vld [vmem:[%s165 + $0xc8] sm:$0xff]
          %v284 = vld [vmem:[%s165 + $0xd0] sm:$0xff]
          %v285 = vld [vmem:[%s165 + $0xd8] sm:$0xff]
          %v286 = vld [vmem:[%s165 + $0xe0] sm:$0xff]
          %v287 = vld [vmem:[%s165 + $0xe8] sm:$0xff]
          %v288 = vld [vmem:[%s165 + $0xf0] sm:$0xff]
          %v289 = vld [vmem:[%s165 + $0xf8] sm:$0xff]
          %v290 = vld [vmem:[%s165 + $0x100] sm:$0xff]
          %v291 = vld [vmem:[%s165 + $0x108] sm:$0xff]
          %v292 = vld [vmem:[%s165 + $0x110] sm:$0xff]
          %v293 = vld [vmem:[%s165 + $0x118] sm:$0xff]
          %v294 = vld [vmem:[%s165 + $0x120] sm:$0xff]
          %v295 = vld [vmem:[%s165 + $0x128] sm:$0xff]
          %v296 = vld [vmem:[%s165 + $0x130] sm:$0xff]
          %v297 = vld [vmem:[%s165 + $0x138] sm:$0xff]
          %v298 = vld [vmem:[%s165 + $0x140] sm:$0xff]
          %v299 = vld [vmem:[%s165 + $0x148] sm:$0xff]
          %v300 = vld [vmem:[%s165 + $0x150] sm:$0xff]
          %v301 = vld [vmem:[%s165 + $0x158] sm:$0xff]
          %v302 = vld [vmem:[%s165 + $0x160] sm:$0xff]
          %v303 = vld [vmem:[%s165 + $0x168] sm:$0xff]
          %v304 = vld [vmem:[%s165 + $0x170] sm:$0xff]
          %v305 = vld [vmem:[%s165 + $0x178] sm:$0xff]
          %v306 = vld [vmem:[%s165 + $0x180] sm:$0xff]
          %v307 = vld [vmem:[%s165 + $0x188] sm:$0xff]
          %v308 = vld [vmem:[%s165 + $0x190] sm:$0xff]
          %v309 = vld [vmem:[%s165 + $0x198] sm:$0xff]
          %v310 = vld [vmem:[%s165 + $0x1a0] sm:$0xff]
          %v311 = vld [vmem:[%s165 + $0x1a8] sm:$0xff]
          %v312 = vld [vmem:[%s165 + $0x1b0] sm:$0xff]
          %v313 = vld [vmem:[%s165 + $0x1b8] sm:$0xff]
          %v314 = vld [vmem:[%s165 + $0x1c0] sm:$0xff]
          %v315 = vld [vmem:[%s165 + $0x1c8] sm:$0xff]
          %v316 = vld [vmem:[%s165 + $0x1d0] sm:$0xff]
          %v317 = vld [vmem:[%s165 + $0x1d8] sm:$0xff]
          %v318 = vld [vmem:[%s165 + $0x1e0] sm:$0xff]
          %v319 = vld [vmem:[%s165 + $0x1e8] sm:$0xff]
          %v320 = vld [vmem:[%s165 + $0x1f0] sm:$0xff]
          %v321 = vld [vmem:[%s165 + $0x1f8] sm:$0xff]
          %323 = vset.pattern.permute.xlu0 0
          %324 = vperm.xlu0 %323, %v258
          %v325 = vpop.permute.xlu0 %324
          %328 = vset.pattern.permute.xlu0 0
          %329 = vperm.xlu0 %328, %v259
          %v330 = vpop.permute.xlu0 %329
          %333 = vset.pattern.permute.xlu0 0
          %334 = vperm.xlu0 %333, %v260
          %v335 = vpop.permute.xlu0 %334
          %338 = vset.pattern.permute.xlu0 0
          %339 = vperm.xlu0 %338, %v261
          %v340 = vpop.permute.xlu0 %339
          %343 = vset.pattern.permute.xlu0 0
          %344 = vperm.xlu0 %343, %v262
          %v345 = vpop.permute.xlu0 %344
          %348 = vset.pattern.permute.xlu0 0
          %349 = vperm.xlu0 %348, %v263
          %v350 = vpop.permute.xlu0 %349
          %353 = vset.pattern.permute.xlu0 0
          %354 = vperm.xlu0 %353, %v264
          %v355 = vpop.permute.xlu0 %354
          %358 = vset.pattern.permute.xlu0 0
          %359 = vperm.xlu0 %358, %v265
          %v360 = vpop.permute.xlu0 %359
          %363 = vset.pattern.permute.xlu0 0
          %364 = vperm.xlu0 %363, %v266
          %v365 = vpop.permute.xlu0 %364
          %368 = vset.pattern.permute.xlu0 0
          %369 = vperm.xlu0 %368, %v267
          %v370 = vpop.permute.xlu0 %369
          %373 = vset.pattern.permute.xlu0 0
          %374 = vperm.xlu0 %373, %v268
          %v375 = vpop.permute.xlu0 %374
          %378 = vset.pattern.permute.xlu0 0
          %379 = vperm.xlu0 %378, %v269
          %v380 = vpop.permute.xlu0 %379
          %383 = vset.pattern.permute.xlu0 0
          %384 = vperm.xlu0 %383, %v270
          %v385 = vpop.permute.xlu0 %384
          %388 = vset.pattern.permute.xlu0 0
          %389 = vperm.xlu0 %388, %v271
          %v390 = vpop.permute.xlu0 %389
          %393 = vset.pattern.permute.xlu0 0
          %394 = vperm.xlu0 %393, %v272
          %v395 = vpop.permute.xlu0 %394
          %398 = vset.pattern.permute.xlu0 0
          %399 = vperm.xlu0 %398, %v273
          %v400 = vpop.permute.xlu0 %399
          %403 = vset.pattern.permute.xlu0 0
          %404 = vperm.xlu0 %403, %v274
          %v405 = vpop.permute.xlu0 %404
          %408 = vset.pattern.permute.xlu0 0
          %409 = vperm.xlu0 %408, %v275
          %v410 = vpop.permute.xlu0 %409
          %413 = vset.pattern.permute.xlu0 0
          %414 = vperm.xlu0 %413, %v276
          %v415 = vpop.permute.xlu0 %414
          %418 = vset.pattern.permute.xlu0 0
          %419 = vperm.xlu0 %418, %v277
          %v420 = vpop.permute.xlu0 %419
          %423 = vset.pattern.permute.xlu0 0
          %424 = vperm.xlu0 %423, %v278
          %v425 = vpop.permute.xlu0 %424
          %428 = vset.pattern.permute.xlu0 0
          %429 = vperm.xlu0 %428, %v279
          %v430 = vpop.permute.xlu0 %429
          %433 = vset.pattern.permute.xlu0 0
          %434 = vperm.xlu0 %433, %v280
          %v435 = vpop.permute.xlu0 %434
          %438 = vset.pattern.permute.xlu0 0
          %439 = vperm.xlu0 %438, %v281
          %v440 = vpop.permute.xlu0 %439
          %443 = vset.pattern.permute.xlu0 0
          %444 = vperm.xlu0 %443, %v282
          %v445 = vpop.permute.xlu0 %444
          %448 = vset.pattern.permute.xlu0 0
          %449 = vperm.xlu0 %448, %v283
          %v450 = vpop.permute.xlu0 %449
          %453 = vset.pattern.permute.xlu0 0
          %454 = vperm.xlu0 %453, %v284
          %v455 = vpop.permute.xlu0 %454
          %458 = vset.pattern.permute.xlu0 0
          %459 = vperm.xlu0 %458, %v285
          %v460 = vpop.permute.xlu0 %459
          %463 = vset.pattern.permute.xlu0 0
          %464 = vperm.xlu0 %463, %v286
          %v465 = vpop.permute.xlu0 %464
          %468 = vset.pattern.permute.xlu0 0
          %469 = vperm.xlu0 %468, %v287
          %v470 = vpop.permute.xlu0 %469
          %473 = vset.pattern.permute.xlu0 0
          %474 = vperm.xlu0 %473, %v288
          %v475 = vpop.permute.xlu0 %474
          %478 = vset.pattern.permute.xlu0 0
          %479 = vperm.xlu0 %478, %v289
          %v480 = vpop.permute.xlu0 %479
          %483 = vset.pattern.permute.xlu0 0
          %484 = vperm.xlu0 %483, %v290
          %v485 = vpop.permute.xlu0 %484
          %488 = vset.pattern.permute.xlu0 0
          %489 = vperm.xlu0 %488, %v291
          %v490 = vpop.permute.xlu0 %489
          %493 = vset.pattern.permute.xlu0 0
          %494 = vperm.xlu0 %493, %v292
          %v495 = vpop.permute.xlu0 %494
          %498 = vset.pattern.permute.xlu0 0
          %499 = vperm.xlu0 %498, %v293
          %v500 = vpop.permute.xlu0 %499
          %503 = vset.pattern.permute.xlu0 0
          %504 = vperm.xlu0 %503, %v294
          %v505 = vpop.permute.xlu0 %504
          %508 = vset.pattern.permute.xlu0 0
          %509 = vperm.xlu0 %508, %v295
          %v510 = vpop.permute.xlu0 %509
          %513 = vset.pattern.permute.xlu0 0
          %514 = vperm.xlu0 %513, %v296
          %v515 = vpop.permute.xlu0 %514
          %518 = vset.pattern.permute.xlu0 0
          %519 = vperm.xlu0 %518, %v297
          %v520 = vpop.permute.xlu0 %519
          %523 = vset.pattern.permute.xlu0 0
          %524 = vperm.xlu0 %523, %v298
          %v525 = vpop.permute.xlu0 %524
          %528 = vset.pattern.permute.xlu0 0
          %529 = vperm.xlu0 %528, %v299
          %v530 = vpop.permute.xlu0 %529
          %533 = vset.pattern.permute.xlu0 0
          %534 = vperm.xlu0 %533, %v300
          %v535 = vpop.permute.xlu0 %534
          %538 = vset.pattern.permute.xlu0 0
          %539 = vperm.xlu0 %538, %v301
          %v540 = vpop.permute.xlu0 %539
          %543 = vset.pattern.permute.xlu0 0
          %544 = vperm.xlu0 %543, %v302
          %v545 = vpop.permute.xlu0 %544
          %548 = vset.pattern.permute.xlu0 0
          %549 = vperm.xlu0 %548, %v303
          %v550 = vpop.permute.xlu0 %549
          %553 = vset.pattern.permute.xlu0 0
          %554 = vperm.xlu0 %553, %v304
          %v555 = vpop.permute.xlu0 %554
          %558 = vset.pattern.permute.xlu0 0
          %559 = vperm.xlu0 %558, %v305
          %v560 = vpop.permute.xlu0 %559
          %563 = vset.pattern.permute.xlu0 0
          %564 = vperm.xlu0 %563, %v306
          %v565 = vpop.permute.xlu0 %564
          %568 = vset.pattern.permute.xlu0 0
          %569 = vperm.xlu0 %568, %v307
          %v570 = vpop.permute.xlu0 %569
          %573 = vset.pattern.permute.xlu0 0
          %574 = vperm.xlu0 %573, %v308
          %v575 = vpop.permute.xlu0 %574
          %578 = vset.pattern.permute.xlu0 0
          %579 = vperm.xlu0 %578, %v309
          %v580 = vpop.permute.xlu0 %579
          %583 = vset.pattern.permute.xlu0 0
          %584 = vperm.xlu0 %583, %v310
          %v585 = vpop.permute.xlu0 %584
          %588 = vset.pattern.permute.xlu0 0
          %589 = vperm.xlu0 %588, %v311
          %v590 = vpop.permute.xlu0 %589
          %593 = vset.pattern.permute.xlu0 0
          %594 = vperm.xlu0 %593, %v312
          %v595 = vpop.permute.xlu0 %594
          %598 = vset.pattern.permute.xlu0 0
          %599 = vperm.xlu0 %598, %v313
          %v600 = vpop.permute.xlu0 %599
          %603 = vset.pattern.permute.xlu0 0
          %604 = vperm.xlu0 %603, %v314
          %v605 = vpop.permute.xlu0 %604
          %608 = vset.pattern.permute.xlu0 0
          %609 = vperm.xlu0 %608, %v315
          %v610 = vpop.permute.xlu0 %609
          %613 = vset.pattern.permute.xlu0 0
          %614 = vperm.xlu0 %613, %v316
          %v615 = vpop.permute.xlu0 %614
          %618 = vset.pattern.permute.xlu0 0
          %619 = vperm.xlu0 %618, %v317
          %v620 = vpop.permute.xlu0 %619
          %623 = vset.pattern.permute.xlu0 0
          %624 = vperm.xlu0 %623, %v318
          %v625 = vpop.permute.xlu0 %624
          %628 = vset.pattern.permute.xlu0 0
          %629 = vperm.xlu0 %628, %v319
          %v630 = vpop.permute.xlu0 %629
          %633 = vset.pattern.permute.xlu0 0
          %634 = vperm.xlu0 %633, %v320
          %v635 = vpop.permute.xlu0 %634
          %638 = vset.pattern.permute.xlu0 0
          %639 = vperm.xlu0 %638, %v321
          %v640 = vpop.permute.xlu0 %639
          %642 = vst [vmem:[#allocation3] sm:$0xff] %v325
          %643 = vst [vmem:[#allocation3 + $0x8] sm:$0xff] %v330
          %644 = vst [vmem:[#allocation3 + $0x10] sm:$0xff] %v335
          %645 = vst [vmem:[#allocation3 + $0x18] sm:$0xff] %v340
          %646 = vst [vmem:[#allocation3 + $0x20] sm:$0xff] %v345
          %647 = vst [vmem:[#allocation3 + $0x28] sm:$0xff] %v350
          %648 = vst [vmem:[#allocation3 + $0x30] sm:$0xff] %v355
          %649 = vst [vmem:[#allocation3 + $0x38] sm:$0xff] %v360
          %650 = vst [vmem:[#allocation3 + $0x40] sm:$0xff] %v365
          %651 = vst [vmem:[#allocation3 + $0x48] sm:$0xff] %v370
          %652 = vst [vmem:[#allocation3 + $0x50] sm:$0xff] %v375
          %653 = vst [vmem:[#allocation3 + $0x58] sm:$0xff] %v380
          %654 = vst [vmem:[#allocation3 + $0x60] sm:$0xff] %v385
          %655 = vst [vmem:[#allocation3 + $0x68] sm:$0xff] %v390
          %656 = vst [vmem:[#allocation3 + $0x70] sm:$0xff] %v395
          %657 = vst [vmem:[#allocation3 + $0x78] sm:$0xff] %v400
          %658 = vst [vmem:[#allocation3 + $0x80] sm:$0xff] %v405
          %659 = vst [vmem:[#allocation3 + $0x88] sm:$0xff] %v410
          %660 = vst [vmem:[#allocation3 + $0x90] sm:$0xff] %v415
          %661 = vst [vmem:[#allocation3 + $0x98] sm:$0xff] %v420
          %662 = vst [vmem:[#allocation3 + $0xa0] sm:$0xff] %v425
          %663 = vst [vmem:[#allocation3 + $0xa8] sm:$0xff] %v430
          %664 = vst [vmem:[#allocation3 + $0xb0] sm:$0xff] %v435
          %665 = vst [vmem:[#allocation3 + $0xb8] sm:$0xff] %v440
          %666 = vst [vmem:[#allocation3 + $0xc0] sm:$0xff] %v445
          %667 = vst [vmem:[#allocation3 + $0xc8] sm:$0xff] %v450
          %668 = vst [vmem:[#allocation3 + $0xd0] sm:$0xff] %v455
          %669 = vst [vmem:[#allocation3 + $0xd8] sm:$0xff] %v460
          %670 = vst [vmem:[#allocation3 + $0xe0] sm:$0xff] %v465
          %671 = vst [vmem:[#allocation3 + $0xe8] sm:$0xff] %v470
          %672 = vst [vmem:[#allocation3 + $0xf0] sm:$0xff] %v475
          %673 = vst [vmem:[#allocation3 + $0xf8] sm:$0xff] %v480
          %674 = vst [vmem:[#allocation3 + $0x100] sm:$0xff] %v485
          %675 = vst [vmem:[#allocation3 + $0x108] sm:$0xff] %v490
          %676 = vst [vmem:[#allocation3 + $0x110] sm:$0xff] %v495
          %677 = vst [vmem:[#allocation3 + $0x118] sm:$0xff] %v500
          %678 = vst [vmem:[#allocation3 + $0x120] sm:$0xff] %v505
          %679 = vst [vmem:[#allocation3 + $0x128] sm:$0xff] %v510
          %680 = vst [vmem:[#allocation3 + $0x130] sm:$0xff] %v515
          %681 = vst [vmem:[#allocation3 + $0x138] sm:$0xff] %v520
          %682 = vst [vmem:[#allocation3 + $0x140] sm:$0xff] %v525
          %683 = vst [vmem:[#allocation3 + $0x148] sm:$0xff] %v530
          %684 = vst [vmem:[#allocation3 + $0x150] sm:$0xff] %v535
          %685 = vst [vmem:[#allocation3 + $0x158] sm:$0xff] %v540
          %686 = vst [vmem:[#allocation3 + $0x160] sm:$0xff] %v545
          %687 = vst [vmem:[#allocation3 + $0x168] sm:$0xff] %v550
          %688 = vst [vmem:[#allocation3 + $0x170] sm:$0xff] %v555
          %689 = vst [vmem:[#allocation3 + $0x178] sm:$0xff] %v560
          %690 = vst [vmem:[#allocation3 + $0x180] sm:$0xff] %v565
          %691 = vst [vmem:[#allocation3 + $0x188] sm:$0xff] %v570
          %692 = vst [vmem:[#allocation3 + $0x190] sm:$0xff] %v575
          %693 = vst [vmem:[#allocation3 + $0x198] sm:$0xff] %v580
          %694 = vst [vmem:[#allocation3 + $0x1a0] sm:$0xff] %v585
          %695 = vst [vmem:[#allocation3 + $0x1a8] sm:$0xff] %v590
          %696 = vst [vmem:[#allocation3 + $0x1b0] sm:$0xff] %v595
          %697 = vst [vmem:[#allocation3 + $0x1b8] sm:$0xff] %v600
          %698 = vst [vmem:[#allocation3 + $0x1c0] sm:$0xff] %v605
          %699 = vst [vmem:[#allocation3 + $0x1c8] sm:$0xff] %v610
          %700 = vst [vmem:[#allocation3 + $0x1d0] sm:$0xff] %v615
          %701 = vst [vmem:[#allocation3 + $0x1d8] sm:$0xff] %v620
          %702 = vst [vmem:[#allocation3 + $0x1e0] sm:$0xff] %v625
          %703 = vst [vmem:[#allocation3 + $0x1e8] sm:$0xff] %v630
          %704 = vst [vmem:[#allocation3 + $0x1f0] sm:$0xff] %v635
          %705 = vst [vmem:[#allocation3 + $0x1f8] sm:$0xff] %v640
        $region36: #{net_s_forward.1} parent=27 // pred_fallthru
          _
        loop: start=0, step=1, limit=4
        $region37: #{net_s_forward.1} parent=27 // loop_pre_header
          _
        $region38: #{net_s_forward.1} parent=27 // loop_header
          %s707 = sphi 0, %s711
          %p708 = scmp.ge.s32.totalorder %s707, 4
        $region39: #{net_s_forward.1} parent=27 // loop_header_branch
          %710 = sbr.rel (%p708) target = $region43
        $region40: #{net_s_forward.1} parent=27 // loop_body
          %s712 = smul.u32 %s707, 2
          %s713 = smul.u32 %s707, 128
          %s714 = scalar_lea.vmem [#allocation3], %s713
          %v715 = vld [vmem:[%s714] sm:$0xff]
          %v716 = vld [vmem:[%s714 + $0x8] sm:$0xff]
          %v717 = vld [vmem:[%s714 + $0x10] sm:$0xff]
          %v718 = vld [vmem:[%s714 + $0x18] sm:$0xff]
          %v719 = vld [vmem:[%s714 + $0x20] sm:$0xff]
          %v720 = vld [vmem:[%s714 + $0x28] sm:$0xff]
          %v721 = vld [vmem:[%s714 + $0x30] sm:$0xff]
          %v722 = vld [vmem:[%s714 + $0x38] sm:$0xff]
          %v723 = vld [vmem:[%s714 + $0x40] sm:$0xff]
          %v724 = vld [vmem:[%s714 + $0x48] sm:$0xff]
          %v725 = vld [vmem:[%s714 + $0x50] sm:$0xff]
          %v726 = vld [vmem:[%s714 + $0x58] sm:$0xff]
          %v727 = vld [vmem:[%s714 + $0x60] sm:$0xff]
          %v728 = vld [vmem:[%s714 + $0x68] sm:$0xff]
          %v729 = vld [vmem:[%s714 + $0x70] sm:$0xff]
          %v730 = vld [vmem:[%s714 + $0x78] sm:$0xff]
          %v731 = vmax.f32 %v715, 0.0
          %v732 = vmax.f32 %v716, 0.0
          %v733 = vmax.f32 %v717, 0.0
          %v734 = vmax.f32 %v718, 0.0
          %v735 = vmax.f32 %v719, 0.0
          %v736 = vmax.f32 %v720, 0.0
          %v737 = vmax.f32 %v721, 0.0
          %v738 = vmax.f32 %v722, 0.0
          %v739 = vmax.f32 %v723, 0.0
          %v740 = vmax.f32 %v724, 0.0
          %v741 = vmax.f32 %v725, 0.0
          %v742 = vmax.f32 %v726, 0.0
          %v743 = vmax.f32 %v727, 0.0
          %v744 = vmax.f32 %v728, 0.0
          %v745 = vmax.f32 %v729, 0.0
          %v746 = vmax.f32 %v730, 0.0
          %v747 = vpack.c.bf16 %v732, %v731
          %v748 = vpack.c.bf16 %v734, %v733
          %v749 = vpack.c.bf16 %v736, %v735
          %v750 = vpack.c.bf16 %v738, %v737
          %v751 = vpack.c.bf16 %v740, %v739
          %v752 = vpack.c.bf16 %v742, %v741
          %v753 = vpack.c.bf16 %v744, %v743
          %v754 = vpack.c.bf16 %v746, %v745
          %v763 = vunpack.c.l.b16 %v747
          %v764 = vunpack.c.h.b16 %v747
          %v765 = vunpack.c.l.b16 %v748
          %v766 = vunpack.c.h.b16 %v748
          %v767 = vunpack.c.l.b16 %v749
          %v768 = vunpack.c.h.b16 %v749
          %v769 = vunpack.c.l.b16 %v750
          %v770 = vunpack.c.h.b16 %v750
          %v771 = vunpack.c.l.b16 %v751
          %v772 = vunpack.c.h.b16 %v751
          %v773 = vunpack.c.l.b16 %v752
          %v774 = vunpack.c.h.b16 %v752
          %v775 = vunpack.c.l.b16 %v753
          %v776 = vunpack.c.h.b16 %v753
          %v777 = vunpack.c.l.b16 %v754
          %v778 = vunpack.c.h.b16 %v754
          %v779 = vpack.c.b16 %v763, %v763
          %v780 = vpack.c.b16 %v764, %v764
          %v781 = vpack.c.b16 %v765, %v765
          %v782 = vpack.c.b16 %v766, %v766
          %v783 = vpack.c.b16 %v767, %v767
          %v784 = vpack.c.b16 %v768, %v768
          %v785 = vpack.c.b16 %v769, %v769
          %v786 = vpack.c.b16 %v770, %v770
          %v787 = vpack.c.b16 %v771, %v771
          %v788 = vpack.c.b16 %v772, %v772
          %v789 = vpack.c.b16 %v773, %v773
          %v790 = vpack.c.b16 %v774, %v774
          %v791 = vpack.c.b16 %v775, %v775
          %v792 = vpack.c.b16 %v776, %v776
          %v793 = vpack.c.b16 %v777, %v777
          %v794 = vpack.c.b16 %v778, %v778
          %v812 = vshrl.u32 %v779, 16
          %v814 = vrot.slane %v812, 7
          %v815 = vshll.u32 %v779, 16
          %v817 = vor.u32 %v814, %v815
          %v819 = vshrl.u32 %v780, 16
          %v821 = vrot.slane %v819, 7
          %v822 = vshll.u32 %v780, 16
          %v824 = vor.u32 %v821, %v822
          %v826 = vshrl.u32 %v781, 16
          %v828 = vrot.slane %v826, 7
          %v829 = vshll.u32 %v781, 16
          %v831 = vor.u32 %v828, %v829
          %v833 = vshrl.u32 %v782, 16
          %v835 = vrot.slane %v833, 7
          %v836 = vshll.u32 %v782, 16
          %v838 = vor.u32 %v835, %v836
          %v840 = vshrl.u32 %v783, 16
          %v842 = vrot.slane %v840, 7
          %v843 = vshll.u32 %v783, 16
          %v845 = vor.u32 %v842, %v843
          %v847 = vshrl.u32 %v784, 16
          %v849 = vrot.slane %v847, 7
          %v850 = vshll.u32 %v784, 16
          %v852 = vor.u32 %v849, %v850
          %v854 = vshrl.u32 %v785, 16
          %v856 = vrot.slane %v854, 7
          %v857 = vshll.u32 %v785, 16
          %v859 = vor.u32 %v856, %v857
          %v861 = vshrl.u32 %v786, 16
          %v863 = vrot.slane %v861, 7
          %v864 = vshll.u32 %v786, 16
          %v866 = vor.u32 %v863, %v864
          %v868 = vshrl.u32 %v787, 16
          %v870 = vrot.slane %v868, 7
          %v871 = vshll.u32 %v787, 16
          %v873 = vor.u32 %v870, %v871
          %v875 = vshrl.u32 %v788, 16
          %v877 = vrot.slane %v875, 7
          %v878 = vshll.u32 %v788, 16
          %v880 = vor.u32 %v877, %v878
          %v882 = vshrl.u32 %v789, 16
          %v884 = vrot.slane %v882, 7
          %v885 = vshll.u32 %v789, 16
          %v887 = vor.u32 %v884, %v885
          %v889 = vshrl.u32 %v790, 16
          %v891 = vrot.slane %v889, 7
          %v892 = vshll.u32 %v790, 16
          %v894 = vor.u32 %v891, %v892
          %v896 = vshrl.u32 %v791, 16
          %v898 = vrot.slane %v896, 7
          %v899 = vshll.u32 %v791, 16
          %v901 = vor.u32 %v898, %v899
          %v903 = vshrl.u32 %v792, 16
          %v905 = vrot.slane %v903, 7
          %v906 = vshll.u32 %v792, 16
          %v908 = vor.u32 %v905, %v906
          %v910 = vshrl.u32 %v793, 16
          %v912 = vrot.slane %v910, 7
          %v913 = vshll.u32 %v793, 16
          %v915 = vor.u32 %v912, %v913
          %v917 = vshrl.u32 %v794, 16
          %v919 = vrot.slane %v917, 7
          %v920 = vshll.u32 %v794, 16
          %v922 = vor.u32 %v919, %v920
          %vm939 = vcmask 1040384
          %vm940 = vsmask.f32 256
          %vm941 = vmand %vm939, %vm940
          %v942 = vsel %vm941, 0, %v817
          %v943 = vsel %vm941, 0, %v824
          %v944 = vsel %vm941, 0, %v831
          %v945 = vsel %vm941, 0, %v838
          %v946 = vsel %vm941, 0, %v845
          %v947 = vsel %vm941, 0, %v852
          %v948 = vsel %vm941, 0, %v859
          %v949 = vsel %vm941, 0, %v866
          %v950 = vsel %vm941, 0, %v873
          %v951 = vsel %vm941, 0, %v880
          %v952 = vsel %vm941, 0, %v887
          %v953 = vsel %vm941, 0, %v894
          %v954 = vsel %vm941, 0, %v901
          %v955 = vsel %vm941, 0, %v908
          %v956 = vsel %vm941, 0, %v915
          %v957 = vsel %vm941, 0, %v922
          %v958 = vrot.slane %v815, 1
          %v959 = vor.u32 %v812, %v958
          %v960 = vrot.slane %v822, 1
          %v961 = vor.u32 %v819, %v960
          %v962 = vrot.slane %v829, 1
          %v963 = vor.u32 %v826, %v962
          %v964 = vrot.slane %v836, 1
          %v965 = vor.u32 %v833, %v964
          %v966 = vrot.slane %v843, 1
          %v967 = vor.u32 %v840, %v966
          %v968 = vrot.slane %v850, 1
          %v969 = vor.u32 %v847, %v968
          %v970 = vrot.slane %v857, 1
          %v971 = vor.u32 %v854, %v970
          %v972 = vrot.slane %v864, 1
          %v973 = vor.u32 %v861, %v972
          %v974 = vrot.slane %v871, 1
          %v975 = vor.u32 %v868, %v974
          %v976 = vrot.slane %v878, 1
          %v977 = vor.u32 %v875, %v976
          %v978 = vrot.slane %v885, 1
          %v979 = vor.u32 %v882, %v978
          %v980 = vrot.slane %v892, 1
          %v981 = vor.u32 %v889, %v980
          %v982 = vrot.slane %v899, 1
          %v983 = vor.u32 %v896, %v982
          %v984 = vrot.slane %v906, 1
          %v985 = vor.u32 %v903, %v984
          %v986 = vrot.slane %v913, 1
          %v987 = vor.u32 %v910, %v986
          %v988 = vrot.slane %v920, 1
          %v989 = vor.u32 %v917, %v988
          %vm1006 = vcmask 1043456
          %vm1007 = vsmask.f32 3328
          %vm1008 = vmand %vm1006, %vm1007
          %v1009 = vsel %vm1008, %v959, 0
          %v1010 = vsel %vm1008, %v961, 0
          %v1011 = vsel %vm1008, %v963, 0
          %v1012 = vsel %vm1008, %v965, 0
          %v1013 = vsel %vm1008, %v967, 0
          %v1014 = vsel %vm1008, %v969, 0
          %v1015 = vsel %vm1008, %v971, 0
          %v1016 = vsel %vm1008, %v973, 0
          %v1017 = vsel %vm1008, %v975, 0
          %v1018 = vsel %vm1008, %v977, 0
          %v1019 = vsel %vm1008, %v979, 0
          %v1020 = vsel %vm1008, %v981, 0
          %v1021 = vsel %vm1008, %v983, 0
          %v1022 = vsel %vm1008, %v985, 0
          %v1023 = vsel %vm1008, %v987, 0
          %v1024 = vsel %vm1008, %v989, 0
          %s1025 = sadd.s32 %s712, 1
          %s1026 = smul.u32 %s1025, 30
          %s1027 = sadd.s32 3, %s1026
          %s1028 = smul.addr %s1027, 4
          %s1029 = scalar_lea.vmem [#allocation2], %s1028
          %1030 = vst [vmem:[%s1029] sm:$0xf] %v942
          %1031 = vst [vmem:[%s1029 + $0xc] sm:$0xf] %v943
          %1032 = vst [vmem:[%s1029 + $0x18] sm:$0xf] %v944
          %1033 = vst [vmem:[%s1029 + $0x24] sm:$0xf] %v945
          %1034 = vst [vmem:[%s1029 + $0x30] sm:$0xf] %v946
          %1035 = vst [vmem:[%s1029 + $0x3c] sm:$0xf] %v947
          %1036 = vst [vmem:[%s1029 + $0x48] sm:$0xf] %v948
          %1037 = vst [vmem:[%s1029 + $0x54] sm:$0xf] %v949
          %1038 = vst [vmem:[%s1029 + $0x78] sm:$0xf] %v950
          %1039 = vst [vmem:[%s1029 + $0x84] sm:$0xf] %v951
          %1040 = vst [vmem:[%s1029 + $0x90] sm:$0xf] %v952
          %1041 = vst [vmem:[%s1029 + $0x9c] sm:$0xf] %v953
          %1042 = vst [vmem:[%s1029 + $0xa8] sm:$0xf] %v954
          %1043 = vst [vmem:[%s1029 + $0xb4] sm:$0xf] %v955
          %1044 = vst [vmem:[%s1029 + $0xc0] sm:$0xf] %v956
          %1045 = vst [vmem:[%s1029 + $0xcc] sm:$0xf] %v957
          %1046 = vst [vmem:[%s1029 + $0x4] sm:$0xf] %v779
          %1047 = vst [vmem:[%s1029 + $0x10] sm:$0xf] %v780
          %1048 = vst [vmem:[%s1029 + $0x1c] sm:$0xf] %v781
          %1049 = vst [vmem:[%s1029 + $0x28] sm:$0xf] %v782
          %1050 = vst [vmem:[%s1029 + $0x34] sm:$0xf] %v783
          %1051 = vst [vmem:[%s1029 + $0x40] sm:$0xf] %v784
          %1052 = vst [vmem:[%s1029 + $0x4c] sm:$0xf] %v785
          %1053 = vst [vmem:[%s1029 + $0x58] sm:$0xf] %v786
          %1054 = vst [vmem:[%s1029 + $0x7c] sm:$0xf] %v787
          %1055 = vst [vmem:[%s1029 + $0x88] sm:$0xf] %v788
          %1056 = vst [vmem:[%s1029 + $0x94] sm:$0xf] %v789
          %1057 = vst [vmem:[%s1029 + $0xa0] sm:$0xf] %v790
          %1058 = vst [vmem:[%s1029 + $0xac] sm:$0xf] %v791
          %1059 = vst [vmem:[%s1029 + $0xb8] sm:$0xf] %v792
          %1060 = vst [vmem:[%s1029 + $0xc4] sm:$0xf] %v793
          %1061 = vst [vmem:[%s1029 + $0xd0] sm:$0xf] %v794
          %1062 = vst [vmem:[%s1029 + $0x8] sm:$0xf] %v1009
          %1063 = vst [vmem:[%s1029 + $0x14] sm:$0xf] %v1010
          %1064 = vst [vmem:[%s1029 + $0x20] sm:$0xf] %v1011
          %1065 = vst [vmem:[%s1029 + $0x2c] sm:$0xf] %v1012
          %1066 = vst [vmem:[%s1029 + $0x38] sm:$0xf] %v1013
          %1067 = vst [vmem:[%s1029 + $0x44] sm:$0xf] %v1014
          %1068 = vst [vmem:[%s1029 + $0x50] sm:$0xf] %v1015
          %1069 = vst [vmem:[%s1029 + $0x5c] sm:$0xf] %v1016
          %1070 = vst [vmem:[%s1029 + $0x80] sm:$0xf] %v1017
          %1071 = vst [vmem:[%s1029 + $0x8c] sm:$0xf] %v1018
          %1072 = vst [vmem:[%s1029 + $0x98] sm:$0xf] %v1019
          %1073 = vst [vmem:[%s1029 + $0xa4] sm:$0xf] %v1020
          %1074 = vst [vmem:[%s1029 + $0xb0] sm:$0xf] %v1021
          %1075 = vst [vmem:[%s1029 + $0xbc] sm:$0xf] %v1022
          %1076 = vst [vmem:[%s1029 + $0xc8] sm:$0xf] %v1023
          %1077 = vst [vmem:[%s1029 + $0xd4] sm:$0xf] %v1024
        $region41: #{net_s_forward.1} parent=27 // loop_footer
          %s711 = sadd.s32 1, %s707
        $region42: #{net_s_forward.1} parent=27 // loop_footer_branch
          %706 = sbr.rel target = $region38
        $region43: #{net_s_forward.1} parent=27 // loop_exit
          _
        loop: start=0, step=1, limit=4
        $region44: #{net_s_forward.1} parent=27 // loop_pre_header
          _
        $region45: #{net_s_forward.1} parent=27 // loop_header
          %s1079 = sphi 0, %s1083
          %p1080 = scmp.ge.s32.totalorder %s1079, 4
        $region46: #{net_s_forward.1} parent=27 // loop_header_branch
          %1082 = sbr.rel (%p1080) target = $region50
        $region47: #{net_s_forward.1} parent=27 // loop_body
          %s1084 = smul.u32 %s1079, 2
          %s1085 = smul.u32 %s1079, 128
          %s1086 = smul.u32 %s1084, 30
          %s1087 = smul.addr %s1086, 4
          %s1088 = scalar_lea.vmem [#allocation2], %s1087
          %v1089 = vld [vmem:[%s1088] sm:$0xff]
          %v1090 = vld [vmem:[%s1088 + $0x8] sm:$0xf]
          %v1091 = vld [vmem:[%s1088 + $0xc] sm:$0xff]
          %v1092 = vld [vmem:[%s1088 + $0x14] sm:$0xf]
          %v1093 = vld [vmem:[%s1088 + $0x18] sm:$0xff]
          %v1094 = vld [vmem:[%s1088 + $0x20] sm:$0xf]
          %v1095 = vld [vmem:[%s1088 + $0x24] sm:$0xff]
          %v1096 = vld [vmem:[%s1088 + $0x2c] sm:$0xf]
          %v1097 = vld [vmem:[%s1088 + $0x30] sm:$0xff]
          %v1098 = vld [vmem:[%s1088 + $0x38] sm:$0xf]
          %v1099 = vld [vmem:[%s1088 + $0x3c] sm:$0xff]
          %v1100 = vld [vmem:[%s1088 + $0x44] sm:$0xf]
          %v1101 = vld [vmem:[%s1088 + $0x48] sm:$0xff]
          %v1102 = vld [vmem:[%s1088 + $0x50] sm:$0xf]
          %v1103 = vld [vmem:[%s1088 + $0x54] sm:$0xff]
          %v1104 = vld [vmem:[%s1088 + $0x5c] sm:$0xf]
          %v1105 = vld [vmem:[%s1088 + $0x78] sm:$0xff]
          %v1106 = vld [vmem:[%s1088 + $0x80] sm:$0xf]
          %v1107 = vld [vmem:[%s1088 + $0x84] sm:$0xff]
          %v1108 = vld [vmem:[%s1088 + $0x8c] sm:$0xf]
          %v1109 = vld [vmem:[%s1088 + $0x90] sm:$0xff]
          %v1110 = vld [vmem:[%s1088 + $0x98] sm:$0xf]
          %v1111 = vld [vmem:[%s1088 + $0x9c] sm:$0xff]
          %v1112 = vld [vmem:[%s1088 + $0xa4] sm:$0xf]
          %v1113 = vld [vmem:[%s1088 + $0xa8] sm:$0xff]
          %v1114 = vld [vmem:[%s1088 + $0xb0] sm:$0xf]
          %v1115 = vld [vmem:[%s1088 + $0xb4] sm:$0xff]
          %v1116 = vld [vmem:[%s1088 + $0xbc] sm:$0xf]
          %v1117 = vld [vmem:[%s1088 + $0xc0] sm:$0xff]
          %v1118 = vld [vmem:[%s1088 + $0xc8] sm:$0xf]
          %v1119 = vld [vmem:[%s1088 + $0xcc] sm:$0xff]
          %v1120 = vld [vmem:[%s1088 + $0xd4] sm:$0xf]
          %s1121 = smul.u32 %s19, 432
          %s1122 = smul.addr %s1121, 4
          %s1123 = scalar_lea.vmem [#allocation4], %s1122
          %v1124 = vld [vmem:[%s1123] sm:$0xf]
          %v1125 = vld [vmem:[%s1123 + $0x4] sm:$0xf]
          %v1126 = vld [vmem:[%s1123 + $0x8] sm:$0xf]
          %v1127 = vld [vmem:[%s1123 + $0xc] sm:$0xf]
          %v1128 = vld [vmem:[%s1123 + $0x10] sm:$0xf]
          %v1129 = vld [vmem:[%s1123 + $0x14] sm:$0xf]
          %v1130 = vld [vmem:[%s1123 + $0x18] sm:$0xf]
          %v1131 = vld [vmem:[%s1123 + $0x1c] sm:$0xf]
          %v1132 = vld [vmem:[%s1123 + $0x20] sm:$0xf]
          %v1133 = vld [vmem:[%s1123 + $0x24] sm:$0xf]
          %v1134 = vld [vmem:[%s1123 + $0x28] sm:$0xf]
          %v1135 = vld [vmem:[%s1123 + $0x2c] sm:$0xf]
          %v1136 = vld [vmem:[%s1123 + $0x30] sm:$0xf]
          %v1137 = vld [vmem:[%s1123 + $0x34] sm:$0xf]
          %v1138 = vld [vmem:[%s1123 + $0x38] sm:$0xf]
          %v1139 = vld [vmem:[%s1123 + $0x3c] sm:$0xf]
          %v1140 = vld [vmem:[%s1123 + $0x40] sm:$0xf]
          %v1141 = vld [vmem:[%s1123 + $0x44] sm:$0xf]
          %v1142 = vld [vmem:[%s1123 + $0x48] sm:$0xf]
          %v1143 = vld [vmem:[%s1123 + $0x4c] sm:$0xf]
          %v1144 = vld [vmem:[%s1123 + $0x50] sm:$0xf]
          %v1145 = vld [vmem:[%s1123 + $0x54] sm:$0xf]
          %v1146 = vld [vmem:[%s1123 + $0x58] sm:$0xf]
          %v1147 = vld [vmem:[%s1123 + $0x5c] sm:$0xf]
          %v1148 = vld [vmem:[%s1123 + $0x60] sm:$0xf]
          %v1149 = vld [vmem:[%s1123 + $0x64] sm:$0xf]
          %v1150 = vld [vmem:[%s1123 + $0x68] sm:$0xf]
          %v1151 = vld [vmem:[%s1123 + $0x6c] sm:$0xf]
          %v1152 = vld [vmem:[%s1123 + $0x70] sm:$0xf]
          %v1153 = vld [vmem:[%s1123 + $0x74] sm:$0xf]
          %v1154 = vld [vmem:[%s1123 + $0x78] sm:$0xf]
          %v1155 = vld [vmem:[%s1123 + $0x7c] sm:$0xf]
          %v1156 = vld [vmem:[%s1123 + $0x80] sm:$0xf]
          %v1157 = vld [vmem:[%s1123 + $0x84] sm:$0xf]
          %v1158 = vld [vmem:[%s1123 + $0x88] sm:$0xf]
          %v1159 = vld [vmem:[%s1123 + $0x8c] sm:$0xf]
          %v1160 = vld [vmem:[%s1123 + $0x90] sm:$0xf]
          %v1161 = vld [vmem:[%s1123 + $0x94] sm:$0xf]
          %v1162 = vld [vmem:[%s1123 + $0x98] sm:$0xf]
          %v1163 = vld [vmem:[%s1123 + $0x9c] sm:$0xf]
          %v1164 = vld [vmem:[%s1123 + $0xa0] sm:$0xf]
          %v1165 = vld [vmem:[%s1123 + $0xa4] sm:$0xf]
          %v1166 = vld [vmem:[%s1123 + $0xa8] sm:$0xf]
          %v1167 = vld [vmem:[%s1123 + $0xac] sm:$0xf]
          %v1168 = vld [vmem:[%s1123 + $0xb0] sm:$0xf]
          %v1169 = vld [vmem:[%s1123 + $0xb4] sm:$0xf]
          %v1170 = vld [vmem:[%s1123 + $0xb8] sm:$0xf]
          %v1171 = vld [vmem:[%s1123 + $0xbc] sm:$0xf]
          %s1172 = sadd.s32 3, %s1086
          %s1173 = smul.addr %s1172, 4
          %s1174 = scalar_lea.vmem [#allocation2], %s1173
          %v1175 = vld [vmem:[%s1174] sm:$0xff]
          %v1176 = vld [vmem:[%s1174 + $0x8] sm:$0xf]
          %v1177 = vld [vmem:[%s1174 + $0xc] sm:$0xff]
          %v1178 = vld [vmem:[%s1174 + $0x14] sm:$0xf]
          %v1179 = vld [vmem:[%s1174 + $0x18] sm:$0xff]
          %v1180 = vld [vmem:[%s1174 + $0x20] sm:$0xf]
          %v1181 = vld [vmem:[%s1174 + $0x24] sm:$0xff]
          %v1182 = vld [vmem:[%s1174 + $0x2c] sm:$0xf]
          %v1183 = vld [vmem:[%s1174 + $0x30] sm:$0xff]
          %v1184 = vld [vmem:[%s1174 + $0x38] sm:$0xf]
          %v1185 = vld [vmem:[%s1174 + $0x3c] sm:$0xff]
          %v1186 = vld [vmem:[%s1174 + $0x44] sm:$0xf]
          %v1187 = vld [vmem:[%s1174 + $0x48] sm:$0xff]
          %v1188 = vld [vmem:[%s1174 + $0x50] sm:$0xf]
          %v1189 = vld [vmem:[%s1174 + $0x54] sm:$0xff]
          %v1190 = vld [vmem:[%s1174 + $0x5c] sm:$0xf]
          %v1191 = vld [vmem:[%s1174 + $0x78] sm:$0xff]
          %v1192 = vld [vmem:[%s1174 + $0x80] sm:$0xf]
          %v1193 = vld [vmem:[%s1174 + $0x84] sm:$0xff]
          %v1194 = vld [vmem:[%s1174 + $0x8c] sm:$0xf]
          %v1195 = vld [vmem:[%s1174 + $0x90] sm:$0xff]
          %v1196 = vld [vmem:[%s1174 + $0x98] sm:$0xf]
          %v1197 = vld [vmem:[%s1174 + $0x9c] sm:$0xff]
          %v1198 = vld [vmem:[%s1174 + $0xa4] sm:$0xf]
          %v1199 = vld [vmem:[%s1174 + $0xa8] sm:$0xff]
          %v1200 = vld [vmem:[%s1174 + $0xb0] sm:$0xf]
          %v1201 = vld [vmem:[%s1174 + $0xb4] sm:$0xff]
          %v1202 = vld [vmem:[%s1174 + $0xbc] sm:$0xf]
          %v1203 = vld [vmem:[%s1174 + $0xc0] sm:$0xff]
          %v1204 = vld [vmem:[%s1174 + $0xc8] sm:$0xf]
          %v1205 = vld [vmem:[%s1174 + $0xcc] sm:$0xff]
          %v1206 = vld [vmem:[%s1174 + $0xd4] sm:$0xf]
          %s1207 = sadd.s32 48, %s1121
          %s1208 = smul.addr %s1207, 4
          %s1209 = scalar_lea.vmem [#allocation4], %s1208
          %v1210 = vld [vmem:[%s1209] sm:$0xf]
          %v1211 = vld [vmem:[%s1209 + $0x4] sm:$0xf]
          %v1212 = vld [vmem:[%s1209 + $0x8] sm:$0xf]
          %v1213 = vld [vmem:[%s1209 + $0xc] sm:$0xf]
          %v1214 = vld [vmem:[%s1209 + $0x10] sm:$0xf]
          %v1215 = vld [vmem:[%s1209 + $0x14] sm:$0xf]
          %v1216 = vld [vmem:[%s1209 + $0x18] sm:$0xf]
          %v1217 = vld [vmem:[%s1209 + $0x1c] sm:$0xf]
          %v1218 = vld [vmem:[%s1209 + $0x20] sm:$0xf]
          %v1219 = vld [vmem:[%s1209 + $0x24] sm:$0xf]
          %v1220 = vld [vmem:[%s1209 + $0x28] sm:$0xf]
          %v1221 = vld [vmem:[%s1209 + $0x2c] sm:$0xf]
          %v1222 = vld [vmem:[%s1209 + $0x30] sm:$0xf]
          %v1223 = vld [vmem:[%s1209 + $0x34] sm:$0xf]
          %v1224 = vld [vmem:[%s1209 + $0x38] sm:$0xf]
          %v1225 = vld [vmem:[%s1209 + $0x3c] sm:$0xf]
          %v1226 = vld [vmem:[%s1209 + $0x40] sm:$0xf]
          %v1227 = vld [vmem:[%s1209 + $0x44] sm:$0xf]
          %v1228 = vld [vmem:[%s1209 + $0x48] sm:$0xf]
          %v1229 = vld [vmem:[%s1209 + $0x4c] sm:$0xf]
          %v1230 = vld [vmem:[%s1209 + $0x50] sm:$0xf]
          %v1231 = vld [vmem:[%s1209 + $0x54] sm:$0xf]
          %v1232 = vld [vmem:[%s1209 + $0x58] sm:$0xf]
          %v1233 = vld [vmem:[%s1209 + $0x5c] sm:$0xf]
          %v1234 = vld [vmem:[%s1209 + $0x60] sm:$0xf]
          %v1235 = vld [vmem:[%s1209 + $0x64] sm:$0xf]
          %v1236 = vld [vmem:[%s1209 + $0x68] sm:$0xf]
          %v1237 = vld [vmem:[%s1209 + $0x6c] sm:$0xf]
          %v1238 = vld [vmem:[%s1209 + $0x70] sm:$0xf]
          %v1239 = vld [vmem:[%s1209 + $0x74] sm:$0xf]
          %v1240 = vld [vmem:[%s1209 + $0x78] sm:$0xf]
          %v1241 = vld [vmem:[%s1209 + $0x7c] sm:$0xf]
          %v1242 = vld [vmem:[%s1209 + $0x80] sm:$0xf]
          %v1243 = vld [vmem:[%s1209 + $0x84] sm:$0xf]
          %v1244 = vld [vmem:[%s1209 + $0x88] sm:$0xf]
          %v1245 = vld [vmem:[%s1209 + $0x8c] sm:$0xf]
          %v1246 = vld [vmem:[%s1209 + $0x90] sm:$0xf]
          %v1247 = vld [vmem:[%s1209 + $0x94] sm:$0xf]
          %v1248 = vld [vmem:[%s1209 + $0x98] sm:$0xf]
          %v1249 = vld [vmem:[%s1209 + $0x9c] sm:$0xf]
          %v1250 = vld [vmem:[%s1209 + $0xa0] sm:$0xf]
          %v1251 = vld [vmem:[%s1209 + $0xa4] sm:$0xf]
          %v1252 = vld [vmem:[%s1209 + $0xa8] sm:$0xf]
          %v1253 = vld [vmem:[%s1209 + $0xac] sm:$0xf]
          %v1254 = vld [vmem:[%s1209 + $0xb0] sm:$0xf]
          %v1255 = vld [vmem:[%s1209 + $0xb4] sm:$0xf]
          %v1256 = vld [vmem:[%s1209 + $0xb8] sm:$0xf]
          %v1257 = vld [vmem:[%s1209 + $0xbc] sm:$0xf]
          %v1290 = vunpack.c.l.b16 %v1175
          %v1291 = vunpack.c.h.b16 %v1175
          %v1292 = vunpack.c.l.b16 %v1176
          %v1293 = vunpack.c.l.b16 %v1177
          %v1294 = vunpack.c.h.b16 %v1177
          %v1295 = vunpack.c.l.b16 %v1178
          %v1296 = vunpack.c.l.b16 %v1179
          %v1297 = vunpack.c.h.b16 %v1179
          %v1298 = vunpack.c.l.b16 %v1180
          %v1299 = vunpack.c.l.b16 %v1181
          %v1300 = vunpack.c.h.b16 %v1181
          %v1301 = vunpack.c.l.b16 %v1182
          %v1302 = vunpack.c.l.b16 %v1183
          %v1303 = vunpack.c.h.b16 %v1183
          %v1304 = vunpack.c.l.b16 %v1184
          %v1305 = vunpack.c.l.b16 %v1185
          %v1306 = vunpack.c.h.b16 %v1185
          %v1307 = vunpack.c.l.b16 %v1186
          %v1308 = vunpack.c.l.b16 %v1187
          %v1309 = vunpack.c.h.b16 %v1187
          %v1310 = vunpack.c.l.b16 %v1188
          %v1311 = vunpack.c.l.b16 %v1189
          %v1312 = vunpack.c.h.b16 %v1189
          %v1313 = vunpack.c.l.b16 %v1190
          %v1314 = vunpack.c.l.b16 %v1191
          %v1315 = vunpack.c.h.b16 %v1191
          %v1316 = vunpack.c.l.b16 %v1192
          %v1317 = vunpack.c.l.b16 %v1193
          %v1318 = vunpack.c.h.b16 %v1193
          %v1319 = vunpack.c.l.b16 %v1194
          %v1320 = vunpack.c.l.b16 %v1195
          %v1321 = vunpack.c.h.b16 %v1195
          %v1322 = vunpack.c.l.b16 %v1196
          %v1323 = vunpack.c.l.b16 %v1197
          %v1324 = vunpack.c.h.b16 %v1197
          %v1325 = vunpack.c.l.b16 %v1198
          %v1326 = vunpack.c.l.b16 %v1199
          %v1327 = vunpack.c.h.b16 %v1199
          %v1328 = vunpack.c.l.b16 %v1200
          %v1329 = vunpack.c.l.b16 %v1201
          %v1330 = vunpack.c.h.b16 %v1201
          %v1331 = vunpack.c.l.b16 %v1202
          %v1332 = vunpack.c.l.b16 %v1203
          %v1333 = vunpack.c.h.b16 %v1203
          %v1334 = vunpack.c.l.b16 %v1204
          %v1335 = vunpack.c.l.b16 %v1205
          %v1336 = vunpack.c.h.b16 %v1205
          %v1337 = vunpack.c.l.b16 %v1206
          %v1338 = vpack.c.b16 %v1293, %v1290
          %v1339 = vpack.c.b16 %v1294, %v1291
          %v1340 = vpack.c.b16 %v1295, %v1292
          %v1341 = vpack.c.b16 %v1299, %v1296
          %v1342 = vpack.c.b16 %v1300, %v1297
          %v1343 = vpack.c.b16 %v1301, %v1298
          %v1344 = vpack.c.b16 %v1305, %v1302
          %v1345 = vpack.c.b16 %v1306, %v1303
          %v1346 = vpack.c.b16 %v1307, %v1304
          %v1347 = vpack.c.b16 %v1311, %v1308
          %v1348 = vpack.c.b16 %v1312, %v1309
          %v1349 = vpack.c.b16 %v1313, %v1310
          %v1350 = vpack.c.b16 %v1317, %v1314
          %v1351 = vpack.c.b16 %v1318, %v1315
          %v1352 = vpack.c.b16 %v1319, %v1316
          %v1353 = vpack.c.b16 %v1323, %v1320
          %v1354 = vpack.c.b16 %v1324, %v1321
          %v1355 = vpack.c.b16 %v1325, %v1322
          %v1356 = vpack.c.b16 %v1329, %v1326
          %v1357 = vpack.c.b16 %v1330, %v1327
          %v1358 = vpack.c.b16 %v1331, %v1328
          %v1359 = vpack.c.b16 %v1335, %v1332
          %v1360 = vpack.c.b16 %v1336, %v1333
          %v1361 = vpack.c.b16 %v1337, %v1334
          %v1434 = vunpack.c.l.b16 %v1210
          %v1435 = vunpack.c.l.b16 %v1211
          %v1436 = vunpack.c.l.b16 %v1212
          %v1437 = vunpack.c.l.b16 %v1213
          %v1438 = vunpack.c.l.b16 %v1214
          %v1439 = vunpack.c.l.b16 %v1215
          %v1440 = vunpack.c.l.b16 %v1216
          %v1441 = vunpack.c.l.b16 %v1217
          %v1442 = vunpack.c.l.b16 %v1218
          %v1443 = vunpack.c.l.b16 %v1219
          %v1444 = vunpack.c.l.b16 %v1220
          %v1445 = vunpack.c.l.b16 %v1221
          %v1446 = vunpack.c.l.b16 %v1222
          %v1447 = vunpack.c.l.b16 %v1223
          %v1448 = vunpack.c.l.b16 %v1224
          %v1449 = vunpack.c.l.b16 %v1225
          %v1450 = vunpack.c.l.b16 %v1226
          %v1451 = vunpack.c.l.b16 %v1227
          %v1452 = vunpack.c.l.b16 %v1228
          %v1453 = vunpack.c.l.b16 %v1229
          %v1454 = vunpack.c.l.b16 %v1230
          %v1455 = vunpack.c.l.b16 %v1231
          %v1456 = vunpack.c.l.b16 %v1232
          %v1457 = vunpack.c.l.b16 %v1233
          %v1458 = vunpack.c.l.b16 %v1234
          %v1459 = vunpack.c.l.b16 %v1235
          %v1460 = vunpack.c.l.b16 %v1236
          %v1461 = vunpack.c.l.b16 %v1237
          %v1462 = vunpack.c.l.b16 %v1238
          %v1463 = vunpack.c.l.b16 %v1239
          %v1464 = vunpack.c.l.b16 %v1240
          %v1465 = vunpack.c.l.b16 %v1241
          %v1466 = vunpack.c.l.b16 %v1242
          %v1467 = vunpack.c.l.b16 %v1243
          %v1468 = vunpack.c.l.b16 %v1244
          %v1469 = vunpack.c.l.b16 %v1245
          %v1470 = vunpack.c.l.b16 %v1246
          %v1471 = vunpack.c.l.b16 %v1247
          %v1472 = vunpack.c.l.b16 %v1248
          %v1473 = vunpack.c.l.b16 %v1249
          %v1474 = vunpack.c.l.b16 %v1250
          %v1475 = vunpack.c.l.b16 %v1251
          %v1476 = vunpack.c.l.b16 %v1252
          %v1477 = vunpack.c.l.b16 %v1253
          %v1478 = vunpack.c.l.b16 %v1254
          %v1479 = vunpack.c.l.b16 %v1255
          %v1480 = vunpack.c.l.b16 %v1256
          %v1481 = vunpack.c.l.b16 %v1257
          %v1482 = vpack.c.b16 %v1435, %v1434
          %v1483 = vpack.c.b16 %v1437, %v1436
          %v1484 = vpack.c.b16 %v1439, %v1438
          %v1485 = vpack.c.b16 %v1441, %v1440
          %v1486 = vpack.c.b16 %v1443, %v1442
          %v1487 = vpack.c.b16 %v1445, %v1444
          %v1488 = vpack.c.b16 %v1447, %v1446
          %v1489 = vpack.c.b16 %v1449, %v1448
          %v1490 = vpack.c.b16 %v1451, %v1450
          %v1491 = vpack.c.b16 %v1453, %v1452
          %v1492 = vpack.c.b16 %v1455, %v1454
          %v1493 = vpack.c.b16 %v1457, %v1456
          %v1494 = vpack.c.b16 %v1459, %v1458
          %v1495 = vpack.c.b16 %v1461, %v1460
          %v1496 = vpack.c.b16 %v1463, %v1462
          %v1497 = vpack.c.b16 %v1465, %v1464
          %v1498 = vpack.c.b16 %v1467, %v1466
          %v1499 = vpack.c.b16 %v1469, %v1468
          %v1500 = vpack.c.b16 %v1471, %v1470
          %v1501 = vpack.c.b16 %v1473, %v1472
          %v1502 = vpack.c.b16 %v1475, %v1474
          %v1503 = vpack.c.b16 %v1477, %v1476
          %v1504 = vpack.c.b16 %v1479, %v1478
          %v1505 = vpack.c.b16 %v1481, %v1480
          %1530 = vmatprep.subr.bf16.mxu0 0
          %1531 = vmatpush1.bf16.msra.mxu0 %v1482
          %1532 = vmatprep.subr.bf16.mxu0 0
          %1533 = vmatpush1.bf16.msra.mxu0 %v1483
          %1534 = vmatprep.subr.bf16.mxu0 0
          %1535 = vmatpush1.bf16.msra.mxu0 %v1484
          %1536 = vmatprep.subr.bf16.mxu0 0
          %1537 = vmatpush1.bf16.msra.mxu0 %v1485
          %1538 = vmatprep.subr.bf16.mxu0 0
          %1539 = vmatpush1.bf16.msra.mxu0 %v1486
          %1540 = vmatprep.subr.bf16.mxu0 0
          %1541 = vmatpush1.bf16.msra.mxu0 %v1487
          %1542 = vmatprep.subr.bf16.mxu0 0
          %1543 = vmatpush1.bf16.msra.mxu0 %v1488
          %1544 = vmatprep.subr.bf16.mxu0 0
          %1545 = vmatpush1.bf16.msra.mxu0 %v1489
          %1546 = vmatprep.subr.bf16.mxu0 0
          %1547 = vmatpush1.bf16.msra.mxu0 %v1490
          %1548 = vmatprep.subr.bf16.mxu0 0
          %1549 = vmatpush1.bf16.msra.mxu0 %v1491
          %1550 = vmatprep.subr.bf16.mxu0 0
          %1551 = vmatpush1.bf16.msra.mxu0 %v1492
          %1552 = vmatprep.subr.bf16.mxu0 0
          %1553 = vmatpush1.bf16.msra.mxu0 %v1493
          %1554 = vmatprep.subr.bf16.mxu0 0
          %1555 = vmatpush1.bf16.msra.mxu0 %v1494
          %1556 = vmatprep.subr.bf16.mxu0 0
          %1557 = vmatpush1.bf16.msra.mxu0 %v1495
          %1558 = vmatprep.subr.bf16.mxu0 0
          %1559 = vmatpush1.bf16.msra.mxu0 %v1496
          %1560 = vmatprep.subr.bf16.mxu0 0
          %1561 = vmatpush1.bf16.msra.mxu0 %v1497
          %1562 = vmatprep.mubr.bf16.mxu0 %v1339
          %1563 = vmatmul.mubr.bf16.gmra.mrb[0].mxu0 %v1338
          %v1564 = vpop.f32.mrb[0].mxu0
          %v1565 = vadd.f32 0.0, %v1564
          %v1566 = vpop.f32.mrb[0].mxu0
          %v1567 = vpop.f32.mrb[0].mxu0
          %v1568 = vadd.f32 0.0, %v1567
          %v1569 = vpop.f32.mrb[0].mxu0
          %1570 = vmatprep.mubr.bf16.mxu0 %v1342
          %1571 = vmatmul.mubr.bf16.gmra.mrb[0].mxu0 %v1341
          %v1572 = vpop.f32.mrb[0].mxu0
          %v1573 = vadd.f32 0.0, %v1572
          %v1574 = vpop.f32.mrb[0].mxu0
          %v1575 = vpop.f32.mrb[0].mxu0
          %v1576 = vadd.f32 0.0, %v1575
          %v1577 = vpop.f32.mrb[0].mxu0
          %1578 = vmatprep.mubr.bf16.mxu0 %v1345
          %1579 = vmatmul.mubr.bf16.gmra.mrb[0].mxu0 %v1344
          %v1580 = vpop.f32.mrb[0].mxu0
          %v1581 = vadd.f32 0.0, %v1580
          %v1582 = vpop.f32.mrb[0].mxu0
          %v1583 = vpop.f32.mrb[0].mxu0
          %v1584 = vadd.f32 0.0, %v1583
          %v1585 = vpop.f32.mrb[0].mxu0
          %1586 = vmatprep.mubr.bf16.mxu0 %v1348
          %1587 = vmatmul.mubr.bf16.gmra.mrb[0].mxu0 %v1347
          %v1588 = vpop.f32.mrb[0].mxu0
          %v1589 = vadd.f32 0.0, %v1588
          %v1590 = vpop.f32.mrb[0].mxu0
          %v1591 = vpop.f32.mrb[0].mxu0
          %v1592 = vadd.f32 0.0, %v1591
          %v1593 = vpop.f32.mrb[0].mxu0
          %1594 = vmatprep.mubr.bf16.mxu0 %v1351
          %1595 = vmatmul.mubr.bf16.gmra.mrb[0].mxu0 %v1350
          %v1596 = vpop.f32.mrb[0].mxu0
          %v1597 = vadd.f32 0.0, %v1596
          %v1598 = vpop.f32.mrb[0].mxu0
          %v1599 = vpop.f32.mrb[0].mxu0
          %v1600 = vadd.f32 0.0, %v1599
          %v1601 = vpop.f32.mrb[0].mxu0
          %1602 = vmatprep.mubr.bf16.mxu0 %v1354
          %1603 = vmatmul.mubr.bf16.gmra.mrb[0].mxu0 %v1353
          %v1604 = vpop.f32.mrb[0].mxu0
          %v1605 = vadd.f32 0.0, %v1604
          %v1606 = vpop.f32.mrb[0].mxu0
          %v1607 = vpop.f32.mrb[0].mxu0
          %v1608 = vadd.f32 0.0, %v1607
          %v1609 = vpop.f32.mrb[0].mxu0
          %1610 = vmatprep.mubr.bf16.mxu0 %v1357
          %1611 = vmatmul.mubr.bf16.gmra.mrb[0].mxu0 %v1356
          %v1612 = vpop.f32.mrb[0].mxu0
          %v1613 = vadd.f32 0.0, %v1612
          %v1614 = vpop.f32.mrb[0].mxu0
          %v1615 = vpop.f32.mrb[0].mxu0
          %v1616 = vadd.f32 0.0, %v1615
          %v1617 = vpop.f32.mrb[0].mxu0
          %1618 = vmatprep.mubr.bf16.mxu0 %v1360
          %1619 = vmatmul.mubr.bf16.gmra.mrb[0].mxu0 %v1359
          %v1620 = vpop.f32.mrb[0].mxu0
          %v1621 = vadd.f32 0.0, %v1620
          %v1622 = vpop.f32.mrb[0].mxu0
          %v1623 = vpop.f32.mrb[0].mxu0
          %v1624 = vadd.f32 0.0, %v1623
          %v1625 = vpop.f32.mrb[0].mxu0
          %1626 = vdwg.mxu0
          %1627 = vmatprep.subr.bf16.mxu0 0
          %1628 = vmatpush1.bf16.msra.mxu0 %v1498
          %1629 = vmatprep.subr.bf16.mxu0 0
          %1630 = vmatpush1.bf16.msra.mxu0 %v1499
          %1631 = vmatprep.subr.bf16.mxu0 0
          %1632 = vmatpush1.bf16.msra.mxu0 %v1500
          %1633 = vmatprep.subr.bf16.mxu0 0
          %1634 = vmatpush1.bf16.msra.mxu0 %v1501
          %1635 = vmatprep.subr.bf16.mxu0 0
          %1636 = vmatpush1.bf16.msra.mxu0 %v1502
          %1637 = vmatprep.subr.bf16.mxu0 0
          %1638 = vmatpush1.bf16.msra.mxu0 %v1503
          %1639 = vmatprep.subr.bf16.mxu0 0
          %1640 = vmatpush1.bf16.msra.mxu0 %v1504
          %1641 = vmatprep.subr.bf16.mxu0 0
          %1642 = vmatpush1.bf16.msra.mxu0 %v1505
          %1643 = vmatprep.subr.bf16.mxu0 0
          %1644 = vmatpush1.bf16.msra.mxu0 0
          %1645 = vmatprep.subr.bf16.mxu0 0
          %1646 = vmatpush1.bf16.msra.mxu0 0
          %1647 = vmatprep.subr.bf16.mxu0 0
          %1648 = vmatpush1.bf16.msra.mxu0 0
          %1649 = vmatprep.subr.bf16.mxu0 0
          %1650 = vmatpush1.bf16.msra.mxu0 0
          %1651 = vmatprep.subr.bf16.mxu0 0
          %1652 = vmatpush1.bf16.msra.mxu0 0
          %1653 = vmatprep.subr.bf16.mxu0 0
          %1654 = vmatpush1.bf16.msra.mxu0 0
          %1655 = vmatprep.subr.bf16.mxu0 0
          %1656 = vmatpush1.bf16.msra.mxu0 0
          %1657 = vmatprep.subr.bf16.mxu0 0
          %1658 = vmatpush1.bf16.msra.mxu0 0
          %1659 = vmatprep.mubr.bf16.mxu0 0
          %1660 = vmatmul.mubr.bf16.gmra.mrb[0].mxu0 %v1340
          %v1661 = vpop.f32.mrb[0].mxu0
          %v1662 = vadd.f32 %v1565, %v1661
          %v1663 = vpop.f32.mrb[0].mxu0
          %v1664 = vpop.f32.mrb[0].mxu0
          %v1665 = vadd.f32 %v1568, %v1664
          %v1666 = vpop.f32.mrb[0].mxu0
          %1667 = vmatprep.mubr.bf16.mxu0 0
          %1668 = vmatmul.mubr.bf16.gmra.mrb[0].mxu0 %v1343
          %v1669 = vpop.f32.mrb[0].mxu0
          %v1670 = vadd.f32 %v1573, %v1669
          %v1671 = vpop.f32.mrb[0].mxu0
          %v1672 = vpop.f32.mrb[0].mxu0
          %v1673 = vadd.f32 %v1576, %v1672
          %v1674 = vpop.f32.mrb[0].mxu0
          %1675 = vmatprep.mubr.bf16.mxu0 0
          %1676 = vmatmul.mubr.bf16.gmra.mrb[0].mxu0 %v1346
          %v1677 = vpop.f32.mrb[0].mxu0
          %v1678 = vadd.f32 %v1581, %v1677
          %v1679 = vpop.f32.mrb[0].mxu0
          %v1680 = vpop.f32.mrb[0].mxu0
          %v1681 = vadd.f32 %v1584, %v1680
          %v1682 = vpop.f32.mrb[0].mxu0
          %1683 = vmatprep.mubr.bf16.mxu0 0
          %1684 = vmatmul.mubr.bf16.gmra.mrb[0].mxu0 %v1349
          %v1685 = vpop.f32.mrb[0].mxu0
          %v1686 = vadd.f32 %v1589, %v1685
          %v1687 = vpop.f32.mrb[0].mxu0
          %v1688 = vpop.f32.mrb[0].mxu0
          %v1689 = vadd.f32 %v1592, %v1688
          %v1690 = vpop.f32.mrb[0].mxu0
          %1691 = vmatprep.mubr.bf16.mxu0 0
          %1692 = vmatmul.mubr.bf16.gmra.mrb[0].mxu0 %v1352
          %v1693 = vpop.f32.mrb[0].mxu0
          %v1694 = vadd.f32 %v1597, %v1693
          %v1695 = vpop.f32.mrb[0].mxu0
          %v1696 = vpop.f32.mrb[0].mxu0
          %v1697 = vadd.f32 %v1600, %v1696
          %v1698 = vpop.f32.mrb[0].mxu0
          %1699 = vmatprep.mubr.bf16.mxu0 0
          %1700 = vmatmul.mubr.bf16.gmra.mrb[0].mxu0 %v1355
          %v1701 = vpop.f32.mrb[0].mxu0
          %v1702 = vadd.f32 %v1605, %v1701
          %v1703 = vpop.f32.mrb[0].mxu0
          %v1704 = vpop.f32.mrb[0].mxu0
          %v1705 = vadd.f32 %v1608, %v1704
          %v1706 = vpop.f32.mrb[0].mxu0
          %1707 = vmatprep.mubr.bf16.mxu0 0
          %1708 = vmatmul.mubr.bf16.gmra.mrb[0].mxu0 %v1358
          %v1709 = vpop.f32.mrb[0].mxu0
          %v1710 = vadd.f32 %v1613, %v1709
          %v1711 = vpop.f32.mrb[0].mxu0
          %v1712 = vpop.f32.mrb[0].mxu0
          %v1713 = vadd.f32 %v1616, %v1712
          %v1714 = vpop.f32.mrb[0].mxu0
          %1715 = vmatprep.mubr.bf16.mxu0 0
          %1716 = vmatmul.mubr.bf16.gmra.mrb[0].mxu0 %v1361
          %v1717 = vpop.f32.mrb[0].mxu0
          %v1718 = vadd.f32 %v1621, %v1717
          %v1719 = vpop.f32.mrb[0].mxu0
          %v1720 = vpop.f32.mrb[0].mxu0
          %v1721 = vadd.f32 %v1624, %v1720
          %v1722 = vpop.f32.mrb[0].mxu0
          %1723 = vdwg.mxu0
          %v1756 = vunpack.c.l.b16 %v1089
          %v1757 = vunpack.c.h.b16 %v1089
          %v1758 = vunpack.c.l.b16 %v1090
          %v1759 = vunpack.c.l.b16 %v1091
          %v1760 = vunpack.c.h.b16 %v1091
          %v1761 = vunpack.c.l.b16 %v1092
          %v1762 = vunpack.c.l.b16 %v1093
          %v1763 = vunpack.c.h.b16 %v1093
          %v1764 = vunpack.c.l.b16 %v1094
          %v1765 = vunpack.c.l.b16 %v1095
          %v1766 = vunpack.c.h.b16 %v1095
          %v1767 = vunpack.c.l.b16 %v1096
          %v1768 = vunpack.c.l.b16 %v1097
          %v1769 = vunpack.c.h.b16 %v1097
          %v1770 = vunpack.c.l.b16 %v1098
          %v1771 = vunpack.c.l.b16 %v1099
          %v1772 = vunpack.c.h.b16 %v1099
          %v1773 = vunpack.c.l.b16 %v1100
          %v1774 = vunpack.c.l.b16 %v1101
          %v1775 = vunpack.c.h.b16 %v1101
          %v1776 = vunpack.c.l.b16 %v1102
          %v1777 = vunpack.c.l.b16 %v1103
          %v1778 = vunpack.c.h.b16 %v1103
          %v1779 = vunpack.c.l.b16 %v1104
          %v1780 = vunpack.c.l.b16 %v1105
          %v1781 = vunpack.c.h.b16 %v1105
          %v1782 = vunpack.c.l.b16 %v1106
          %v1783 = vunpack.c.l.b16 %v1107
          %v1784 = vunpack.c.h.b16 %v1107
          %v1785 = vunpack.c.l.b16 %v1108
          %v1786 = vunpack.c.l.b16 %v1109
          %v1787 = vunpack.c.h.b16 %v1109
          %v1788 = vunpack.c.l.b16 %v1110
          %v1789 = vunpack.c.l.b16 %v1111
          %v1790 = vunpack.c.h.b16 %v1111
          %v1791 = vunpack.c.l.b16 %v1112
          %v1792 = vunpack.c.l.b16 %v1113
          %v1793 = vunpack.c.h.b16 %v1113
          %v1794 = vunpack.c.l.b16 %v1114
          %v1795 = vunpack.c.l.b16 %v1115
          %v1796 = vunpack.c.h.b16 %v1115
          %v1797 = vunpack.c.l.b16 %v1116
          %v1798 = vunpack.c.l.b16 %v1117
          %v1799 = vunpack.c.h.b16 %v1117
          %v1800 = vunpack.c.l.b16 %v1118
          %v1801 = vunpack.c.l.b16 %v1119
          %v1802 = vunpack.c.h.b16 %v1119
          %v1803 = vunpack.c.l.b16 %v1120
          %v1804 = vpack.c.b16 %v1759, %v1756
          %v1805 = vpack.c.b16 %v1760, %v1757
          %v1806 = vpack.c.b16 %v1761, %v1758
          %v1807 = vpack.c.b16 %v1765, %v1762
          %v1808 = vpack.c.b16 %v1766, %v1763
          %v1809 = vpack.c.b16 %v1767, %v1764
          %v1810 = vpack.c.b16 %v1771, %v1768
          %v1811 = vpack.c.b16 %v1772, %v1769
          %v1812 = vpack.c.b16 %v1773, %v1770
          %v1813 = vpack.c.b16 %v1777, %v1774
          %v1814 = vpack.c.b16 %v1778, %v1775
          %v1815 = vpack.c.b16 %v1779, %v1776
          %v1816 = vpack.c.b16 %v1783, %v1780
          %v1817 = vpack.c.b16 %v1784, %v1781
          %v1818 = vpack.c.b16 %v1785, %v1782
          %v1819 = vpack.c.b16 %v1789, %v1786
          %v1820 = vpack.c.b16 %v1790, %v1787
          %v1821 = vpack.c.b16 %v1791, %v1788
          %v1822 = vpack.c.b16 %v1795, %v1792
          %v1823 = vpack.c.b16 %v1796, %v1793
          %v1824 = vpack.c.b16 %v1797, %v1794
          %v1825 = vpack.c.b16 %v1801, %v1798
          %v1826 = vpack.c.b16 %v1802, %v1799
          %v1827 = vpack.c.b16 %v1803, %v1800
          %v1900 = vunpack.c.l.b16 %v1124
          %v1901 = vunpack.c.l.b16 %v1125
          %v1902 = vunpack.c.l.b16 %v1126
          %v1903 = vunpack.c.l.b16 %v1127
          %v1904 = vunpack.c.l.b16 %v1128
          %v1905 = vunpack.c.l.b16 %v1129
          %v1906 = vunpack.c.l.b16 %v1130
          %v1907 = vunpack.c.l.b16 %v1131
          %v1908 = vunpack.c.l.b16 %v1132
          %v1909 = vunpack.c.l.b16 %v1133
          %v1910 = vunpack.c.l.b16 %v1134
          %v1911 = vunpack.c.l.b16 %v1135
          %v1912 = vunpack.c.l.b16 %v1136
          %v1913 = vunpack.c.l.b16 %v1137
          %v1914 = vunpack.c.l.b16 %v1138
          %v1915 = vunpack.c.l.b16 %v1139
          %v1916 = vunpack.c.l.b16 %v1140
          %v1917 = vunpack.c.l.b16 %v1141
          %v1918 = vunpack.c.l.b16 %v1142
          %v1919 = vunpack.c.l.b16 %v1143
          %v1920 = vunpack.c.l.b16 %v1144
          %v1921 = vunpack.c.l.b16 %v1145
          %v1922 = vunpack.c.l.b16 %v1146
          %v1923 = vunpack.c.l.b16 %v1147
          %v1924 = vunpack.c.l.b16 %v1148
          %v1925 = vunpack.c.l.b16 %v1149
          %v1926 = vunpack.c.l.b16 %v1150
          %v1927 = vunpack.c.l.b16 %v1151
          %v1928 = vunpack.c.l.b16 %v1152
          %v1929 = vunpack.c.l.b16 %v1153
          %v1930 = vunpack.c.l.b16 %v1154
          %v1931 = vunpack.c.l.b16 %v1155
          %v1932 = vunpack.c.l.b16 %v1156
          %v1933 = vunpack.c.l.b16 %v1157
          %v1934 = vunpack.c.l.b16 %v1158
          %v1935 = vunpack.c.l.b16 %v1159
          %v1936 = vunpack.c.l.b16 %v1160
          %v1937 = vunpack.c.l.b16 %v1161
          %v1938 = vunpack.c.l.b16 %v1162
          %v1939 = vunpack.c.l.b16 %v1163
          %v1940 = vunpack.c.l.b16 %v1164
          %v1941 = vunpack.c.l.b16 %v1165
          %v1942 = vunpack.c.l.b16 %v1166
          %v1943 = vunpack.c.l.b16 %v1167
          %v1944 = vunpack.c.l.b16 %v1168
          %v1945 = vunpack.c.l.b16 %v1169
          %v1946 = vunpack.c.l.b16 %v1170
          %v1947 = vunpack.c.l.b16 %v1171
          %v1948 = vpack.c.b16 %v1901, %v1900
          %v1949 = vpack.c.b16 %v1903, %v1902
          %v1950 = vpack.c.b16 %v1905, %v1904
          %v1951 = vpack.c.b16 %v1907, %v1906
          %v1952 = vpack.c.b16 %v1909, %v1908
          %v1953 = vpack.c.b16 %v1911, %v1910
          %v1954 = vpack.c.b16 %v1913, %v1912
          %v1955 = vpack.c.b16 %v1915, %v1914
          %v1956 = vpack.c.b16 %v1917, %v1916
          %v1957 = vpack.c.b16 %v1919, %v1918
          %v1958 = vpack.c.b16 %v1921, %v1920
          %v1959 = vpack.c.b16 %v1923, %v1922
          %v1960 = vpack.c.b16 %v1925, %v1924
          %v1961 = vpack.c.b16 %v1927, %v1926
          %v1962 = vpack.c.b16 %v1929, %v1928
          %v1963 = vpack.c.b16 %v1931, %v1930
          %v1964 = vpack.c.b16 %v1933, %v1932
          %v1965 = vpack.c.b16 %v1935, %v1934
          %v1966 = vpack.c.b16 %v1937, %v1936
          %v1967 = vpack.c.b16 %v1939, %v1938
          %v1968 = vpack.c.b16 %v1941, %v1940
          %v1969 = vpack.c.b16 %v1943, %v1942
          %v1970 = vpack.c.b16 %v1945, %v1944
          %v1971 = vpack.c.b16 %v1947, %v1946
          %1996 = vmatprep.subr.bf16.mxu0 0
          %1997 = vmatpush1.bf16.msra.mxu0 %v1948
          %1998 = vmatprep.subr.bf16.mxu0 0
          %1999 = vmatpush1.bf16.msra.mxu0 %v1949
          %2000 = vmatprep.subr.bf16.mxu0 0
          %2001 = vmatpush1.bf16.msra.mxu0 %v1950
          %2002 = vmatprep.subr.bf16.mxu0 0
          %2003 = vmatpush1.bf16.msra.mxu0 %v1951
          %2004 = vmatprep.subr.bf16.mxu0 0
          %2005 = vmatpush1.bf16.msra.mxu0 %v1952
          %2006 = vmatprep.subr.bf16.mxu0 0
          %2007 = vmatpush1.bf16.msra.mxu0 %v1953
          %2008 = vmatprep.subr.bf16.mxu0 0
          %2009 = vmatpush1.bf16.msra.mxu0 %v1954
          %2010 = vmatprep.subr.bf16.mxu0 0
          %2011 = vmatpush1.bf16.msra.mxu0 %v1955
          %2012 = vmatprep.subr.bf16.mxu0 0
          %2013 = vmatpush1.bf16.msra.mxu0 %v1956
          %2014 = vmatprep.subr.bf16.mxu0 0
          %2015 = vmatpush1.bf16.msra.mxu0 %v1957
          %2016 = vmatprep.subr.bf16.mxu0 0
          %2017 = vmatpush1.bf16.msra.mxu0 %v1958
          %2018 = vmatprep.subr.bf16.mxu0 0
          %2019 = vmatpush1.bf16.msra.mxu0 %v1959
          %2020 = vmatprep.subr.bf16.mxu0 0
          %2021 = vmatpush1.bf16.msra.mxu0 %v1960
          %2022 = vmatprep.subr.bf16.mxu0 0
          %2023 = vmatpush1.bf16.msra.mxu0 %v1961
          %2024 = vmatprep.subr.bf16.mxu0 0
          %2025 = vmatpush1.bf16.msra.mxu0 %v1962
          %2026 = vmatprep.subr.bf16.mxu0 0
          %2027 = vmatpush1.bf16.msra.mxu0 %v1963
          %2028 = vmatprep.mubr.bf16.mxu0 %v1805
          %2029 = vmatmul.mubr.bf16.gmra.mrb[0].mxu0 %v1804
          %v2030 = vpop.f32.mrb[0].mxu0
          %v2031 = vadd.f32 %v1662, %v2030
          %v2032 = vpop.f32.mrb[0].mxu0
          %v2033 = vpop.f32.mrb[0].mxu0
          %v2034 = vadd.f32 %v1665, %v2033
          %v2035 = vpop.f32.mrb[0].mxu0
          %2036 = vmatprep.mubr.bf16.mxu0 %v1808
          %2037 = vmatmul.mubr.bf16.gmra.mrb[0].mxu0 %v1807
          %v2038 = vpop.f32.mrb[0].mxu0
          %v2039 = vadd.f32 %v1670, %v2038
          %v2040 = vpop.f32.mrb[0].mxu0
          %v2041 = vpop.f32.mrb[0].mxu0
          %v2042 = vadd.f32 %v1673, %v2041
          %v2043 = vpop.f32.mrb[0].mxu0
          %2044 = vmatprep.mubr.bf16.mxu0 %v1811
          %2045 = vmatmul.mubr.bf16.gmra.mrb[0].mxu0 %v1810
          %v2046 = vpop.f32.mrb[0].mxu0
          %v2047 = vadd.f32 %v1678, %v2046
          %v2048 = vpop.f32.mrb[0].mxu0
          %v2049 = vpop.f32.mrb[0].mxu0
          %v2050 = vadd.f32 %v1681, %v2049
          %v2051 = vpop.f32.mrb[0].mxu0
          %2052 = vmatprep.mubr.bf16.mxu0 %v1814
          %2053 = vmatmul.mubr.bf16.gmra.mrb[0].mxu0 %v1813
          %v2054 = vpop.f32.mrb[0].mxu0
          %v2055 = vadd.f32 %v1686, %v2054
          %v2056 = vpop.f32.mrb[0].mxu0
          %v2057 = vpop.f32.mrb[0].mxu0
          %v2058 = vadd.f32 %v1689, %v2057
          %v2059 = vpop.f32.mrb[0].mxu0
          %2060 = vmatprep.mubr.bf16.mxu0 %v1817
          %2061 = vmatmul.mubr.bf16.gmra.mrb[0].mxu0 %v1816
          %v2062 = vpop.f32.mrb[0].mxu0
          %v2063 = vadd.f32 %v1694, %v2062
          %v2064 = vpop.f32.mrb[0].mxu0
          %v2065 = vpop.f32.mrb[0].mxu0
          %v2066 = vadd.f32 %v1697, %v2065
          %v2067 = vpop.f32.mrb[0].mxu0
          %2068 = vmatprep.mubr.bf16.mxu0 %v1820
          %2069 = vmatmul.mubr.bf16.gmra.mrb[0].mxu0 %v1819
          %v2070 = vpop.f32.mrb[0].mxu0
          %v2071 = vadd.f32 %v1702, %v2070
          %v2072 = vpop.f32.mrb[0].mxu0
          %v2073 = vpop.f32.mrb[0].mxu0
          %v2074 = vadd.f32 %v1705, %v2073
          %v2075 = vpop.f32.mrb[0].mxu0
          %2076 = vmatprep.mubr.bf16.mxu0 %v1823
          %2077 = vmatmul.mubr.bf16.gmra.mrb[0].mxu0 %v1822
          %v2078 = vpop.f32.mrb[0].mxu0
          %v2079 = vadd.f32 %v1710, %v2078
          %v2080 = vpop.f32.mrb[0].mxu0
          %v2081 = vpop.f32.mrb[0].mxu0
          %v2082 = vadd.f32 %v1713, %v2081
          %v2083 = vpop.f32.mrb[0].mxu0
          %2084 = vmatprep.mubr.bf16.mxu0 %v1826
          %2085 = vmatmul.mubr.bf16.gmra.mrb[0].mxu0 %v1825
          %v2086 = vpop.f32.mrb[0].mxu0
          %v2087 = vadd.f32 %v1718, %v2086
          %v2088 = vpop.f32.mrb[0].mxu0
          %v2089 = vpop.f32.mrb[0].mxu0
          %v2090 = vadd.f32 %v1721, %v2089
          %v2091 = vpop.f32.mrb[0].mxu0
          %2092 = vdwg.mxu0
          %2093 = vmatprep.subr.bf16.mxu0 0
          %2094 = vmatpush1.bf16.msra.mxu0 %v1964
          %2095 = vmatprep.subr.bf16.mxu0 0
          %2096 = vmatpush1.bf16.msra.mxu0 %v1965
          %2097 = vmatprep.subr.bf16.mxu0 0
          %2098 = vmatpush1.bf16.msra.mxu0 %v1966
          %2099 = vmatprep.subr.bf16.mxu0 0
          %2100 = vmatpush1.bf16.msra.mxu0 %v1967
          %2101 = vmatprep.subr.bf16.mxu0 0
          %2102 = vmatpush1.bf16.msra.mxu0 %v1968
          %2103 = vmatprep.subr.bf16.mxu0 0
          %2104 = vmatpush1.bf16.msra.mxu0 %v1969
          %2105 = vmatprep.subr.bf16.mxu0 0
          %2106 = vmatpush1.bf16.msra.mxu0 %v1970
          %2107 = vmatprep.subr.bf16.mxu0 0
          %2108 = vmatpush1.bf16.msra.mxu0 %v1971
          %2109 = vmatprep.subr.bf16.mxu0 0
          %2110 = vmatpush1.bf16.msra.mxu0 0
          %2111 = vmatprep.subr.bf16.mxu0 0
          %2112 = vmatpush1.bf16.msra.mxu0 0
          %2113 = vmatprep.subr.bf16.mxu0 0
          %2114 = vmatpush1.bf16.msra.mxu0 0
          %2115 = vmatprep.subr.bf16.mxu0 0
          %2116 = vmatpush1.bf16.msra.mxu0 0
          %2117 = vmatprep.subr.bf16.mxu0 0
          %2118 = vmatpush1.bf16.msra.mxu0 0
          %2119 = vmatprep.subr.bf16.mxu0 0
          %2120 = vmatpush1.bf16.msra.mxu0 0
          %2121 = vmatprep.subr.bf16.mxu0 0
          %2122 = vmatpush1.bf16.msra.mxu0 0
          %2123 = vmatprep.subr.bf16.mxu0 0
          %2124 = vmatpush1.bf16.msra.mxu0 0
          %2125 = vmatprep.mubr.bf16.mxu0 0
          %2126 = vmatmul.mubr.bf16.gmra.mrb[0].mxu0 %v1806
          %v2127 = vpop.f32.mrb[0].mxu0
          %v2128 = vadd.f32 %v2031, %v2127
          %v2129 = vpop.f32.mrb[0].mxu0
          %v2130 = vpop.f32.mrb[0].mxu0
          %v2131 = vadd.f32 %v2034, %v2130
          %v2132 = vpop.f32.mrb[0].mxu0
          %2133 = vmatprep.mubr.bf16.mxu0 0
          %2134 = vmatmul.mubr.bf16.gmra.mrb[0].mxu0 %v1809
          %v2135 = vpop.f32.mrb[0].mxu0
          %v2136 = vadd.f32 %v2039, %v2135
          %v2137 = vpop.f32.mrb[0].mxu0
          %v2138 = vpop.f32.mrb[0].mxu0
          %v2139 = vadd.f32 %v2042, %v2138
          %v2140 = vpop.f32.mrb[0].mxu0
          %2141 = vmatprep.mubr.bf16.mxu0 0
          %2142 = vmatmul.mubr.bf16.gmra.mrb[0].mxu0 %v1812
          %v2143 = vpop.f32.mrb[0].mxu0
          %v2144 = vadd.f32 %v2047, %v2143
          %v2145 = vpop.f32.mrb[0].mxu0
          %v2146 = vpop.f32.mrb[0].mxu0
          %v2147 = vadd.f32 %v2050, %v2146
          %v2148 = vpop.f32.mrb[0].mxu0
          %2149 = vmatprep.mubr.bf16.mxu0 0
          %2150 = vmatmul.mubr.bf16.gmra.mrb[0].mxu0 %v1815
          %v2151 = vpop.f32.mrb[0].mxu0
          %v2152 = vadd.f32 %v2055, %v2151
          %v2153 = vpop.f32.mrb[0].mxu0
          %v2154 = vpop.f32.mrb[0].mxu0
          %v2155 = vadd.f32 %v2058, %v2154
          %v2156 = vpop.f32.mrb[0].mxu0
          %2157 = vmatprep.mubr.bf16.mxu0 0
          %2158 = vmatmul.mubr.bf16.gmra.mrb[0].mxu0 %v1818
          %v2159 = vpop.f32.mrb[0].mxu0
          %v2160 = vadd.f32 %v2063, %v2159
          %v2161 = vpop.f32.mrb[0].mxu0
          %v2162 = vpop.f32.mrb[0].mxu0
          %v2163 = vadd.f32 %v2066, %v2162
          %v2164 = vpop.f32.mrb[0].mxu0
          %2165 = vmatprep.mubr.bf16.mxu0 0
          %2166 = vmatmul.mubr.bf16.gmra.mrb[0].mxu0 %v1821
          %v2167 = vpop.f32.mrb[0].mxu0
          %v2168 = vadd.f32 %v2071, %v2167
          %v2169 = vpop.f32.mrb[0].mxu0
          %v2170 = vpop.f32.mrb[0].mxu0
          %v2171 = vadd.f32 %v2074, %v2170
          %v2172 = vpop.f32.mrb[0].mxu0
          %2173 = vmatprep.mubr.bf16.mxu0 0
          %2174 = vmatmul.mubr.bf16.gmra.mrb[0].mxu0 %v1824
          %v2175 = vpop.f32.mrb[0].mxu0
          %v2176 = vadd.f32 %v2079, %v2175
          %v2177 = vpop.f32.mrb[0].mxu0
          %v2178 = vpop.f32.mrb[0].mxu0
          %v2179 = vadd.f32 %v2082, %v2178
          %v2180 = vpop.f32.mrb[0].mxu0
          %2181 = vmatprep.mubr.bf16.mxu0 0
          %2182 = vmatmul.mubr.bf16.gmra.mrb[0].mxu0 %v1827
          %v2183 = vpop.f32.mrb[0].mxu0
          %v2184 = vadd.f32 %v2087, %v2183
          %v2185 = vpop.f32.mrb[0].mxu0
          %v2186 = vpop.f32.mrb[0].mxu0
          %v2187 = vadd.f32 %v2090, %v2186
          %v2188 = vpop.f32.mrb[0].mxu0
          %2189 = vdwg.mxu0
          %s2190 = sadd.s32 6, %s1086
          %s2191 = smul.addr %s2190, 4
          %s2192 = scalar_lea.vmem [#allocation2], %s2191
          %v2193 = vld [vmem:[%s2192] sm:$0xff]
          %v2194 = vld [vmem:[%s2192 + $0x8] sm:$0xf]
          %v2195 = vld [vmem:[%s2192 + $0xc] sm:$0xff]
          %v2196 = vld [vmem:[%s2192 + $0x14] sm:$0xf]
          %v2197 = vld [vmem:[%s2192 + $0x18] sm:$0xff]
          %v2198 = vld [vmem:[%s2192 + $0x20] sm:$0xf]
          %v2199 = vld [vmem:[%s2192 + $0x24] sm:$0xff]
          %v2200 = vld [vmem:[%s2192 + $0x2c] sm:$0xf]
          %v2201 = vld [vmem:[%s2192 + $0x30] sm:$0xff]
          %v2202 = vld [vmem:[%s2192 + $0x38] sm:$0xf]
          %v2203 = vld [vmem:[%s2192 + $0x3c] sm:$0xff]
          %v2204 = vld [vmem:[%s2192 + $0x44] sm:$0xf]
          %v2205 = vld [vmem:[%s2192 + $0x48] sm:$0xff]
          %v2206 = vld [vmem:[%s2192 + $0x50] sm:$0xf]
          %v2207 = vld [vmem:[%s2192 + $0x54] sm:$0xff]
          %v2208 = vld [vmem:[%s2192 + $0x5c] sm:$0xf]
          %v2209 = vld [vmem:[%s2192 + $0x78] sm:$0xff]
          %v2210 = vld [vmem:[%s2192 + $0x80] sm:$0xf]
          %v2211 = vld [vmem:[%s2192 + $0x84] sm:$0xff]
          %v2212 = vld [vmem:[%s2192 + $0x8c] sm:$0xf]
          %v2213 = vld [vmem:[%s2192 + $0x90] sm:$0xff]
          %v2214 = vld [vmem:[%s2192 + $0x98] sm:$0xf]
          %v2215 = vld [vmem:[%s2192 + $0x9c] sm:$0xff]
          %v2216 = vld [vmem:[%s2192 + $0xa4] sm:$0xf]
          %v2217 = vld [vmem:[%s2192 + $0xa8] sm:$0xff]
          %v2218 = vld [vmem:[%s2192 + $0xb0] sm:$0xf]
          %v2219 = vld [vmem:[%s2192 + $0xb4] sm:$0xff]
          %v2220 = vld [vmem:[%s2192 + $0xbc] sm:$0xf]
          %v2221 = vld [vmem:[%s2192 + $0xc0] sm:$0xff]
          %v2222 = vld [vmem:[%s2192 + $0xc8] sm:$0xf]
          %v2223 = vld [vmem:[%s2192 + $0xcc] sm:$0xff]
          %v2224 = vld [vmem:[%s2192 + $0xd4] sm:$0xf]
          %s2225 = sadd.s32 96, %s1121
          %s2226 = smul.addr %s2225, 4
          %s2227 = scalar_lea.vmem [#allocation4], %s2226
          %v2228 = vld [vmem:[%s2227] sm:$0xf]
          %v2229 = vld [vmem:[%s2227 + $0x4] sm:$0xf]
          %v2230 = vld [vmem:[%s2227 + $0x8] sm:$0xf]
          %v2231 = vld [vmem:[%s2227 + $0xc] sm:$0xf]
          %v2232 = vld [vmem:[%s2227 + $0x10] sm:$0xf]
          %v2233 = vld [vmem:[%s2227 + $0x14] sm:$0xf]
          %v2234 = vld [vmem:[%s2227 + $0x18] sm:$0xf]
          %v2235 = vld [vmem:[%s2227 + $0x1c] sm:$0xf]
          %v2236 = vld [vmem:[%s2227 + $0x20] sm:$0xf]
          %v2237 = vld [vmem:[%s2227 + $0x24] sm:$0xf]
          %v2238 = vld [vmem:[%s2227 + $0x28] sm:$0xf]
          %v2239 = vld [vmem:[%s2227 + $0x2c] sm:$0xf]
          %v2240 = vld [vmem:[%s2227 + $0x30] sm:$0xf]
          %v2241 = vld [vmem:[%s2227 + $0x34] sm:$0xf]
          %v2242 = vld [vmem:[%s2227 + $0x38] sm:$0xf]
          %v2243 = vld [vmem:[%s2227 + $0x3c] sm:$0xf]
          %v2244 = vld [vmem:[%s2227 + $0x40] sm:$0xf]
          %v2245 = vld [vmem:[%s2227 + $0x44] sm:$0xf]
          %v2246 = vld [vmem:[%s2227 + $0x48] sm:$0xf]
          %v2247 = vld [vmem:[%s2227 + $0x4c] sm:$0xf]
          %v2248 = vld [vmem:[%s2227 + $0x50] sm:$0xf]
          %v2249 = vld [vmem:[%s2227 + $0x54] sm:$0xf]
          %v2250 = vld [vmem:[%s2227 + $0x58] sm:$0xf]
          %v2251 = vld [vmem:[%s2227 + $0x5c] sm:$0xf]
          %v2252 = vld [vmem:[%s2227 + $0x60] sm:$0xf]
          %v2253 = vld [vmem:[%s2227 + $0x64] sm:$0xf]
          %v2254 = vld [vmem:[%s2227 + $0x68] sm:$0xf]
          %v2255 = vld [vmem:[%s2227 + $0x6c] sm:$0xf]
          %v2256 = vld [vmem:[%s2227 + $0x70] sm:$0xf]
          %v2257 = vld [vmem:[%s2227 + $0x74] sm:$0xf]
          %v2258 = vld [vmem:[%s2227 + $0x78] sm:$0xf]
          %v2259 = vld [vmem:[%s2227 + $0x7c] sm:$0xf]
          %v2260 = vld [vmem:[%s2227 + $0x80] sm:$0xf]
          %v2261 = vld [vmem:[%s2227 + $0x84] sm:$0xf]
          %v2262 = vld [vmem:[%s2227 + $0x88] sm:$0xf]
          %v2263 = vld [vmem:[%s2227 + $0x8c] sm:$0xf]
          %v2264 = vld [vmem:[%s2227 + $0x90] sm:$0xf]
          %v2265 = vld [vmem:[%s2227 + $0x94] sm:$0xf]
          %v2266 = vld [vmem:[%s2227 + $0x98] sm:$0xf]
          %v2267 = vld [vmem:[%s2227 + $0x9c] sm:$0xf]
          %v2268 = vld [vmem:[%s2227 + $0xa0] sm:$0xf]
          %v2269 = vld [vmem:[%s2227 + $0xa4] sm:$0xf]
          %v2270 = vld [vmem:[%s2227 + $0xa8] sm:$0xf]
          %v2271 = vld [vmem:[%s2227 + $0xac] sm:$0xf]
          %v2272 = vld [vmem:[%s2227 + $0xb0] sm:$0xf]
          %v2273 = vld [vmem:[%s2227 + $0xb4] sm:$0xf]
          %v2274 = vld [vmem:[%s2227 + $0xb8] sm:$0xf]
          %v2275 = vld [vmem:[%s2227 + $0xbc] sm:$0xf]
          %v2308 = vunpack.c.l.b16 %v2193
          %v2309 = vunpack.c.h.b16 %v2193
          %v2310 = vunpack.c.l.b16 %v2194
          %v2311 = vunpack.c.l.b16 %v2195
          %v2312 = vunpack.c.h.b16 %v2195
          %v2313 = vunpack.c.l.b16 %v2196
          %v2314 = vunpack.c.l.b16 %v2197
          %v2315 = vunpack.c.h.b16 %v2197
          %v2316 = vunpack.c.l.b16 %v2198
          %v2317 = vunpack.c.l.b16 %v2199
          %v2318 = vunpack.c.h.b16 %v2199
          %v2319 = vunpack.c.l.b16 %v2200
          %v2320 = vunpack.c.l.b16 %v2201
          %v2321 = vunpack.c.h.b16 %v2201
          %v2322 = vunpack.c.l.b16 %v2202
          %v2323 = vunpack.c.l.b16 %v2203
          %v2324 = vunpack.c.h.b16 %v2203
          %v2325 = vunpack.c.l.b16 %v2204
          %v2326 = vunpack.c.l.b16 %v2205
          %v2327 = vunpack.c.h.b16 %v2205
          %v2328 = vunpack.c.l.b16 %v2206
          %v2329 = vunpack.c.l.b16 %v2207
          %v2330 = vunpack.c.h.b16 %v2207
          %v2331 = vunpack.c.l.b16 %v2208
          %v2332 = vunpack.c.l.b16 %v2209
          %v2333 = vunpack.c.h.b16 %v2209
          %v2334 = vunpack.c.l.b16 %v2210
          %v2335 = vunpack.c.l.b16 %v2211
          %v2336 = vunpack.c.h.b16 %v2211
          %v2337 = vunpack.c.l.b16 %v2212
          %v2338 = vunpack.c.l.b16 %v2213
          %v2339 = vunpack.c.h.b16 %v2213
          %v2340 = vunpack.c.l.b16 %v2214
          %v2341 = vunpack.c.l.b16 %v2215
          %v2342 = vunpack.c.h.b16 %v2215
          %v2343 = vunpack.c.l.b16 %v2216
          %v2344 = vunpack.c.l.b16 %v2217
          %v2345 = vunpack.c.h.b16 %v2217
          %v2346 = vunpack.c.l.b16 %v2218
          %v2347 = vunpack.c.l.b16 %v2219
          %v2348 = vunpack.c.h.b16 %v2219
          %v2349 = vunpack.c.l.b16 %v2220
          %v2350 = vunpack.c.l.b16 %v2221
          %v2351 = vunpack.c.h.b16 %v2221
          %v2352 = vunpack.c.l.b16 %v2222
          %v2353 = vunpack.c.l.b16 %v2223
          %v2354 = vunpack.c.h.b16 %v2223
          %v2355 = vunpack.c.l.b16 %v2224
          %v2356 = vpack.c.b16 %v2311, %v2308
          %v2357 = vpack.c.b16 %v2312, %v2309
          %v2358 = vpack.c.b16 %v2313, %v2310
          %v2359 = vpack.c.b16 %v2317, %v2314
          %v2360 = vpack.c.b16 %v2318, %v2315
          %v2361 = vpack.c.b16 %v2319, %v2316
          %v2362 = vpack.c.b16 %v2323, %v2320
          %v2363 = vpack.c.b16 %v2324, %v2321
          %v2364 = vpack.c.b16 %v2325, %v2322
          %v2365 = vpack.c.b16 %v2329, %v2326
          %v2366 = vpack.c.b16 %v2330, %v2327
          %v2367 = vpack.c.b16 %v2331, %v2328
          %v2368 = vpack.c.b16 %v2335, %v2332
          %v2369 = vpack.c.b16 %v2336, %v2333
          %v2370 = vpack.c.b16 %v2337, %v2334
          %v2371 = vpack.c.b16 %v2341, %v2338
          %v2372 = vpack.c.b16 %v2342, %v2339
          %v2373 = vpack.c.b16 %v2343, %v2340
          %v2374 = vpack.c.b16 %v2347, %v2344
          %v2375 = vpack.c.b16 %v2348, %v2345
          %v2376 = vpack.c.b16 %v2349, %v2346
          %v2377 = vpack.c.b16 %v2353, %v2350
          %v2378 = vpack.c.b16 %v2354, %v2351
          %v2379 = vpack.c.b16 %v2355, %v2352
          %v2452 = vunpack.c.l.b16 %v2228
          %v2453 = vunpack.c.l.b16 %v2229
          %v2454 = vunpack.c.l.b16 %v2230
          %v2455 = vunpack.c.l.b16 %v2231
          %v2456 = vunpack.c.l.b16 %v2232
          %v2457 = vunpack.c.l.b16 %v2233
          %v2458 = vunpack.c.l.b16 %v2234
          %v2459 = vunpack.c.l.b16 %v2235
          %v2460 = vunpack.c.l.b16 %v2236
          %v2461 = vunpack.c.l.b16 %v2237
          %v2462 = vunpack.c.l.b16 %v2238
          %v2463 = vunpack.c.l.b16 %v2239
          %v2464 = vunpack.c.l.b16 %v2240
          %v2465 = vunpack.c.l.b16 %v2241
          %v2466 = vunpack.c.l.b16 %v2242
          %v2467 = vunpack.c.l.b16 %v2243
          %v2468 = vunpack.c.l.b16 %v2244
          %v2469 = vunpack.c.l.b16 %v2245
          %v2470 = vunpack.c.l.b16 %v2246
          %v2471 = vunpack.c.l.b16 %v2247
          %v2472 = vunpack.c.l.b16 %v2248
          %v2473 = vunpack.c.l.b16 %v2249
          %v2474 = vunpack.c.l.b16 %v2250
          %v2475 = vunpack.c.l.b16 %v2251
          %v2476 = vunpack.c.l.b16 %v2252
          %v2477 = vunpack.c.l.b16 %v2253
          %v2478 = vunpack.c.l.b16 %v2254
          %v2479 = vunpack.c.l.b16 %v2255
          %v2480 = vunpack.c.l.b16 %v2256
          %v2481 = vunpack.c.l.b16 %v2257
          %v2482 = vunpack.c.l.b16 %v2258
          %v2483 = vunpack.c.l.b16 %v2259
          %v2484 = vunpack.c.l.b16 %v2260
          %v2485 = vunpack.c.l.b16 %v2261
          %v2486 = vunpack.c.l.b16 %v2262
          %v2487 = vunpack.c.l.b16 %v2263
          %v2488 = vunpack.c.l.b16 %v2264
          %v2489 = vunpack.c.l.b16 %v2265
          %v2490 = vunpack.c.l.b16 %v2266
          %v2491 = vunpack.c.l.b16 %v2267
          %v2492 = vunpack.c.l.b16 %v2268
          %v2493 = vunpack.c.l.b16 %v2269
          %v2494 = vunpack.c.l.b16 %v2270
          %v2495 = vunpack.c.l.b16 %v2271
          %v2496 = vunpack.c.l.b16 %v2272
          %v2497 = vunpack.c.l.b16 %v2273
          %v2498 = vunpack.c.l.b16 %v2274
          %v2499 = vunpack.c.l.b16 %v2275
          %v2500 = vpack.c.b16 %v2453, %v2452
          %v2501 = vpack.c.b16 %v2455, %v2454
          %v2502 = vpack.c.b16 %v2457, %v2456
          %v2503 = vpack.c.b16 %v2459, %v2458
          %v2504 = vpack.c.b16 %v2461, %v2460
          %v2505 = vpack.c.b16 %v2463, %v2462
          %v2506 = vpack.c.b16 %v2465, %v2464
          %v2507 = vpack.c.b16 %v2467, %v2466
          %v2508 = vpack.c.b16 %v2469, %v2468
          %v2509 = vpack.c.b16 %v2471, %v2470
          %v2510 = vpack.c.b16 %v2473, %v2472
          %v2511 = vpack.c.b16 %v2475, %v2474
          %v2512 = vpack.c.b16 %v2477, %v2476
          %v2513 = vpack.c.b16 %v2479, %v2478
          %v2514 = vpack.c.b16 %v2481, %v2480
          %v2515 = vpack.c.b16 %v2483, %v2482
          %v2516 = vpack.c.b16 %v2485, %v2484
          %v2517 = vpack.c.b16 %v2487, %v2486
          %v2518 = vpack.c.b16 %v2489, %v2488
          %v2519 = vpack.c.b16 %v2491, %v2490
          %v2520 = vpack.c.b16 %v2493, %v2492
          %v2521 = vpack.c.b16 %v2495, %v2494
          %v2522 = vpack.c.b16 %v2497, %v2496
          %v2523 = vpack.c.b16 %v2499, %v2498
          %2548 = vmatprep.subr.bf16.mxu0 0
          %2549 = vmatpush1.bf16.msra.mxu0 %v2500
          %2550 = vmatprep.subr.bf16.mxu0 0
          %2551 = vmatpush1.bf16.msra.mxu0 %v2501
          %2552 = vmatprep.subr.bf16.mxu0 0
          %2553 = vmatpush1.bf16.msra.mxu0 %v2502
          %2554 = vmatprep.subr.bf16.mxu0 0
          %2555 = vmatpush1.bf16.msra.mxu0 %v2503
          %2556 = vmatprep.subr.bf16.mxu0 0
          %2557 = vmatpush1.bf16.msra.mxu0 %v2504
          %2558 = vmatprep.subr.bf16.mxu0 0
          %2559 = vmatpush1.bf16.msra.mxu0 %v2505
          %2560 = vmatprep.subr.bf16.mxu0 0
          %2561 = vmatpush1.bf16.msra.mxu0 %v2506
          %2562 = vmatprep.subr.bf16.mxu0 0
          %2563 = vmatpush1.bf16.msra.mxu0 %v2507
          %2564 = vmatprep.subr.bf16.mxu0 0
          %2565 = vmatpush1.bf16.msra.mxu0 %v2508
          %2566 = vmatprep.subr.bf16.mxu0 0
          %2567 = vmatpush1.bf16.msra.mxu0 %v2509
          %2568 = vmatprep.subr.bf16.mxu0 0
          %2569 = vmatpush1.bf16.msra.mxu0 %v2510
          %2570 = vmatprep.subr.bf16.mxu0 0
          %2571 = vmatpush1.bf16.msra.mxu0 %v2511
          %2572 = vmatprep.subr.bf16.mxu0 0
          %2573 = vmatpush1.bf16.msra.mxu0 %v2512
          %2574 = vmatprep.subr.bf16.mxu0 0
          %2575 = vmatpush1.bf16.msra.mxu0 %v2513
          %2576 = vmatprep.subr.bf16.mxu0 0
          %2577 = vmatpush1.bf16.msra.mxu0 %v2514
          %2578 = vmatprep.subr.bf16.mxu0 0
          %2579 = vmatpush1.bf16.msra.mxu0 %v2515
          %2580 = vmatprep.mubr.bf16.mxu0 %v2357
          %2581 = vmatmul.mubr.bf16.gmra.mrb[0].mxu0 %v2356
          %v2582 = vpop.f32.mrb[0].mxu0
          %v2583 = vadd.f32 0.0, %v2582
          %v2584 = vpop.f32.mrb[0].mxu0
          %v2585 = vpop.f32.mrb[0].mxu0
          %v2586 = vadd.f32 0.0, %v2585
          %v2587 = vpop.f32.mrb[0].mxu0
          %2588 = vmatprep.mubr.bf16.mxu0 %v2360
          %2589 = vmatmul.mubr.bf16.gmra.mrb[0].mxu0 %v2359
          %v2590 = vpop.f32.mrb[0].mxu0
          %v2591 = vadd.f32 0.0, %v2590
          %v2592 = vpop.f32.mrb[0].mxu0
          %v2593 = vpop.f32.mrb[0].mxu0
          %v2594 = vadd.f32 0.0, %v2593
          %v2595 = vpop.f32.mrb[0].mxu0
          %2596 = vmatprep.mubr.bf16.mxu0 %v2363
          %2597 = vmatmul.mubr.bf16.gmra.mrb[0].mxu0 %v2362
          %v2598 = vpop.f32.mrb[0].mxu0
          %v2599 = vadd.f32 0.0, %v2598
          %v2600 = vpop.f32.mrb[0].mxu0
          %v2601 = vpop.f32.mrb[0].mxu0
          %v2602 = vadd.f32 0.0, %v2601
          %v2603 = vpop.f32.mrb[0].mxu0
          %2604 = vmatprep.mubr.bf16.mxu0 %v2366
          %2605 = vmatmul.mubr.bf16.gmra.mrb[0].mxu0 %v2365
          %v2606 = vpop.f32.mrb[0].mxu0
          %v2607 = vadd.f32 0.0, %v2606
          %v2608 = vpop.f32.mrb[0].mxu0
          %v2609 = vpop.f32.mrb[0].mxu0
          %v2610 = vadd.f32 0.0, %v2609
          %v2611 = vpop.f32.mrb[0].mxu0
          %2612 = vmatprep.mubr.bf16.mxu0 %v2369
          %2613 = vmatmul.mubr.bf16.gmra.mrb[0].mxu0 %v2368
          %v2614 = vpop.f32.mrb[0].mxu0
          %v2615 = vadd.f32 0.0, %v2614
          %v2616 = vpop.f32.mrb[0].mxu0
          %v2617 = vpop.f32.mrb[0].mxu0
          %v2618 = vadd.f32 0.0, %v2617
          %v2619 = vpop.f32.mrb[0].mxu0
          %2620 = vmatprep.mubr.bf16.mxu0 %v2372
          %2621 = vmatmul.mubr.bf16.gmra.mrb[0].mxu0 %v2371
          %v2622 = vpop.f32.mrb[0].mxu0
          %v2623 = vadd.f32 0.0, %v2622
          %v2624 = vpop.f32.mrb[0].mxu0
          %v2625 = vpop.f32.mrb[0].mxu0
          %v2626 = vadd.f32 0.0, %v2625
          %v2627 = vpop.f32.mrb[0].mxu0
          %2628 = vmatprep.mubr.bf16.mxu0 %v2375
          %2629 = vmatmul.mubr.bf16.gmra.mrb[0].mxu0 %v2374
          %v2630 = vpop.f32.mrb[0].mxu0
          %v2631 = vadd.f32 0.0, %v2630
          %v2632 = vpop.f32.mrb[0].mxu0
          %v2633 = vpop.f32.mrb[0].mxu0
          %v2634 = vadd.f32 0.0, %v2633
          %v2635 = vpop.f32.mrb[0].mxu0
          %2636 = vmatprep.mubr.bf16.mxu0 %v2378
          %2637 = vmatmul.mubr.bf16.gmra.mrb[0].mxu0 %v2377
          %v2638 = vpop.f32.mrb[0].mxu0
          %v2639 = vadd.f32 0.0, %v2638
          %v2640 = vpop.f32.mrb[0].mxu0
          %v2641 = vpop.f32.mrb[0].mxu0
          %v2642 = vadd.f32 0.0, %v2641
          %v2643 = vpop.f32.mrb[0].mxu0
          %2644 = vdwg.mxu0
          %2645 = vmatprep.subr.bf16.mxu0 0
          %2646 = vmatpush1.bf16.msra.mxu0 %v2516
          %2647 = vmatprep.subr.bf16.mxu0 0
          %2648 = vmatpush1.bf16.msra.mxu0 %v2517
          %2649 = vmatprep.subr.bf16.mxu0 0
          %2650 = vmatpush1.bf16.msra.mxu0 %v2518
          %2651 = vmatprep.subr.bf16.mxu0 0
          %2652 = vmatpush1.bf16.msra.mxu0 %v2519
          %2653 = vmatprep.subr.bf16.mxu0 0
          %2654 = vmatpush1.bf16.msra.mxu0 %v2520
          %2655 = vmatprep.subr.bf16.mxu0 0
          %2656 = vmatpush1.bf16.msra.mxu0 %v2521
          %2657 = vmatprep.subr.bf16.mxu0 0
          %2658 = vmatpush1.bf16.msra.mxu0 %v2522
          %2659 = vmatprep.subr.bf16.mxu0 0
          %2660 = vmatpush1.bf16.msra.mxu0 %v2523
          %2661 = vmatprep.subr.bf16.mxu0 0
          %2662 = vmatpush1.bf16.msra.mxu0 0
          %2663 = vmatprep.subr.bf16.mxu0 0
          %2664 = vmatpush1.bf16.msra.mxu0 0
          %2665 = vmatprep.subr.bf16.mxu0 0
          %2666 = vmatpush1.bf16.msra.mxu0 0
          %2667 = vmatprep.subr.bf16.mxu0 0
          %2668 = vmatpush1.bf16.msra.mxu0 0
          %2669 = vmatprep.subr.bf16.mxu0 0
          %2670 = vmatpush1.bf16.msra.mxu0 0
          %2671 = vmatprep.subr.bf16.mxu0 0
          %2672 = vmatpush1.bf16.msra.mxu0 0
          %2673 = vmatprep.subr.bf16.mxu0 0
          %2674 = vmatpush1.bf16.msra.mxu0 0
          %2675 = vmatprep.subr.bf16.mxu0 0
          %2676 = vmatpush1.bf16.msra.mxu0 0
          %2677 = vmatprep.mubr.bf16.mxu0 0
          %2678 = vmatmul.mubr.bf16.gmra.mrb[0].mxu0 %v2358
          %v2679 = vpop.f32.mrb[0].mxu0
          %v2680 = vadd.f32 %v2583, %v2679
          %v2681 = vpop.f32.mrb[0].mxu0
          %v2682 = vpop.f32.mrb[0].mxu0
          %v2683 = vadd.f32 %v2586, %v2682
          %v2684 = vpop.f32.mrb[0].mxu0
          %2685 = vmatprep.mubr.bf16.mxu0 0
          %2686 = vmatmul.mubr.bf16.gmra.mrb[0].mxu0 %v2361
          %v2687 = vpop.f32.mrb[0].mxu0
          %v2688 = vadd.f32 %v2591, %v2687
          %v2689 = vpop.f32.mrb[0].mxu0
          %v2690 = vpop.f32.mrb[0].mxu0
          %v2691 = vadd.f32 %v2594, %v2690
          %v2692 = vpop.f32.mrb[0].mxu0
          %2693 = vmatprep.mubr.bf16.mxu0 0
          %2694 = vmatmul.mubr.bf16.gmra.mrb[0].mxu0 %v2364
          %v2695 = vpop.f32.mrb[0].mxu0
          %v2696 = vadd.f32 %v2599, %v2695
          %v2697 = vpop.f32.mrb[0].mxu0
          %v2698 = vpop.f32.mrb[0].mxu0
          %v2699 = vadd.f32 %v2602, %v2698
          %v2700 = vpop.f32.mrb[0].mxu0
          %2701 = vmatprep.mubr.bf16.mxu0 0
          %2702 = vmatmul.mubr.bf16.gmra.mrb[0].mxu0 %v2367
          %v2703 = vpop.f32.mrb[0].mxu0
          %v2704 = vadd.f32 %v2607, %v2703
          %v2705 = vpop.f32.mrb[0].mxu0
          %v2706 = vpop.f32.mrb[0].mxu0
          %v2707 = vadd.f32 %v2610, %v2706
          %v2708 = vpop.f32.mrb[0].mxu0
          %2709 = vmatprep.mubr.bf16.mxu0 0
          %2710 = vmatmul.mubr.bf16.gmra.mrb[0].mxu0 %v2370
          %v2711 = vpop.f32.mrb[0].mxu0
          %v2712 = vadd.f32 %v2615, %v2711
          %v2713 = vpop.f32.mrb[0].mxu0
          %v2714 = vpop.f32.mrb[0].mxu0
          %v2715 = vadd.f32 %v2618, %v2714
          %v2716 = vpop.f32.mrb[0].mxu0
          %2717 = vmatprep.mubr.bf16.mxu0 0
          %2718 = vmatmul.mubr.bf16.gmra.mrb[0].mxu0 %v2373
          %v2719 = vpop.f32.mrb[0].mxu0
          %v2720 = vadd.f32 %v2623, %v2719
          %v2721 = vpop.f32.mrb[0].mxu0
          %v2722 = vpop.f32.mrb[0].mxu0
          %v2723 = vadd.f32 %v2626, %v2722
          %v2724 = vpop.f32.mrb[0].mxu0
          %2725 = vmatprep.mubr.bf16.mxu0 0
          %2726 = vmatmul.mubr.bf16.gmra.mrb[0].mxu0 %v2376
          %v2727 = vpop.f32.mrb[0].mxu0
          %v2728 = vadd.f32 %v2631, %v2727
          %v2729 = vpop.f32.mrb[0].mxu0
          %v2730 = vpop.f32.mrb[0].mxu0
          %v2731 = vadd.f32 %v2634, %v2730
          %v2732 = vpop.f32.mrb[0].mxu0
          %2733 = vmatprep.mubr.bf16.mxu0 0
          %2734 = vmatmul.mubr.bf16.gmra.mrb[0].mxu0 %v2379
          %v2735 = vpop.f32.mrb[0].mxu0
          %v2736 = vadd.f32 %v2639, %v2735
          %v2737 = vpop.f32.mrb[0].mxu0
          %v2738 = vpop.f32.mrb[0].mxu0
          %v2739 = vadd.f32 %v2642, %v2738
          %v2740 = vpop.f32.mrb[0].mxu0
          %2741 = vdwg.mxu0
          %v2742 = vadd.f32 %v2128, %v2680
          %v2743 = vadd.f32 %v2131, %v2683
          %v2744 = vadd.f32 %v2136, %v2688
          %v2745 = vadd.f32 %v2139, %v2691
          %v2746 = vadd.f32 %v2144, %v2696
          %v2747 = vadd.f32 %v2147, %v2699
          %v2748 = vadd.f32 %v2152, %v2704
          %v2749 = vadd.f32 %v2155, %v2707
          %v2750 = vadd.f32 %v2160, %v2712
          %v2751 = vadd.f32 %v2163, %v2715
          %v2752 = vadd.f32 %v2168, %v2720
          %v2753 = vadd.f32 %v2171, %v2723
          %v2754 = vadd.f32 %v2176, %v2728
          %v2755 = vadd.f32 %v2179, %v2731
          %v2756 = vadd.f32 %v2184, %v2736
          %v2757 = vadd.f32 %v2187, %v2739
          %s2758 = sadd.s32 %s1084, 1
          %s2759 = smul.u32 %s2758, 30
          %s2760 = smul.addr %s2759, 4
          %s2761 = scalar_lea.vmem [#allocation2], %s2760
          %v2762 = vld [vmem:[%s2761] sm:$0xff]
          %v2763 = vld [vmem:[%s2761 + $0x8] sm:$0xf]
          %v2764 = vld [vmem:[%s2761 + $0xc] sm:$0xff]
          %v2765 = vld [vmem:[%s2761 + $0x14] sm:$0xf]
          %v2766 = vld [vmem:[%s2761 + $0x18] sm:$0xff]
          %v2767 = vld [vmem:[%s2761 + $0x20] sm:$0xf]
          %v2768 = vld [vmem:[%s2761 + $0x24] sm:$0xff]
          %v2769 = vld [vmem:[%s2761 + $0x2c] sm:$0xf]
          %v2770 = vld [vmem:[%s2761 + $0x30] sm:$0xff]
          %v2771 = vld [vmem:[%s2761 + $0x38] sm:$0xf]
          %v2772 = vld [vmem:[%s2761 + $0x3c] sm:$0xff]
          %v2773 = vld [vmem:[%s2761 + $0x44] sm:$0xf]
          %v2774 = vld [vmem:[%s2761 + $0x48] sm:$0xff]
          %v2775 = vld [vmem:[%s2761 + $0x50] sm:$0xf]
          %v2776 = vld [vmem:[%s2761 + $0x54] sm:$0xff]
          %v2777 = vld [vmem:[%s2761 + $0x5c] sm:$0xf]
          %v2778 = vld [vmem:[%s2761 + $0x78] sm:$0xff]
          %v2779 = vld [vmem:[%s2761 + $0x80] sm:$0xf]
          %v2780 = vld [vmem:[%s2761 + $0x84] sm:$0xff]
          %v2781 = vld [vmem:[%s2761 + $0x8c] sm:$0xf]
          %v2782 = vld [vmem:[%s2761 + $0x90] sm:$0xff]
          %v2783 = vld [vmem:[%s2761 + $0x98] sm:$0xf]
          %v2784 = vld [vmem:[%s2761 + $0x9c] sm:$0xff]
          %v2785 = vld [vmem:[%s2761 + $0xa4] sm:$0xf]
          %v2786 = vld [vmem:[%s2761 + $0xa8] sm:$0xff]
          %v2787 = vld [vmem:[%s2761 + $0xb0] sm:$0xf]
          %v2788 = vld [vmem:[%s2761 + $0xb4] sm:$0xff]
          %v2789 = vld [vmem:[%s2761 + $0xbc] sm:$0xf]
          %v2790 = vld [vmem:[%s2761 + $0xc0] sm:$0xff]
          %v2791 = vld [vmem:[%s2761 + $0xc8] sm:$0xf]
          %v2792 = vld [vmem:[%s2761 + $0xcc] sm:$0xff]
          %v2793 = vld [vmem:[%s2761 + $0xd4] sm:$0xf]
          %s2794 = sadd.s32 144, %s1121
          %s2795 = smul.addr %s2794, 4
          %s2796 = scalar_lea.vmem [#allocation4], %s2795
          %v2797 = vld [vmem:[%s2796] sm:$0xf]
          %v2798 = vld [vmem:[%s2796 + $0x4] sm:$0xf]
          %v2799 = vld [vmem:[%s2796 + $0x8] sm:$0xf]
          %v2800 = vld [vmem:[%s2796 + $0xc] sm:$0xf]
          %v2801 = vld [vmem:[%s2796 + $0x10] sm:$0xf]
          %v2802 = vld [vmem:[%s2796 + $0x14] sm:$0xf]
          %v2803 = vld [vmem:[%s2796 + $0x18] sm:$0xf]
          %v2804 = vld [vmem:[%s2796 + $0x1c] sm:$0xf]
          %v2805 = vld [vmem:[%s2796 + $0x20] sm:$0xf]
          %v2806 = vld [vmem:[%s2796 + $0x24] sm:$0xf]
          %v2807 = vld [vmem:[%s2796 + $0x28] sm:$0xf]
          %v2808 = vld [vmem:[%s2796 + $0x2c] sm:$0xf]
          %v2809 = vld [vmem:[%s2796 + $0x30] sm:$0xf]
          %v2810 = vld [vmem:[%s2796 + $0x34] sm:$0xf]
          %v2811 = vld [vmem:[%s2796 + $0x38] sm:$0xf]
          %v2812 = vld [vmem:[%s2796 + $0x3c] sm:$0xf]
          %v2813 = vld [vmem:[%s2796 + $0x40] sm:$0xf]
          %v2814 = vld [vmem:[%s2796 + $0x44] sm:$0xf]
          %v2815 = vld [vmem:[%s2796 + $0x48] sm:$0xf]
          %v2816 = vld [vmem:[%s2796 + $0x4c] sm:$0xf]
          %v2817 = vld [vmem:[%s2796 + $0x50] sm:$0xf]
          %v2818 = vld [vmem:[%s2796 + $0x54] sm:$0xf]
          %v2819 = vld [vmem:[%s2796 + $0x58] sm:$0xf]
          %v2820 = vld [vmem:[%s2796 + $0x5c] sm:$0xf]
          %v2821 = vld [vmem:[%s2796 + $0x60] sm:$0xf]
          %v2822 = vld [vmem:[%s2796 + $0x64] sm:$0xf]
          %v2823 = vld [vmem:[%s2796 + $0x68] sm:$0xf]
          %v2824 = vld [vmem:[%s2796 + $0x6c] sm:$0xf]
          %v2825 = vld [vmem:[%s2796 + $0x70] sm:$0xf]
          %v2826 = vld [vmem:[%s2796 + $0x74] sm:$0xf]
          %v2827 = vld [vmem:[%s2796 + $0x78] sm:$0xf]
          %v2828 = vld [vmem:[%s2796 + $0x7c] sm:$0xf]
          %v2829 = vld [vmem:[%s2796 + $0x80] sm:$0xf]
          %v2830 = vld [vmem:[%s2796 + $0x84] sm:$0xf]
          %v2831 = vld [vmem:[%s2796 + $0x88] sm:$0xf]
          %v2832 = vld [vmem:[%s2796 + $0x8c] sm:$0xf]
          %v2833 = vld [vmem:[%s2796 + $0x90] sm:$0xf]
          %v2834 = vld [vmem:[%s2796 + $0x94] sm:$0xf]
          %v2835 = vld [vmem:[%s2796 + $0x98] sm:$0xf]
          %v2836 = vld [vmem:[%s2796 + $0x9c] sm:$0xf]
          %v2837 = vld [vmem:[%s2796 + $0xa0] sm:$0xf]
          %v2838 = vld [vmem:[%s2796 + $0xa4] sm:$0xf]
          %v2839 = vld [vmem:[%s2796 + $0xa8] sm:$0xf]
          %v2840 = vld [vmem:[%s2796 + $0xac] sm:$0xf]
          %v2841 = vld [vmem:[%s2796 + $0xb0] sm:$0xf]
          %v2842 = vld [vmem:[%s2796 + $0xb4] sm:$0xf]
          %v2843 = vld [vmem:[%s2796 + $0xb8] sm:$0xf]
          %v2844 = vld [vmem:[%s2796 + $0xbc] sm:$0xf]
          %v2877 = vunpack.c.l.b16 %v2762
          %v2878 = vunpack.c.h.b16 %v2762
          %v2879 = vunpack.c.l.b16 %v2763
          %v2880 = vunpack.c.l.b16 %v2764
          %v2881 = vunpack.c.h.b16 %v2764
          %v2882 = vunpack.c.l.b16 %v2765
          %v2883 = vunpack.c.l.b16 %v2766
          %v2884 = vunpack.c.h.b16 %v2766
          %v2885 = vunpack.c.l.b16 %v2767
          %v2886 = vunpack.c.l.b16 %v2768
          %v2887 = vunpack.c.h.b16 %v2768
          %v2888 = vunpack.c.l.b16 %v2769
          %v2889 = vunpack.c.l.b16 %v2770
          %v2890 = vunpack.c.h.b16 %v2770
          %v2891 = vunpack.c.l.b16 %v2771
          %v2892 = vunpack.c.l.b16 %v2772
          %v2893 = vunpack.c.h.b16 %v2772
          %v2894 = vunpack.c.l.b16 %v2773
          %v2895 = vunpack.c.l.b16 %v2774
          %v2896 = vunpack.c.h.b16 %v2774
          %v2897 = vunpack.c.l.b16 %v2775
          %v2898 = vunpack.c.l.b16 %v2776
          %v2899 = vunpack.c.h.b16 %v2776
          %v2900 = vunpack.c.l.b16 %v2777
          %v2901 = vunpack.c.l.b16 %v2778
          %v2902 = vunpack.c.h.b16 %v2778
          %v2903 = vunpack.c.l.b16 %v2779
          %v2904 = vunpack.c.l.b16 %v2780
          %v2905 = vunpack.c.h.b16 %v2780
          %v2906 = vunpack.c.l.b16 %v2781
          %v2907 = vunpack.c.l.b16 %v2782
          %v2908 = vunpack.c.h.b16 %v2782
          %v2909 = vunpack.c.l.b16 %v2783
          %v2910 = vunpack.c.l.b16 %v2784
          %v2911 = vunpack.c.h.b16 %v2784
          %v2912 = vunpack.c.l.b16 %v2785
          %v2913 = vunpack.c.l.b16 %v2786
          %v2914 = vunpack.c.h.b16 %v2786
          %v2915 = vunpack.c.l.b16 %v2787
          %v2916 = vunpack.c.l.b16 %v2788
          %v2917 = vunpack.c.h.b16 %v2788
          %v2918 = vunpack.c.l.b16 %v2789
          %v2919 = vunpack.c.l.b16 %v2790
          %v2920 = vunpack.c.h.b16 %v2790
          %v2921 = vunpack.c.l.b16 %v2791
          %v2922 = vunpack.c.l.b16 %v2792
          %v2923 = vunpack.c.h.b16 %v2792
          %v2924 = vunpack.c.l.b16 %v2793
          %v2925 = vpack.c.b16 %v2880, %v2877
          %v2926 = vpack.c.b16 %v2881, %v2878
          %v2927 = vpack.c.b16 %v2882, %v2879
          %v2928 = vpack.c.b16 %v2886, %v2883
          %v2929 = vpack.c.b16 %v2887, %v2884
          %v2930 = vpack.c.b16 %v2888, %v2885
          %v2931 = vpack.c.b16 %v2892, %v2889
          %v2932 = vpack.c.b16 %v2893, %v2890
          %v2933 = vpack.c.b16 %v2894, %v2891
          %v2934 = vpack.c.b16 %v2898, %v2895
          %v2935 = vpack.c.b16 %v2899, %v2896
          %v2936 = vpack.c.b16 %v2900, %v2897
          %v2937 = vpack.c.b16 %v2904, %v2901
          %v2938 = vpack.c.b16 %v2905, %v2902
          %v2939 = vpack.c.b16 %v2906, %v2903
          %v2940 = vpack.c.b16 %v2910, %v2907
          %v2941 = vpack.c.b16 %v2911, %v2908
          %v2942 = vpack.c.b16 %v2912, %v2909
          %v2943 = vpack.c.b16 %v2916, %v2913
          %v2944 = vpack.c.b16 %v2917, %v2914
          %v2945 = vpack.c.b16 %v2918, %v2915
          %v2946 = vpack.c.b16 %v2922, %v2919
          %v2947 = vpack.c.b16 %v2923, %v2920
          %v2948 = vpack.c.b16 %v2924, %v2921
          %v3021 = vunpack.c.l.b16 %v2797
          %v3022 = vunpack.c.l.b16 %v2798
          %v3023 = vunpack.c.l.b16 %v2799
          %v3024 = vunpack.c.l.b16 %v2800
          %v3025 = vunpack.c.l.b16 %v2801
          %v3026 = vunpack.c.l.b16 %v2802
          %v3027 = vunpack.c.l.b16 %v2803
          %v3028 = vunpack.c.l.b16 %v2804
          %v3029 = vunpack.c.l.b16 %v2805
          %v3030 = vunpack.c.l.b16 %v2806
          %v3031 = vunpack.c.l.b16 %v2807
          %v3032 = vunpack.c.l.b16 %v2808
          %v3033 = vunpack.c.l.b16 %v2809
          %v3034 = vunpack.c.l.b16 %v2810
          %v3035 = vunpack.c.l.b16 %v2811
          %v3036 = vunpack.c.l.b16 %v2812
          %v3037 = vunpack.c.l.b16 %v2813
          %v3038 = vunpack.c.l.b16 %v2814
          %v3039 = vunpack.c.l.b16 %v2815
          %v3040 = vunpack.c.l.b16 %v2816
          %v3041 = vunpack.c.l.b16 %v2817
          %v3042 = vunpack.c.l.b16 %v2818
          %v3043 = vunpack.c.l.b16 %v2819
          %v3044 = vunpack.c.l.b16 %v2820
          %v3045 = vunpack.c.l.b16 %v2821
          %v3046 = vunpack.c.l.b16 %v2822
          %v3047 = vunpack.c.l.b16 %v2823
          %v3048 = vunpack.c.l.b16 %v2824
          %v3049 = vunpack.c.l.b16 %v2825
          %v3050 = vunpack.c.l.b16 %v2826
          %v3051 = vunpack.c.l.b16 %v2827
          %v3052 = vunpack.c.l.b16 %v2828
          %v3053 = vunpack.c.l.b16 %v2829
          %v3054 = vunpack.c.l.b16 %v2830
          %v3055 = vunpack.c.l.b16 %v2831
          %v3056 = vunpack.c.l.b16 %v2832
          %v3057 = vunpack.c.l.b16 %v2833
          %v3058 = vunpack.c.l.b16 %v2834
          %v3059 = vunpack.c.l.b16 %v2835
          %v3060 = vunpack.c.l.b16 %v2836
          %v3061 = vunpack.c.l.b16 %v2837
          %v3062 = vunpack.c.l.b16 %v2838
          %v3063 = vunpack.c.l.b16 %v2839
          %v3064 = vunpack.c.l.b16 %v2840
          %v3065 = vunpack.c.l.b16 %v2841
          %v3066 = vunpack.c.l.b16 %v2842
          %v3067 = vunpack.c.l.b16 %v2843
          %v3068 = vunpack.c.l.b16 %v2844
          %v3069 = vpack.c.b16 %v3022, %v3021
          %v3070 = vpack.c.b16 %v3024, %v3023
          %v3071 = vpack.c.b16 %v3026, %v3025
          %v3072 = vpack.c.b16 %v3028, %v3027
          %v3073 = vpack.c.b16 %v3030, %v3029
          %v3074 = vpack.c.b16 %v3032, %v3031
          %v3075 = vpack.c.b16 %v3034, %v3033
          %v3076 = vpack.c.b16 %v3036, %v3035
          %v3077 = vpack.c.b16 %v3038, %v3037
          %v3078 = vpack.c.b16 %v3040, %v3039
          %v3079 = vpack.c.b16 %v3042, %v3041
          %v3080 = vpack.c.b16 %v3044, %v3043
          %v3081 = vpack.c.b16 %v3046, %v3045
          %v3082 = vpack.c.b16 %v3048, %v3047
          %v3083 = vpack.c.b16 %v3050, %v3049
          %v3084 = vpack.c.b16 %v3052, %v3051
          %v3085 = vpack.c.b16 %v3054, %v3053
          %v3086 = vpack.c.b16 %v3056, %v3055
          %v3087 = vpack.c.b16 %v3058, %v3057
          %v3088 = vpack.c.b16 %v3060, %v3059
          %v3089 = vpack.c.b16 %v3062, %v3061
          %v3090 = vpack.c.b16 %v3064, %v3063
          %v3091 = vpack.c.b16 %v3066, %v3065
          %v3092 = vpack.c.b16 %v3068, %v3067
          %3117 = vmatprep.subr.bf16.mxu0 0
          %3118 = vmatpush1.bf16.msra.mxu0 %v3069
          %3119 = vmatprep.subr.bf16.mxu0 0
          %3120 = vmatpush1.bf16.msra.mxu0 %v3070
          %3121 = vmatprep.subr.bf16.mxu0 0
          %3122 = vmatpush1.bf16.msra.mxu0 %v3071
          %3123 = vmatprep.subr.bf16.mxu0 0
          %3124 = vmatpush1.bf16.msra.mxu0 %v3072
          %3125 = vmatprep.subr.bf16.mxu0 0
          %3126 = vmatpush1.bf16.msra.mxu0 %v3073
          %3127 = vmatprep.subr.bf16.mxu0 0
          %3128 = vmatpush1.bf16.msra.mxu0 %v3074
          %3129 = vmatprep.subr.bf16.mxu0 0
          %3130 = vmatpush1.bf16.msra.mxu0 %v3075
          %3131 = vmatprep.subr.bf16.mxu0 0
          %3132 = vmatpush1.bf16.msra.mxu0 %v3076
          %3133 = vmatprep.subr.bf16.mxu0 0
          %3134 = vmatpush1.bf16.msra.mxu0 %v3077
          %3135 = vmatprep.subr.bf16.mxu0 0
          %3136 = vmatpush1.bf16.msra.mxu0 %v3078
          %3137 = vmatprep.subr.bf16.mxu0 0
          %3138 = vmatpush1.bf16.msra.mxu0 %v3079
          %3139 = vmatprep.subr.bf16.mxu0 0
          %3140 = vmatpush1.bf16.msra.mxu0 %v3080
          %3141 = vmatprep.subr.bf16.mxu0 0
          %3142 = vmatpush1.bf16.msra.mxu0 %v3081
          %3143 = vmatprep.subr.bf16.mxu0 0
          %3144 = vmatpush1.bf16.msra.mxu0 %v3082
          %3145 = vmatprep.subr.bf16.mxu0 0
          %3146 = vmatpush1.bf16.msra.mxu0 %v3083
          %3147 = vmatprep.subr.bf16.mxu0 0
          %3148 = vmatpush1.bf16.msra.mxu0 %v3084
          %3149 = vmatprep.mubr.bf16.mxu0 %v2926
          %3150 = vmatmul.mubr.bf16.gmra.mrb[0].mxu0 %v2925
          %v3151 = vpop.f32.mrb[0].mxu0
          %v3152 = vadd.f32 0.0, %v3151
          %v3153 = vpop.f32.mrb[0].mxu0
          %v3154 = vpop.f32.mrb[0].mxu0
          %v3155 = vadd.f32 0.0, %v3154
          %v3156 = vpop.f32.mrb[0].mxu0
          %3157 = vmatprep.mubr.bf16.mxu0 %v2929
          %3158 = vmatmul.mubr.bf16.gmra.mrb[0].mxu0 %v2928
          %v3159 = vpop.f32.mrb[0].mxu0
          %v3160 = vadd.f32 0.0, %v3159
          %v3161 = vpop.f32.mrb[0].mxu0
          %v3162 = vpop.f32.mrb[0].mxu0
          %v3163 = vadd.f32 0.0, %v3162
          %v3164 = vpop.f32.mrb[0].mxu0
          %3165 = vmatprep.mubr.bf16.mxu0 %v2932
          %3166 = vmatmul.mubr.bf16.gmra.mrb[0].mxu0 %v2931
          %v3167 = vpop.f32.mrb[0].mxu0
          %v3168 = vadd.f32 0.0, %v3167
          %v3169 = vpop.f32.mrb[0].mxu0
          %v3170 = vpop.f32.mrb[0].mxu0
          %v3171 = vadd.f32 0.0, %v3170
          %v3172 = vpop.f32.mrb[0].mxu0
          %3173 = vmatprep.mubr.bf16.mxu0 %v2935
          %3174 = vmatmul.mubr.bf16.gmra.mrb[0].mxu0 %v2934
          %v3175 = vpop.f32.mrb[0].mxu0
          %v3176 = vadd.f32 0.0, %v3175
          %v3177 = vpop.f32.mrb[0].mxu0
          %v3178 = vpop.f32.mrb[0].mxu0
          %v3179 = vadd.f32 0.0, %v3178
          %v3180 = vpop.f32.mrb[0].mxu0
          %3181 = vmatprep.mubr.bf16.mxu0 %v2938
          %3182 = vmatmul.mubr.bf16.gmra.mrb[0].mxu0 %v2937
          %v3183 = vpop.f32.mrb[0].mxu0
          %v3184 = vadd.f32 0.0, %v3183
          %v3185 = vpop.f32.mrb[0].mxu0
          %v3186 = vpop.f32.mrb[0].mxu0
          %v3187 = vadd.f32 0.0, %v3186
          %v3188 = vpop.f32.mrb[0].mxu0
          %3189 = vmatprep.mubr.bf16.mxu0 %v2941
          %3190 = vmatmul.mubr.bf16.gmra.mrb[0].mxu0 %v2940
          %v3191 = vpop.f32.mrb[0].mxu0
          %v3192 = vadd.f32 0.0, %v3191
          %v3193 = vpop.f32.mrb[0].mxu0
          %v3194 = vpop.f32.mrb[0].mxu0
          %v3195 = vadd.f32 0.0, %v3194
          %v3196 = vpop.f32.mrb[0].mxu0
          %3197 = vmatprep.mubr.bf16.mxu0 %v2944
          %3198 = vmatmul.mubr.bf16.gmra.mrb[0].mxu0 %v2943
          %v3199 = vpop.f32.mrb[0].mxu0
          %v3200 = vadd.f32 0.0, %v3199
          %v3201 = vpop.f32.mrb[0].mxu0
          %v3202 = vpop.f32.mrb[0].mxu0
          %v3203 = vadd.f32 0.0, %v3202
          %v3204 = vpop.f32.mrb[0].mxu0
          %3205 = vmatprep.mubr.bf16.mxu0 %v2947
          %3206 = vmatmul.mubr.bf16.gmra.mrb[0].mxu0 %v2946
          %v3207 = vpop.f32.mrb[0].mxu0
          %v3208 = vadd.f32 0.0, %v3207
          %v3209 = vpop.f32.mrb[0].mxu0
          %v3210 = vpop.f32.mrb[0].mxu0
          %v3211 = vadd.f32 0.0, %v3210
          %v3212 = vpop.f32.mrb[0].mxu0
          %3213 = vdwg.mxu0
          %3214 = vmatprep.subr.bf16.mxu0 0
          %3215 = vmatpush1.bf16.msra.mxu0 %v3085
          %3216 = vmatprep.subr.bf16.mxu0 0
          %3217 = vmatpush1.bf16.msra.mxu0 %v3086
          %3218 = vmatprep.subr.bf16.mxu0 0
          %3219 = vmatpush1.bf16.msra.mxu0 %v3087
          %3220 = vmatprep.subr.bf16.mxu0 0
          %3221 = vmatpush1.bf16.msra.mxu0 %v3088
          %3222 = vmatprep.subr.bf16.mxu0 0
          %3223 = vmatpush1.bf16.msra.mxu0 %v3089
          %3224 = vmatprep.subr.bf16.mxu0 0
          %3225 = vmatpush1.bf16.msra.mxu0 %v3090
          %3226 = vmatprep.subr.bf16.mxu0 0
          %3227 = vmatpush1.bf16.msra.mxu0 %v3091
          %3228 = vmatprep.subr.bf16.mxu0 0
          %3229 = vmatpush1.bf16.msra.mxu0 %v3092
          %3230 = vmatprep.subr.bf16.mxu0 0
          %3231 = vmatpush1.bf16.msra.mxu0 0
          %3232 = vmatprep.subr.bf16.mxu0 0
          %3233 = vmatpush1.bf16.msra.mxu0 0
          %3234 = vmatprep.subr.bf16.mxu0 0
          %3235 = vmatpush1.bf16.msra.mxu0 0
          %3236 = vmatprep.subr.bf16.mxu0 0
          %3237 = vmatpush1.bf16.msra.mxu0 0
          %3238 = vmatprep.subr.bf16.mxu0 0
          %3239 = vmatpush1.bf16.msra.mxu0 0
          %3240 = vmatprep.subr.bf16.mxu0 0
          %3241 = vmatpush1.bf16.msra.mxu0 0
          %3242 = vmatprep.subr.bf16.mxu0 0
          %3243 = vmatpush1.bf16.msra.mxu0 0
          %3244 = vmatprep.subr.bf16.mxu0 0
          %3245 = vmatpush1.bf16.msra.mxu0 0
          %3246 = vmatprep.mubr.bf16.mxu0 0
          %3247 = vmatmul.mubr.bf16.gmra.mrb[0].mxu0 %v2927
          %v3248 = vpop.f32.mrb[0].mxu0
          %v3249 = vadd.f32 %v3152, %v3248
          %v3250 = vpop.f32.mrb[0].mxu0
          %v3251 = vpop.f32.mrb[0].mxu0
          %v3252 = vadd.f32 %v3155, %v3251
          %v3253 = vpop.f32.mrb[0].mxu0
          %3254 = vmatprep.mubr.bf16.mxu0 0
          %3255 = vmatmul.mubr.bf16.gmra.mrb[0].mxu0 %v2930
          %v3256 = vpop.f32.mrb[0].mxu0
          %v3257 = vadd.f32 %v3160, %v3256
          %v3258 = vpop.f32.mrb[0].mxu0
          %v3259 = vpop.f32.mrb[0].mxu0
          %v3260 = vadd.f32 %v3163, %v3259
          %v3261 = vpop.f32.mrb[0].mxu0
          %3262 = vmatprep.mubr.bf16.mxu0 0
          %3263 = vmatmul.mubr.bf16.gmra.mrb[0].mxu0 %v2933
          %v3264 = vpop.f32.mrb[0].mxu0
          %v3265 = vadd.f32 %v3168, %v3264
          %v3266 = vpop.f32.mrb[0].mxu0
          %v3267 = vpop.f32.mrb[0].mxu0
          %v3268 = vadd.f32 %v3171, %v3267
          %v3269 = vpop.f32.mrb[0].mxu0
          %3270 = vmatprep.mubr.bf16.mxu0 0
          %3271 = vmatmul.mubr.bf16.gmra.mrb[0].mxu0 %v2936
          %v3272 = vpop.f32.mrb[0].mxu0
          %v3273 = vadd.f32 %v3176, %v3272
          %v3274 = vpop.f32.mrb[0].mxu0
          %v3275 = vpop.f32.mrb[0].mxu0
          %v3276 = vadd.f32 %v3179, %v3275
          %v3277 = vpop.f32.mrb[0].mxu0
          %3278 = vmatprep.mubr.bf16.mxu0 0
          %3279 = vmatmul.mubr.bf16.gmra.mrb[0].mxu0 %v2939
          %v3280 = vpop.f32.mrb[0].mxu0
          %v3281 = vadd.f32 %v3184, %v3280
          %v3282 = vpop.f32.mrb[0].mxu0
          %v3283 = vpop.f32.mrb[0].mxu0
          %v3284 = vadd.f32 %v3187, %v3283
          %v3285 = vpop.f32.mrb[0].mxu0
          %3286 = vmatprep.mubr.bf16.mxu0 0
          %3287 = vmatmul.mubr.bf16.gmra.mrb[0].mxu0 %v2942
          %v3288 = vpop.f32.mrb[0].mxu0
          %v3289 = vadd.f32 %v3192, %v3288
          %v3290 = vpop.f32.mrb[0].mxu0
          %v3291 = vpop.f32.mrb[0].mxu0
          %v3292 = vadd.f32 %v3195, %v3291
          %v3293 = vpop.f32.mrb[0].mxu0
          %3294 = vmatprep.mubr.bf16.mxu0 0
          %3295 = vmatmul.mubr.bf16.gmra.mrb[0].mxu0 %v2945
          %v3296 = vpop.f32.mrb[0].mxu0
          %v3297 = vadd.f32 %v3200, %v3296
          %v3298 = vpop.f32.mrb[0].mxu0
          %v3299 = vpop.f32.mrb[0].mxu0
          %v3300 = vadd.f32 %v3203, %v3299
          %v3301 = vpop.f32.mrb[0].mxu0
          %3302 = vmatprep.mubr.bf16.mxu0 0
          %3303 = vmatmul.mubr.bf16.gmra.mrb[0].mxu0 %v2948
          %v3304 = vpop.f32.mrb[0].mxu0
          %v3305 = vadd.f32 %v3208, %v3304
          %v3306 = vpop.f32.mrb[0].mxu0
          %v3307 = vpop.f32.mrb[0].mxu0
          %v3308 = vadd.f32 %v3211, %v3307
          %v3309 = vpop.f32.mrb[0].mxu0
          %3310 = vdwg.mxu0
          %v3311 = vadd.f32 %v2742, %v3249
          %v3312 = vadd.f32 %v2743, %v3252
          %v3313 = vadd.f32 %v2744, %v3257
          %v3314 = vadd.f32 %v2745, %v3260
          %v3315 = vadd.f32 %v2746, %v3265
          %v3316 = vadd.f32 %v2747, %v3268
          %v3317 = vadd.f32 %v2748, %v3273
          %v3318 = vadd.f32 %v2749, %v3276
          %v3319 = vadd.f32 %v2750, %v3281
          %v3320 = vadd.f32 %v2751, %v3284
          %v3321 = vadd.f32 %v2752, %v3289
          %v3322 = vadd.f32 %v2753, %v3292
          %v3323 = vadd.f32 %v2754, %v3297
          %v3324 = vadd.f32 %v2755, %v3300
          %v3325 = vadd.f32 %v2756, %v3305
          %v3326 = vadd.f32 %v2757, %v3308
          %s3327 = sadd.s32 3, %s2759
          %s3328 = smul.addr %s3327, 4
          %s3329 = scalar_lea.vmem [#allocation2], %s3328
          %v3330 = vld [vmem:[%s3329] sm:$0xff]
          %v3331 = vld [vmem:[%s3329 + $0x8] sm:$0xf]
          %v3332 = vld [vmem:[%s3329 + $0xc] sm:$0xff]
          %v3333 = vld [vmem:[%s3329 + $0x14] sm:$0xf]
          %v3334 = vld [vmem:[%s3329 + $0x18] sm:$0xff]
          %v3335 = vld [vmem:[%s3329 + $0x20] sm:$0xf]
          %v3336 = vld [vmem:[%s3329 + $0x24] sm:$0xff]
          %v3337 = vld [vmem:[%s3329 + $0x2c] sm:$0xf]
          %v3338 = vld [vmem:[%s3329 + $0x30] sm:$0xff]
          %v3339 = vld [vmem:[%s3329 + $0x38] sm:$0xf]
          %v3340 = vld [vmem:[%s3329 + $0x3c] sm:$0xff]
          %v3341 = vld [vmem:[%s3329 + $0x44] sm:$0xf]
          %v3342 = vld [vmem:[%s3329 + $0x48] sm:$0xff]
          %v3343 = vld [vmem:[%s3329 + $0x50] sm:$0xf]
          %v3344 = vld [vmem:[%s3329 + $0x54] sm:$0xff]
          %v3345 = vld [vmem:[%s3329 + $0x5c] sm:$0xf]
          %v3346 = vld [vmem:[%s3329 + $0x78] sm:$0xff]
          %v3347 = vld [vmem:[%s3329 + $0x80] sm:$0xf]
          %v3348 = vld [vmem:[%s3329 + $0x84] sm:$0xff]
          %v3349 = vld [vmem:[%s3329 + $0x8c] sm:$0xf]
          %v3350 = vld [vmem:[%s3329 + $0x90] sm:$0xff]
          %v3351 = vld [vmem:[%s3329 + $0x98] sm:$0xf]
          %v3352 = vld [vmem:[%s3329 + $0x9c] sm:$0xff]
          %v3353 = vld [vmem:[%s3329 + $0xa4] sm:$0xf]
          %v3354 = vld [vmem:[%s3329 + $0xa8] sm:$0xff]
          %v3355 = vld [vmem:[%s3329 + $0xb0] sm:$0xf]
          %v3356 = vld [vmem:[%s3329 + $0xb4] sm:$0xff]
          %v3357 = vld [vmem:[%s3329 + $0xbc] sm:$0xf]
          %v3358 = vld [vmem:[%s3329 + $0xc0] sm:$0xff]
          %v3359 = vld [vmem:[%s3329 + $0xc8] sm:$0xf]
          %v3360 = vld [vmem:[%s3329 + $0xcc] sm:$0xff]
          %v3361 = vld [vmem:[%s3329 + $0xd4] sm:$0xf]
          %s3362 = sadd.s32 192, %s1121
          %s3363 = smul.addr %s3362, 4
          %s3364 = scalar_lea.vmem [#allocation4], %s3363
          %v3365 = vld [vmem:[%s3364] sm:$0xf]
          %v3366 = vld [vmem:[%s3364 + $0x4] sm:$0xf]
          %v3367 = vld [vmem:[%s3364 + $0x8] sm:$0xf]
          %v3368 = vld [vmem:[%s3364 + $0xc] sm:$0xf]
          %v3369 = vld [vmem:[%s3364 + $0x10] sm:$0xf]
          %v3370 = vld [vmem:[%s3364 + $0x14] sm:$0xf]
          %v3371 = vld [vmem:[%s3364 + $0x18] sm:$0xf]
          %v3372 = vld [vmem:[%s3364 + $0x1c] sm:$0xf]
          %v3373 = vld [vmem:[%s3364 + $0x20] sm:$0xf]
          %v3374 = vld [vmem:[%s3364 + $0x24] sm:$0xf]
          %v3375 = vld [vmem:[%s3364 + $0x28] sm:$0xf]
          %v3376 = vld [vmem:[%s3364 + $0x2c] sm:$0xf]
          %v3377 = vld [vmem:[%s3364 + $0x30] sm:$0xf]
          %v3378 = vld [vmem:[%s3364 + $0x34] sm:$0xf]
          %v3379 = vld [vmem:[%s3364 + $0x38] sm:$0xf]
          %v3380 = vld [vmem:[%s3364 + $0x3c] sm:$0xf]
          %v3381 = vld [vmem:[%s3364 + $0x40] sm:$0xf]
          %v3382 = vld [vmem:[%s3364 + $0x44] sm:$0xf]
          %v3383 = vld [vmem:[%s3364 + $0x48] sm:$0xf]
          %v3384 = vld [vmem:[%s3364 + $0x4c] sm:$0xf]
          %v3385 = vld [vmem:[%s3364 + $0x50] sm:$0xf]
          %v3386 = vld [vmem:[%s3364 + $0x54] sm:$0xf]
          %v3387 = vld [vmem:[%s3364 + $0x58] sm:$0xf]
          %v3388 = vld [vmem:[%s3364 + $0x5c] sm:$0xf]
          %v3389 = vld [vmem:[%s3364 + $0x60] sm:$0xf]
          %v3390 = vld [vmem:[%s3364 + $0x64] sm:$0xf]
          %v3391 = vld [vmem:[%s3364 + $0x68] sm:$0xf]
          %v3392 = vld [vmem:[%s3364 + $0x6c] sm:$0xf]
          %v3393 = vld [vmem:[%s3364 + $0x70] sm:$0xf]
          %v3394 = vld [vmem:[%s3364 + $0x74] sm:$0xf]
          %v3395 = vld [vmem:[%s3364 + $0x78] sm:$0xf]
          %v3396 = vld [vmem:[%s3364 + $0x7c] sm:$0xf]
          %v3397 = vld [vmem:[%s3364 + $0x80] sm:$0xf]
          %v3398 = vld [vmem:[%s3364 + $0x84] sm:$0xf]
          %v3399 = vld [vmem:[%s3364 + $0x88] sm:$0xf]
          %v3400 = vld [vmem:[%s3364 + $0x8c] sm:$0xf]
          %v3401 = vld [vmem:[%s3364 + $0x90] sm:$0xf]
          %v3402 = vld [vmem:[%s3364 + $0x94] sm:$0xf]
          %v3403 = vld [vmem:[%s3364 + $0x98] sm:$0xf]
          %v3404 = vld [vmem:[%s3364 + $0x9c] sm:$0xf]
          %v3405 = vld [vmem:[%s3364 + $0xa0] sm:$0xf]
          %v3406 = vld [vmem:[%s3364 + $0xa4] sm:$0xf]
          %v3407 = vld [vmem:[%s3364 + $0xa8] sm:$0xf]
          %v3408 = vld [vmem:[%s3364 + $0xac] sm:$0xf]
          %v3409 = vld [vmem:[%s3364 + $0xb0] sm:$0xf]
          %v3410 = vld [vmem:[%s3364 + $0xb4] sm:$0xf]
          %v3411 = vld [vmem:[%s3364 + $0xb8] sm:$0xf]
          %v3412 = vld [vmem:[%s3364 + $0xbc] sm:$0xf]
          %v3445 = vunpack.c.l.b16 %v3330
          %v3446 = vunpack.c.h.b16 %v3330
          %v3447 = vunpack.c.l.b16 %v3331
          %v3448 = vunpack.c.l.b16 %v3332
          %v3449 = vunpack.c.h.b16 %v3332
          %v3450 = vunpack.c.l.b16 %v3333
          %v3451 = vunpack.c.l.b16 %v3334
          %v3452 = vunpack.c.h.b16 %v3334
          %v3453 = vunpack.c.l.b16 %v3335
          %v3454 = vunpack.c.l.b16 %v3336
          %v3455 = vunpack.c.h.b16 %v3336
          %v3456 = vunpack.c.l.b16 %v3337
          %v3457 = vunpack.c.l.b16 %v3338
          %v3458 = vunpack.c.h.b16 %v3338
          %v3459 = vunpack.c.l.b16 %v3339
          %v3460 = vunpack.c.l.b16 %v3340
          %v3461 = vunpack.c.h.b16 %v3340
          %v3462 = vunpack.c.l.b16 %v3341
          %v3463 = vunpack.c.l.b16 %v3342
          %v3464 = vunpack.c.h.b16 %v3342
          %v3465 = vunpack.c.l.b16 %v3343
          %v3466 = vunpack.c.l.b16 %v3344
          %v3467 = vunpack.c.h.b16 %v3344
          %v3468 = vunpack.c.l.b16 %v3345
          %v3469 = vunpack.c.l.b16 %v3346
          %v3470 = vunpack.c.h.b16 %v3346
          %v3471 = vunpack.c.l.b16 %v3347
          %v3472 = vunpack.c.l.b16 %v3348
          %v3473 = vunpack.c.h.b16 %v3348
          %v3474 = vunpack.c.l.b16 %v3349
          %v3475 = vunpack.c.l.b16 %v3350
          %v3476 = vunpack.c.h.b16 %v3350
          %v3477 = vunpack.c.l.b16 %v3351
          %v3478 = vunpack.c.l.b16 %v3352
          %v3479 = vunpack.c.h.b16 %v3352
          %v3480 = vunpack.c.l.b16 %v3353
          %v3481 = vunpack.c.l.b16 %v3354
          %v3482 = vunpack.c.h.b16 %v3354
          %v3483 = vunpack.c.l.b16 %v3355
          %v3484 = vunpack.c.l.b16 %v3356
          %v3485 = vunpack.c.h.b16 %v3356
          %v3486 = vunpack.c.l.b16 %v3357
          %v3487 = vunpack.c.l.b16 %v3358
          %v3488 = vunpack.c.h.b16 %v3358
          %v3489 = vunpack.c.l.b16 %v3359
          %v3490 = vunpack.c.l.b16 %v3360
          %v3491 = vunpack.c.h.b16 %v3360
          %v3492 = vunpack.c.l.b16 %v3361
          %v3493 = vpack.c.b16 %v3448, %v3445
          %v3494 = vpack.c.b16 %v3449, %v3446
          %v3495 = vpack.c.b16 %v3450, %v3447
          %v3496 = vpack.c.b16 %v3454, %v3451
          %v3497 = vpack.c.b16 %v3455, %v3452
          %v3498 = vpack.c.b16 %v3456, %v3453
          %v3499 = vpack.c.b16 %v3460, %v3457
          %v3500 = vpack.c.b16 %v3461, %v3458
          %v3501 = vpack.c.b16 %v3462, %v3459
          %v3502 = vpack.c.b16 %v3466, %v3463
          %v3503 = vpack.c.b16 %v3467, %v3464
          %v3504 = vpack.c.b16 %v3468, %v3465
          %v3505 = vpack.c.b16 %v3472, %v3469
          %v3506 = vpack.c.b16 %v3473, %v3470
          %v3507 = vpack.c.b16 %v3474, %v3471
          %v3508 = vpack.c.b16 %v3478, %v3475
          %v3509 = vpack.c.b16 %v3479, %v3476
          %v3510 = vpack.c.b16 %v3480, %v3477
          %v3511 = vpack.c.b16 %v3484, %v3481
          %v3512 = vpack.c.b16 %v3485, %v3482
          %v3513 = vpack.c.b16 %v3486, %v3483
          %v3514 = vpack.c.b16 %v3490, %v3487
          %v3515 = vpack.c.b16 %v3491, %v3488
          %v3516 = vpack.c.b16 %v3492, %v3489
          %v3589 = vunpack.c.l.b16 %v3365
          %v3590 = vunpack.c.l.b16 %v3366
          %v3591 = vunpack.c.l.b16 %v3367
          %v3592 = vunpack.c.l.b16 %v3368
          %v3593 = vunpack.c.l.b16 %v3369
          %v3594 = vunpack.c.l.b16 %v3370
          %v3595 = vunpack.c.l.b16 %v3371
          %v3596 = vunpack.c.l.b16 %v3372
          %v3597 = vunpack.c.l.b16 %v3373
          %v3598 = vunpack.c.l.b16 %v3374
          %v3599 = vunpack.c.l.b16 %v3375
          %v3600 = vunpack.c.l.b16 %v3376
          %v3601 = vunpack.c.l.b16 %v3377
          %v3602 = vunpack.c.l.b16 %v3378
          %v3603 = vunpack.c.l.b16 %v3379
          %v3604 = vunpack.c.l.b16 %v3380
          %v3605 = vunpack.c.l.b16 %v3381
          %v3606 = vunpack.c.l.b16 %v3382
          %v3607 = vunpack.c.l.b16 %v3383
          %v3608 = vunpack.c.l.b16 %v3384
          %v3609 = vunpack.c.l.b16 %v3385
          %v3610 = vunpack.c.l.b16 %v3386
          %v3611 = vunpack.c.l.b16 %v3387
          %v3612 = vunpack.c.l.b16 %v3388
          %v3613 = vunpack.c.l.b16 %v3389
          %v3614 = vunpack.c.l.b16 %v3390
          %v3615 = vunpack.c.l.b16 %v3391
          %v3616 = vunpack.c.l.b16 %v3392
          %v3617 = vunpack.c.l.b16 %v3393
          %v3618 = vunpack.c.l.b16 %v3394
          %v3619 = vunpack.c.l.b16 %v3395
          %v3620 = vunpack.c.l.b16 %v3396
          %v3621 = vunpack.c.l.b16 %v3397
          %v3622 = vunpack.c.l.b16 %v3398
          %v3623 = vunpack.c.l.b16 %v3399
          %v3624 = vunpack.c.l.b16 %v3400
          %v3625 = vunpack.c.l.b16 %v3401
          %v3626 = vunpack.c.l.b16 %v3402
          %v3627 = vunpack.c.l.b16 %v3403
          %v3628 = vunpack.c.l.b16 %v3404
          %v3629 = vunpack.c.l.b16 %v3405
          %v3630 = vunpack.c.l.b16 %v3406
          %v3631 = vunpack.c.l.b16 %v3407
          %v3632 = vunpack.c.l.b16 %v3408
          %v3633 = vunpack.c.l.b16 %v3409
          %v3634 = vunpack.c.l.b16 %v3410
          %v3635 = vunpack.c.l.b16 %v3411
          %v3636 = vunpack.c.l.b16 %v3412
          %v3637 = vpack.c.b16 %v3590, %v3589
          %v3638 = vpack.c.b16 %v3592, %v3591
          %v3639 = vpack.c.b16 %v3594, %v3593
          %v3640 = vpack.c.b16 %v3596, %v3595
          %v3641 = vpack.c.b16 %v3598, %v3597
          %v3642 = vpack.c.b16 %v3600, %v3599
          %v3643 = vpack.c.b16 %v3602, %v3601
          %v3644 = vpack.c.b16 %v3604, %v3603
          %v3645 = vpack.c.b16 %v3606, %v3605
          %v3646 = vpack.c.b16 %v3608, %v3607
          %v3647 = vpack.c.b16 %v3610, %v3609
          %v3648 = vpack.c.b16 %v3612, %v3611
          %v3649 = vpack.c.b16 %v3614, %v3613
          %v3650 = vpack.c.b16 %v3616, %v3615
          %v3651 = vpack.c.b16 %v3618, %v3617
          %v3652 = vpack.c.b16 %v3620, %v3619
          %v3653 = vpack.c.b16 %v3622, %v3621
          %v3654 = vpack.c.b16 %v3624, %v3623
          %v3655 = vpack.c.b16 %v3626, %v3625
          %v3656 = vpack.c.b16 %v3628, %v3627
          %v3657 = vpack.c.b16 %v3630, %v3629
          %v3658 = vpack.c.b16 %v3632, %v3631
          %v3659 = vpack.c.b16 %v3634, %v3633
          %v3660 = vpack.c.b16 %v3636, %v3635
          %3685 = vmatprep.subr.bf16.mxu0 0
          %3686 = vmatpush1.bf16.msra.mxu0 %v3637
          %3687 = vmatprep.subr.bf16.mxu0 0
          %3688 = vmatpush1.bf16.msra.mxu0 %v3638
          %3689 = vmatprep.subr.bf16.mxu0 0
          %3690 = vmatpush1.bf16.msra.mxu0 %v3639
          %3691 = vmatprep.subr.bf16.mxu0 0
          %3692 = vmatpush1.bf16.msra.mxu0 %v3640
          %3693 = vmatprep.subr.bf16.mxu0 0
          %3694 = vmatpush1.bf16.msra.mxu0 %v3641
          %3695 = vmatprep.subr.bf16.mxu0 0
          %3696 = vmatpush1.bf16.msra.mxu0 %v3642
          %3697 = vmatprep.subr.bf16.mxu0 0
          %3698 = vmatpush1.bf16.msra.mxu0 %v3643
          %3699 = vmatprep.subr.bf16.mxu0 0
          %3700 = vmatpush1.bf16.msra.mxu0 %v3644
          %3701 = vmatprep.subr.bf16.mxu0 0
          %3702 = vmatpush1.bf16.msra.mxu0 %v3645
          %3703 = vmatprep.subr.bf16.mxu0 0
          %3704 = vmatpush1.bf16.msra.mxu0 %v3646
          %3705 = vmatprep.subr.bf16.mxu0 0
          %3706 = vmatpush1.bf16.msra.mxu0 %v3647
          %3707 = vmatprep.subr.bf16.mxu0 0
          %3708 = vmatpush1.bf16.msra.mxu0 %v3648
          %3709 = vmatprep.subr.bf16.mxu0 0
          %3710 = vmatpush1.bf16.msra.mxu0 %v3649
          %3711 = vmatprep.subr.bf16.mxu0 0
          %3712 = vmatpush1.bf16.msra.mxu0 %v3650
          %3713 = vmatprep.subr.bf16.mxu0 0
          %3714 = vmatpush1.bf16.msra.mxu0 %v3651
          %3715 = vmatprep.subr.bf16.mxu0 0
          %3716 = vmatpush1.bf16.msra.mxu0 %v3652
          %3717 = vmatprep.mubr.bf16.mxu0 %v3494
          %3718 = vmatmul.mubr.bf16.gmra.mrb[0].mxu0 %v3493
          %v3719 = vpop.f32.mrb[0].mxu0
          %v3720 = vadd.f32 0.0, %v3719
          %v3721 = vpop.f32.mrb[0].mxu0
          %v3722 = vpop.f32.mrb[0].mxu0
          %v3723 = vadd.f32 0.0, %v3722
          %v3724 = vpop.f32.mrb[0].mxu0
          %3725 = vmatprep.mubr.bf16.mxu0 %v3497
          %3726 = vmatmul.mubr.bf16.gmra.mrb[0].mxu0 %v3496
          %v3727 = vpop.f32.mrb[0].mxu0
          %v3728 = vadd.f32 0.0, %v3727
          %v3729 = vpop.f32.mrb[0].mxu0
          %v3730 = vpop.f32.mrb[0].mxu0
          %v3731 = vadd.f32 0.0, %v3730
          %v3732 = vpop.f32.mrb[0].mxu0
          %3733 = vmatprep.mubr.bf16.mxu0 %v3500
          %3734 = vmatmul.mubr.bf16.gmra.mrb[0].mxu0 %v3499
          %v3735 = vpop.f32.mrb[0].mxu0
          %v3736 = vadd.f32 0.0, %v3735
          %v3737 = vpop.f32.mrb[0].mxu0
          %v3738 = vpop.f32.mrb[0].mxu0
          %v3739 = vadd.f32 0.0, %v3738
          %v3740 = vpop.f32.mrb[0].mxu0
          %3741 = vmatprep.mubr.bf16.mxu0 %v3503
          %3742 = vmatmul.mubr.bf16.gmra.mrb[0].mxu0 %v3502
          %v3743 = vpop.f32.mrb[0].mxu0
          %v3744 = vadd.f32 0.0, %v3743
          %v3745 = vpop.f32.mrb[0].mxu0
          %v3746 = vpop.f32.mrb[0].mxu0
          %v3747 = vadd.f32 0.0, %v3746
          %v3748 = vpop.f32.mrb[0].mxu0
          %3749 = vmatprep.mubr.bf16.mxu0 %v3506
          %3750 = vmatmul.mubr.bf16.gmra.mrb[0].mxu0 %v3505
          %v3751 = vpop.f32.mrb[0].mxu0
          %v3752 = vadd.f32 0.0, %v3751
          %v3753 = vpop.f32.mrb[0].mxu0
          %v3754 = vpop.f32.mrb[0].mxu0
          %v3755 = vadd.f32 0.0, %v3754
          %v3756 = vpop.f32.mrb[0].mxu0
          %3757 = vmatprep.mubr.bf16.mxu0 %v3509
          %3758 = vmatmul.mubr.bf16.gmra.mrb[0].mxu0 %v3508
          %v3759 = vpop.f32.mrb[0].mxu0
          %v3760 = vadd.f32 0.0, %v3759
          %v3761 = vpop.f32.mrb[0].mxu0
          %v3762 = vpop.f32.mrb[0].mxu0
          %v3763 = vadd.f32 0.0, %v3762
          %v3764 = vpop.f32.mrb[0].mxu0
          %3765 = vmatprep.mubr.bf16.mxu0 %v3512
          %3766 = vmatmul.mubr.bf16.gmra.mrb[0].mxu0 %v3511
          %v3767 = vpop.f32.mrb[0].mxu0
          %v3768 = vadd.f32 0.0, %v3767
          %v3769 = vpop.f32.mrb[0].mxu0
          %v3770 = vpop.f32.mrb[0].mxu0
          %v3771 = vadd.f32 0.0, %v3770
          %v3772 = vpop.f32.mrb[0].mxu0
          %3773 = vmatprep.mubr.bf16.mxu0 %v3515
          %3774 = vmatmul.mubr.bf16.gmra.mrb[0].mxu0 %v3514
          %v3775 = vpop.f32.mrb[0].mxu0
          %v3776 = vadd.f32 0.0, %v3775
          %v3777 = vpop.f32.mrb[0].mxu0
          %v3778 = vpop.f32.mrb[0].mxu0
          %v3779 = vadd.f32 0.0, %v3778
          %v3780 = vpop.f32.mrb[0].mxu0
          %3781 = vdwg.mxu0
          %3782 = vmatprep.subr.bf16.mxu0 0
          %3783 = vmatpush1.bf16.msra.mxu0 %v3653
          %3784 = vmatprep.subr.bf16.mxu0 0
          %3785 = vmatpush1.bf16.msra.mxu0 %v3654
          %3786 = vmatprep.subr.bf16.mxu0 0
          %3787 = vmatpush1.bf16.msra.mxu0 %v3655
          %3788 = vmatprep.subr.bf16.mxu0 0
          %3789 = vmatpush1.bf16.msra.mxu0 %v3656
          %3790 = vmatprep.subr.bf16.mxu0 0
          %3791 = vmatpush1.bf16.msra.mxu0 %v3657
          %3792 = vmatprep.subr.bf16.mxu0 0
          %3793 = vmatpush1.bf16.msra.mxu0 %v3658
          %3794 = vmatprep.subr.bf16.mxu0 0
          %3795 = vmatpush1.bf16.msra.mxu0 %v3659
          %3796 = vmatprep.subr.bf16.mxu0 0
          %3797 = vmatpush1.bf16.msra.mxu0 %v3660
          %3798 = vmatprep.subr.bf16.mxu0 0
          %3799 = vmatpush1.bf16.msra.mxu0 0
          %3800 = vmatprep.subr.bf16.mxu0 0
          %3801 = vmatpush1.bf16.msra.mxu0 0
          %3802 = vmatprep.subr.bf16.mxu0 0
          %3803 = vmatpush1.bf16.msra.mxu0 0
          %3804 = vmatprep.subr.bf16.mxu0 0
          %3805 = vmatpush1.bf16.msra.mxu0 0
          %3806 = vmatprep.subr.bf16.mxu0 0
          %3807 = vmatpush1.bf16.msra.mxu0 0
          %3808 = vmatprep.subr.bf16.mxu0 0
          %3809 = vmatpush1.bf16.msra.mxu0 0
          %3810 = vmatprep.subr.bf16.mxu0 0
          %3811 = vmatpush1.bf16.msra.mxu0 0
          %3812 = vmatprep.subr.bf16.mxu0 0
          %3813 = vmatpush1.bf16.msra.mxu0 0
          %3814 = vmatprep.mubr.bf16.mxu0 0
          %3815 = vmatmul.mubr.bf16.gmra.mrb[0].mxu0 %v3495
          %v3816 = vpop.f32.mrb[0].mxu0
          %v3817 = vadd.f32 %v3720, %v3816
          %v3818 = vpop.f32.mrb[0].mxu0
          %v3819 = vpop.f32.mrb[0].mxu0
          %v3820 = vadd.f32 %v3723, %v3819
          %v3821 = vpop.f32.mrb[0].mxu0
          %3822 = vmatprep.mubr.bf16.mxu0 0
          %3823 = vmatmul.mubr.bf16.gmra.mrb[0].mxu0 %v3498
          %v3824 = vpop.f32.mrb[0].mxu0
          %v3825 = vadd.f32 %v3728, %v3824
          %v3826 = vpop.f32.mrb[0].mxu0
          %v3827 = vpop.f32.mrb[0].mxu0
          %v3828 = vadd.f32 %v3731, %v3827
          %v3829 = vpop.f32.mrb[0].mxu0
          %3830 = vmatprep.mubr.bf16.mxu0 0
          %3831 = vmatmul.mubr.bf16.gmra.mrb[0].mxu0 %v3501
          %v3832 = vpop.f32.mrb[0].mxu0
          %v3833 = vadd.f32 %v3736, %v3832
          %v3834 = vpop.f32.mrb[0].mxu0
          %v3835 = vpop.f32.mrb[0].mxu0
          %v3836 = vadd.f32 %v3739, %v3835
          %v3837 = vpop.f32.mrb[0].mxu0
          %3838 = vmatprep.mubr.bf16.mxu0 0
          %3839 = vmatmul.mubr.bf16.gmra.mrb[0].mxu0 %v3504
          %v3840 = vpop.f32.mrb[0].mxu0
          %v3841 = vadd.f32 %v3744, %v3840
          %v3842 = vpop.f32.mrb[0].mxu0
          %v3843 = vpop.f32.mrb[0].mxu0
          %v3844 = vadd.f32 %v3747, %v3843
          %v3845 = vpop.f32.mrb[0].mxu0
          %3846 = vmatprep.mubr.bf16.mxu0 0
          %3847 = vmatmul.mubr.bf16.gmra.mrb[0].mxu0 %v3507
          %v3848 = vpop.f32.mrb[0].mxu0
          %v3849 = vadd.f32 %v3752, %v3848
          %v3850 = vpop.f32.mrb[0].mxu0
          %v3851 = vpop.f32.mrb[0].mxu0
          %v3852 = vadd.f32 %v3755, %v3851
          %v3853 = vpop.f32.mrb[0].mxu0
          %3854 = vmatprep.mubr.bf16.mxu0 0
          %3855 = vmatmul.mubr.bf16.gmra.mrb[0].mxu0 %v3510
          %v3856 = vpop.f32.mrb[0].mxu0
          %v3857 = vadd.f32 %v3760, %v3856
          %v3858 = vpop.f32.mrb[0].mxu0
          %v3859 = vpop.f32.mrb[0].mxu0
          %v3860 = vadd.f32 %v3763, %v3859
          %v3861 = vpop.f32.mrb[0].mxu0
          %3862 = vmatprep.mubr.bf16.mxu0 0
          %3863 = vmatmul.mubr.bf16.gmra.mrb[0].mxu0 %v3513
          %v3864 = vpop.f32.mrb[0].mxu0
          %v3865 = vadd.f32 %v3768, %v3864
          %v3866 = vpop.f32.mrb[0].mxu0
          %v3867 = vpop.f32.mrb[0].mxu0
          %v3868 = vadd.f32 %v3771, %v3867
          %v3869 = vpop.f32.mrb[0].mxu0
          %3870 = vmatprep.mubr.bf16.mxu0 0
          %3871 = vmatmul.mubr.bf16.gmra.mrb[0].mxu0 %v3516
          %v3872 = vpop.f32.mrb[0].mxu0
          %v3873 = vadd.f32 %v3776, %v3872
          %v3874 = vpop.f32.mrb[0].mxu0
          %v3875 = vpop.f32.mrb[0].mxu0
          %v3876 = vadd.f32 %v3779, %v3875
          %v3877 = vpop.f32.mrb[0].mxu0
          %3878 = vdwg.mxu0
          %v3879 = vadd.f32 %v3311, %v3817
          %v3880 = vadd.f32 %v3312, %v3820
          %v3881 = vadd.f32 %v3313, %v3825
          %v3882 = vadd.f32 %v3314, %v3828
          %v3883 = vadd.f32 %v3315, %v3833
          %v3884 = vadd.f32 %v3316, %v3836
          %v3885 = vadd.f32 %v3317, %v3841
          %v3886 = vadd.f32 %v3318, %v3844
          %v3887 = vadd.f32 %v3319, %v3849
          %v3888 = vadd.f32 %v3320, %v3852
          %v3889 = vadd.f32 %v3321, %v3857
          %v3890 = vadd.f32 %v3322, %v3860
          %v3891 = vadd.f32 %v3323, %v3865
          %v3892 = vadd.f32 %v3324, %v3868
          %v3893 = vadd.f32 %v3325, %v3873
          %v3894 = vadd.f32 %v3326, %v3876
          %s3895 = sadd.s32 6, %s2759
          %s3896 = smul.addr %s3895, 4
          %s3897 = scalar_lea.vmem [#allocation2], %s3896
          %v3898 = vld [vmem:[%s3897] sm:$0xff]
          %v3899 = vld [vmem:[%s3897 + $0x8] sm:$0xf]
          %v3900 = vld [vmem:[%s3897 + $0xc] sm:$0xff]
          %v3901 = vld [vmem:[%s3897 + $0x14] sm:$0xf]
          %v3902 = vld [vmem:[%s3897 + $0x18] sm:$0xff]
          %v3903 = vld [vmem:[%s3897 + $0x20] sm:$0xf]
          %v3904 = vld [vmem:[%s3897 + $0x24] sm:$0xff]
          %v3905 = vld [vmem:[%s3897 + $0x2c] sm:$0xf]
          %v3906 = vld [vmem:[%s3897 + $0x30] sm:$0xff]
          %v3907 = vld [vmem:[%s3897 + $0x38] sm:$0xf]
          %v3908 = vld [vmem:[%s3897 + $0x3c] sm:$0xff]
          %v3909 = vld [vmem:[%s3897 + $0x44] sm:$0xf]
          %v3910 = vld [vmem:[%s3897 + $0x48] sm:$0xff]
          %v3911 = vld [vmem:[%s3897 + $0x50] sm:$0xf]
          %v3912 = vld [vmem:[%s3897 + $0x54] sm:$0xff]
          %v3913 = vld [vmem:[%s3897 + $0x5c] sm:$0xf]
          %v3914 = vld [vmem:[%s3897 + $0x78] sm:$0xff]
          %v3915 = vld [vmem:[%s3897 + $0x80] sm:$0xf]
          %v3916 = vld [vmem:[%s3897 + $0x84] sm:$0xff]
          %v3917 = vld [vmem:[%s3897 + $0x8c] sm:$0xf]
          %v3918 = vld [vmem:[%s3897 + $0x90] sm:$0xff]
          %v3919 = vld [vmem:[%s3897 + $0x98] sm:$0xf]
          %v3920 = vld [vmem:[%s3897 + $0x9c] sm:$0xff]
          %v3921 = vld [vmem:[%s3897 + $0xa4] sm:$0xf]
          %v3922 = vld [vmem:[%s3897 + $0xa8] sm:$0xff]
          %v3923 = vld [vmem:[%s3897 + $0xb0] sm:$0xf]
          %v3924 = vld [vmem:[%s3897 + $0xb4] sm:$0xff]
          %v3925 = vld [vmem:[%s3897 + $0xbc] sm:$0xf]
          %v3926 = vld [vmem:[%s3897 + $0xc0] sm:$0xff]
          %v3927 = vld [vmem:[%s3897 + $0xc8] sm:$0xf]
          %v3928 = vld [vmem:[%s3897 + $0xcc] sm:$0xff]
          %v3929 = vld [vmem:[%s3897 + $0xd4] sm:$0xf]
          %s3930 = sadd.s32 240, %s1121
          %s3931 = smul.addr %s3930, 4
          %s3932 = scalar_lea.vmem [#allocation4], %s3931
          %v3933 = vld [vmem:[%s3932] sm:$0xf]
          %v3934 = vld [vmem:[%s3932 + $0x4] sm:$0xf]
          %v3935 = vld [vmem:[%s3932 + $0x8] sm:$0xf]
          %v3936 = vld [vmem:[%s3932 + $0xc] sm:$0xf]
          %v3937 = vld [vmem:[%s3932 + $0x10] sm:$0xf]
          %v3938 = vld [vmem:[%s3932 + $0x14] sm:$0xf]
          %v3939 = vld [vmem:[%s3932 + $0x18] sm:$0xf]
          %v3940 = vld [vmem:[%s3932 + $0x1c] sm:$0xf]
          %v3941 = vld [vmem:[%s3932 + $0x20] sm:$0xf]
          %v3942 = vld [vmem:[%s3932 + $0x24] sm:$0xf]
          %v3943 = vld [vmem:[%s3932 + $0x28] sm:$0xf]
          %v3944 = vld [vmem:[%s3932 + $0x2c] sm:$0xf]
          %v3945 = vld [vmem:[%s3932 + $0x30] sm:$0xf]
          %v3946 = vld [vmem:[%s3932 + $0x34] sm:$0xf]
          %v3947 = vld [vmem:[%s3932 + $0x38] sm:$0xf]
          %v3948 = vld [vmem:[%s3932 + $0x3c] sm:$0xf]
          %v3949 = vld [vmem:[%s3932 + $0x40] sm:$0xf]
          %v3950 = vld [vmem:[%s3932 + $0x44] sm:$0xf]
          %v3951 = vld [vmem:[%s3932 + $0x48] sm:$0xf]
          %v3952 = vld [vmem:[%s3932 + $0x4c] sm:$0xf]
          %v3953 = vld [vmem:[%s3932 + $0x50] sm:$0xf]
          %v3954 = vld [vmem:[%s3932 + $0x54] sm:$0xf]
          %v3955 = vld [vmem:[%s3932 + $0x58] sm:$0xf]
          %v3956 = vld [vmem:[%s3932 + $0x5c] sm:$0xf]
          %v3957 = vld [vmem:[%s3932 + $0x60] sm:$0xf]
          %v3958 = vld [vmem:[%s3932 + $0x64] sm:$0xf]
          %v3959 = vld [vmem:[%s3932 + $0x68] sm:$0xf]
          %v3960 = vld [vmem:[%s3932 + $0x6c] sm:$0xf]
          %v3961 = vld [vmem:[%s3932 + $0x70] sm:$0xf]
          %v3962 = vld [vmem:[%s3932 + $0x74] sm:$0xf]
          %v3963 = vld [vmem:[%s3932 + $0x78] sm:$0xf]
          %v3964 = vld [vmem:[%s3932 + $0x7c] sm:$0xf]
          %v3965 = vld [vmem:[%s3932 + $0x80] sm:$0xf]
          %v3966 = vld [vmem:[%s3932 + $0x84] sm:$0xf]
          %v3967 = vld [vmem:[%s3932 + $0x88] sm:$0xf]
          %v3968 = vld [vmem:[%s3932 + $0x8c] sm:$0xf]
          %v3969 = vld [vmem:[%s3932 + $0x90] sm:$0xf]
          %v3970 = vld [vmem:[%s3932 + $0x94] sm:$0xf]
          %v3971 = vld [vmem:[%s3932 + $0x98] sm:$0xf]
          %v3972 = vld [vmem:[%s3932 + $0x9c] sm:$0xf]
          %v3973 = vld [vmem:[%s3932 + $0xa0] sm:$0xf]
          %v3974 = vld [vmem:[%s3932 + $0xa4] sm:$0xf]
          %v3975 = vld [vmem:[%s3932 + $0xa8] sm:$0xf]
          %v3976 = vld [vmem:[%s3932 + $0xac] sm:$0xf]
          %v3977 = vld [vmem:[%s3932 + $0xb0] sm:$0xf]
          %v3978 = vld [vmem:[%s3932 + $0xb4] sm:$0xf]
          %v3979 = vld [vmem:[%s3932 + $0xb8] sm:$0xf]
          %v3980 = vld [vmem:[%s3932 + $0xbc] sm:$0xf]
          %v4013 = vunpack.c.l.b16 %v3898
          %v4014 = vunpack.c.h.b16 %v3898
          %v4015 = vunpack.c.l.b16 %v3899
          %v4016 = vunpack.c.l.b16 %v3900
          %v4017 = vunpack.c.h.b16 %v3900
          %v4018 = vunpack.c.l.b16 %v3901
          %v4019 = vunpack.c.l.b16 %v3902
          %v4020 = vunpack.c.h.b16 %v3902
          %v4021 = vunpack.c.l.b16 %v3903
          %v4022 = vunpack.c.l.b16 %v3904
          %v4023 = vunpack.c.h.b16 %v3904
          %v4024 = vunpack.c.l.b16 %v3905
          %v4025 = vunpack.c.l.b16 %v3906
          %v4026 = vunpack.c.h.b16 %v3906
          %v4027 = vunpack.c.l.b16 %v3907
          %v4028 = vunpack.c.l.b16 %v3908
          %v4029 = vunpack.c.h.b16 %v3908
          %v4030 = vunpack.c.l.b16 %v3909
          %v4031 = vunpack.c.l.b16 %v3910
          %v4032 = vunpack.c.h.b16 %v3910
          %v4033 = vunpack.c.l.b16 %v3911
          %v4034 = vunpack.c.l.b16 %v3912
          %v4035 = vunpack.c.h.b16 %v3912
          %v4036 = vunpack.c.l.b16 %v3913
          %v4037 = vunpack.c.l.b16 %v3914
          %v4038 = vunpack.c.h.b16 %v3914
          %v4039 = vunpack.c.l.b16 %v3915
          %v4040 = vunpack.c.l.b16 %v3916
          %v4041 = vunpack.c.h.b16 %v3916
          %v4042 = vunpack.c.l.b16 %v3917
          %v4043 = vunpack.c.l.b16 %v3918
          %v4044 = vunpack.c.h.b16 %v3918
          %v4045 = vunpack.c.l.b16 %v3919
          %v4046 = vunpack.c.l.b16 %v3920
          %v4047 = vunpack.c.h.b16 %v3920
          %v4048 = vunpack.c.l.b16 %v3921
          %v4049 = vunpack.c.l.b16 %v3922
          %v4050 = vunpack.c.h.b16 %v3922
          %v4051 = vunpack.c.l.b16 %v3923
          %v4052 = vunpack.c.l.b16 %v3924
          %v4053 = vunpack.c.h.b16 %v3924
          %v4054 = vunpack.c.l.b16 %v3925
          %v4055 = vunpack.c.l.b16 %v3926
          %v4056 = vunpack.c.h.b16 %v3926
          %v4057 = vunpack.c.l.b16 %v3927
          %v4058 = vunpack.c.l.b16 %v3928
          %v4059 = vunpack.c.h.b16 %v3928
          %v4060 = vunpack.c.l.b16 %v3929
          %v4061 = vpack.c.b16 %v4016, %v4013
          %v4062 = vpack.c.b16 %v4017, %v4014
          %v4063 = vpack.c.b16 %v4018, %v4015
          %v4064 = vpack.c.b16 %v4022, %v4019
          %v4065 = vpack.c.b16 %v4023, %v4020
          %v4066 = vpack.c.b16 %v4024, %v4021
          %v4067 = vpack.c.b16 %v4028, %v4025
          %v4068 = vpack.c.b16 %v4029, %v4026
          %v4069 = vpack.c.b16 %v4030, %v4027
          %v4070 = vpack.c.b16 %v4034, %v4031
          %v4071 = vpack.c.b16 %v4035, %v4032
          %v4072 = vpack.c.b16 %v4036, %v4033
          %v4073 = vpack.c.b16 %v4040, %v4037
          %v4074 = vpack.c.b16 %v4041, %v4038
          %v4075 = vpack.c.b16 %v4042, %v4039
          %v4076 = vpack.c.b16 %v4046, %v4043
          %v4077 = vpack.c.b16 %v4047, %v4044
          %v4078 = vpack.c.b16 %v4048, %v4045
          %v4079 = vpack.c.b16 %v4052, %v4049
          %v4080 = vpack.c.b16 %v4053, %v4050
          %v4081 = vpack.c.b16 %v4054, %v4051
          %v4082 = vpack.c.b16 %v4058, %v4055
          %v4083 = vpack.c.b16 %v4059, %v4056
          %v4084 = vpack.c.b16 %v4060, %v4057
          %v4157 = vunpack.c.l.b16 %v3933
          %v4158 = vunpack.c.l.b16 %v3934
          %v4159 = vunpack.c.l.b16 %v3935
          %v4160 = vunpack.c.l.b16 %v3936
          %v4161 = vunpack.c.l.b16 %v3937
          %v4162 = vunpack.c.l.b16 %v3938
          %v4163 = vunpack.c.l.b16 %v3939
          %v4164 = vunpack.c.l.b16 %v3940
          %v4165 = vunpack.c.l.b16 %v3941
          %v4166 = vunpack.c.l.b16 %v3942
          %v4167 = vunpack.c.l.b16 %v3943
          %v4168 = vunpack.c.l.b16 %v3944
          %v4169 = vunpack.c.l.b16 %v3945
          %v4170 = vunpack.c.l.b16 %v3946
          %v4171 = vunpack.c.l.b16 %v3947
          %v4172 = vunpack.c.l.b16 %v3948
          %v4173 = vunpack.c.l.b16 %v3949
          %v4174 = vunpack.c.l.b16 %v3950
          %v4175 = vunpack.c.l.b16 %v3951
          %v4176 = vunpack.c.l.b16 %v3952
          %v4177 = vunpack.c.l.b16 %v3953
          %v4178 = vunpack.c.l.b16 %v3954
          %v4179 = vunpack.c.l.b16 %v3955
          %v4180 = vunpack.c.l.b16 %v3956
          %v4181 = vunpack.c.l.b16 %v3957
          %v4182 = vunpack.c.l.b16 %v3958
          %v4183 = vunpack.c.l.b16 %v3959
          %v4184 = vunpack.c.l.b16 %v3960
          %v4185 = vunpack.c.l.b16 %v3961
          %v4186 = vunpack.c.l.b16 %v3962
          %v4187 = vunpack.c.l.b16 %v3963
          %v4188 = vunpack.c.l.b16 %v3964
          %v4189 = vunpack.c.l.b16 %v3965
          %v4190 = vunpack.c.l.b16 %v3966
          %v4191 = vunpack.c.l.b16 %v3967
          %v4192 = vunpack.c.l.b16 %v3968
          %v4193 = vunpack.c.l.b16 %v3969
          %v4194 = vunpack.c.l.b16 %v3970
          %v4195 = vunpack.c.l.b16 %v3971
          %v4196 = vunpack.c.l.b16 %v3972
          %v4197 = vunpack.c.l.b16 %v3973
          %v4198 = vunpack.c.l.b16 %v3974
          %v4199 = vunpack.c.l.b16 %v3975
          %v4200 = vunpack.c.l.b16 %v3976
          %v4201 = vunpack.c.l.b16 %v3977
          %v4202 = vunpack.c.l.b16 %v3978
          %v4203 = vunpack.c.l.b16 %v3979
          %v4204 = vunpack.c.l.b16 %v3980
          %v4205 = vpack.c.b16 %v4158, %v4157
          %v4206 = vpack.c.b16 %v4160, %v4159
          %v4207 = vpack.c.b16 %v4162, %v4161
          %v4208 = vpack.c.b16 %v4164, %v4163
          %v4209 = vpack.c.b16 %v4166, %v4165
          %v4210 = vpack.c.b16 %v4168, %v4167
          %v4211 = vpack.c.b16 %v4170, %v4169
          %v4212 = vpack.c.b16 %v4172, %v4171
          %v4213 = vpack.c.b16 %v4174, %v4173
          %v4214 = vpack.c.b16 %v4176, %v4175
          %v4215 = vpack.c.b16 %v4178, %v4177
          %v4216 = vpack.c.b16 %v4180, %v4179
          %v4217 = vpack.c.b16 %v4182, %v4181
          %v4218 = vpack.c.b16 %v4184, %v4183
          %v4219 = vpack.c.b16 %v4186, %v4185
          %v4220 = vpack.c.b16 %v4188, %v4187
          %v4221 = vpack.c.b16 %v4190, %v4189
          %v4222 = vpack.c.b16 %v4192, %v4191
          %v4223 = vpack.c.b16 %v4194, %v4193
          %v4224 = vpack.c.b16 %v4196, %v4195
          %v4225 = vpack.c.b16 %v4198, %v4197
          %v4226 = vpack.c.b16 %v4200, %v4199
          %v4227 = vpack.c.b16 %v4202, %v4201
          %v4228 = vpack.c.b16 %v4204, %v4203
          %4253 = vmatprep.subr.bf16.mxu0 0
          %4254 = vmatpush1.bf16.msra.mxu0 %v4205
          %4255 = vmatprep.subr.bf16.mxu0 0
          %4256 = vmatpush1.bf16.msra.mxu0 %v4206
          %4257 = vmatprep.subr.bf16.mxu0 0
          %4258 = vmatpush1.bf16.msra.mxu0 %v4207
          %4259 = vmatprep.subr.bf16.mxu0 0
          %4260 = vmatpush1.bf16.msra.mxu0 %v4208
          %4261 = vmatprep.subr.bf16.mxu0 0
          %4262 = vmatpush1.bf16.msra.mxu0 %v4209
          %4263 = vmatprep.subr.bf16.mxu0 0
          %4264 = vmatpush1.bf16.msra.mxu0 %v4210
          %4265 = vmatprep.subr.bf16.mxu0 0
          %4266 = vmatpush1.bf16.msra.mxu0 %v4211
          %4267 = vmatprep.subr.bf16.mxu0 0
          %4268 = vmatpush1.bf16.msra.mxu0 %v4212
          %4269 = vmatprep.subr.bf16.mxu0 0
          %4270 = vmatpush1.bf16.msra.mxu0 %v4213
          %4271 = vmatprep.subr.bf16.mxu0 0
          %4272 = vmatpush1.bf16.msra.mxu0 %v4214
          %4273 = vmatprep.subr.bf16.mxu0 0
          %4274 = vmatpush1.bf16.msra.mxu0 %v4215
          %4275 = vmatprep.subr.bf16.mxu0 0
          %4276 = vmatpush1.bf16.msra.mxu0 %v4216
          %4277 = vmatprep.subr.bf16.mxu0 0
          %4278 = vmatpush1.bf16.msra.mxu0 %v4217
          %4279 = vmatprep.subr.bf16.mxu0 0
          %4280 = vmatpush1.bf16.msra.mxu0 %v4218
          %4281 = vmatprep.subr.bf16.mxu0 0
          %4282 = vmatpush1.bf16.msra.mxu0 %v4219
          %4283 = vmatprep.subr.bf16.mxu0 0
          %4284 = vmatpush1.bf16.msra.mxu0 %v4220
          %4285 = vmatprep.mubr.bf16.mxu0 %v4062
          %4286 = vmatmul.mubr.bf16.gmra.mrb[0].mxu0 %v4061
          %v4287 = vpop.f32.mrb[0].mxu0
          %v4288 = vadd.f32 0.0, %v4287
          %v4289 = vpop.f32.mrb[0].mxu0
          %v4290 = vpop.f32.mrb[0].mxu0
          %v4291 = vadd.f32 0.0, %v4290
          %v4292 = vpop.f32.mrb[0].mxu0
          %4293 = vmatprep.mubr.bf16.mxu0 %v4065
          %4294 = vmatmul.mubr.bf16.gmra.mrb[0].mxu0 %v4064
          %v4295 = vpop.f32.mrb[0].mxu0
          %v4296 = vadd.f32 0.0, %v4295
          %v4297 = vpop.f32.mrb[0].mxu0
          %v4298 = vpop.f32.mrb[0].mxu0
          %v4299 = vadd.f32 0.0, %v4298
          %v4300 = vpop.f32.mrb[0].mxu0
          %4301 = vmatprep.mubr.bf16.mxu0 %v4068
          %4302 = vmatmul.mubr.bf16.gmra.mrb[0].mxu0 %v4067
          %v4303 = vpop.f32.mrb[0].mxu0
          %v4304 = vadd.f32 0.0, %v4303
          %v4305 = vpop.f32.mrb[0].mxu0
          %v4306 = vpop.f32.mrb[0].mxu0
          %v4307 = vadd.f32 0.0, %v4306
          %v4308 = vpop.f32.mrb[0].mxu0
          %4309 = vmatprep.mubr.bf16.mxu0 %v4071
          %4310 = vmatmul.mubr.bf16.gmra.mrb[0].mxu0 %v4070
          %v4311 = vpop.f32.mrb[0].mxu0
          %v4312 = vadd.f32 0.0, %v4311
          %v4313 = vpop.f32.mrb[0].mxu0
          %v4314 = vpop.f32.mrb[0].mxu0
          %v4315 = vadd.f32 0.0, %v4314
          %v4316 = vpop.f32.mrb[0].mxu0
          %4317 = vmatprep.mubr.bf16.mxu0 %v4074
          %4318 = vmatmul.mubr.bf16.gmra.mrb[0].mxu0 %v4073
          %v4319 = vpop.f32.mrb[0].mxu0
          %v4320 = vadd.f32 0.0, %v4319
          %v4321 = vpop.f32.mrb[0].mxu0
          %v4322 = vpop.f32.mrb[0].mxu0
          %v4323 = vadd.f32 0.0, %v4322
          %v4324 = vpop.f32.mrb[0].mxu0
          %4325 = vmatprep.mubr.bf16.mxu0 %v4077
          %4326 = vmatmul.mubr.bf16.gmra.mrb[0].mxu0 %v4076
          %v4327 = vpop.f32.mrb[0].mxu0
          %v4328 = vadd.f32 0.0, %v4327
          %v4329 = vpop.f32.mrb[0].mxu0
          %v4330 = vpop.f32.mrb[0].mxu0
          %v4331 = vadd.f32 0.0, %v4330
          %v4332 = vpop.f32.mrb[0].mxu0
          %4333 = vmatprep.mubr.bf16.mxu0 %v4080
          %4334 = vmatmul.mubr.bf16.gmra.mrb[0].mxu0 %v4079
          %v4335 = vpop.f32.mrb[0].mxu0
          %v4336 = vadd.f32 0.0, %v4335
          %v4337 = vpop.f32.mrb[0].mxu0
          %v4338 = vpop.f32.mrb[0].mxu0
          %v4339 = vadd.f32 0.0, %v4338
          %v4340 = vpop.f32.mrb[0].mxu0
          %4341 = vmatprep.mubr.bf16.mxu0 %v4083
          %4342 = vmatmul.mubr.bf16.gmra.mrb[0].mxu0 %v4082
          %v4343 = vpop.f32.mrb[0].mxu0
          %v4344 = vadd.f32 0.0, %v4343
          %v4345 = vpop.f32.mrb[0].mxu0
          %v4346 = vpop.f32.mrb[0].mxu0
          %v4347 = vadd.f32 0.0, %v4346
          %v4348 = vpop.f32.mrb[0].mxu0
          %4349 = vdwg.mxu0
          %4350 = vmatprep.subr.bf16.mxu0 0
          %4351 = vmatpush1.bf16.msra.mxu0 %v4221
          %4352 = vmatprep.subr.bf16.mxu0 0
          %4353 = vmatpush1.bf16.msra.mxu0 %v4222
          %4354 = vmatprep.subr.bf16.mxu0 0
          %4355 = vmatpush1.bf16.msra.mxu0 %v4223
          %4356 = vmatprep.subr.bf16.mxu0 0
          %4357 = vmatpush1.bf16.msra.mxu0 %v4224
          %4358 = vmatprep.subr.bf16.mxu0 0
          %4359 = vmatpush1.bf16.msra.mxu0 %v4225
          %4360 = vmatprep.subr.bf16.mxu0 0
          %4361 = vmatpush1.bf16.msra.mxu0 %v4226
          %4362 = vmatprep.subr.bf16.mxu0 0
          %4363 = vmatpush1.bf16.msra.mxu0 %v4227
          %4364 = vmatprep.subr.bf16.mxu0 0
          %4365 = vmatpush1.bf16.msra.mxu0 %v4228
          %4366 = vmatprep.subr.bf16.mxu0 0
          %4367 = vmatpush1.bf16.msra.mxu0 0
          %4368 = vmatprep.subr.bf16.mxu0 0
          %4369 = vmatpush1.bf16.msra.mxu0 0
          %4370 = vmatprep.subr.bf16.mxu0 0
          %4371 = vmatpush1.bf16.msra.mxu0 0
          %4372 = vmatprep.subr.bf16.mxu0 0
          %4373 = vmatpush1.bf16.msra.mxu0 0
          %4374 = vmatprep.subr.bf16.mxu0 0
          %4375 = vmatpush1.bf16.msra.mxu0 0
          %4376 = vmatprep.subr.bf16.mxu0 0
          %4377 = vmatpush1.bf16.msra.mxu0 0
          %4378 = vmatprep.subr.bf16.mxu0 0
          %4379 = vmatpush1.bf16.msra.mxu0 0
          %4380 = vmatprep.subr.bf16.mxu0 0
          %4381 = vmatpush1.bf16.msra.mxu0 0
          %4382 = vmatprep.mubr.bf16.mxu0 0
          %4383 = vmatmul.mubr.bf16.gmra.mrb[0].mxu0 %v4063
          %v4384 = vpop.f32.mrb[0].mxu0
          %v4385 = vadd.f32 %v4288, %v4384
          %v4386 = vpop.f32.mrb[0].mxu0
          %v4387 = vpop.f32.mrb[0].mxu0
          %v4388 = vadd.f32 %v4291, %v4387
          %v4389 = vpop.f32.mrb[0].mxu0
          %4390 = vmatprep.mubr.bf16.mxu0 0
          %4391 = vmatmul.mubr.bf16.gmra.mrb[0].mxu0 %v4066
          %v4392 = vpop.f32.mrb[0].mxu0
          %v4393 = vadd.f32 %v4296, %v4392
          %v4394 = vpop.f32.mrb[0].mxu0
          %v4395 = vpop.f32.mrb[0].mxu0
          %v4396 = vadd.f32 %v4299, %v4395
          %v4397 = vpop.f32.mrb[0].mxu0
          %4398 = vmatprep.mubr.bf16.mxu0 0
          %4399 = vmatmul.mubr.bf16.gmra.mrb[0].mxu0 %v4069
          %v4400 = vpop.f32.mrb[0].mxu0
          %v4401 = vadd.f32 %v4304, %v4400
          %v4402 = vpop.f32.mrb[0].mxu0
          %v4403 = vpop.f32.mrb[0].mxu0
          %v4404 = vadd.f32 %v4307, %v4403
          %v4405 = vpop.f32.mrb[0].mxu0
          %4406 = vmatprep.mubr.bf16.mxu0 0
          %4407 = vmatmul.mubr.bf16.gmra.mrb[0].mxu0 %v4072
          %v4408 = vpop.f32.mrb[0].mxu0
          %v4409 = vadd.f32 %v4312, %v4408
          %v4410 = vpop.f32.mrb[0].mxu0
          %v4411 = vpop.f32.mrb[0].mxu0
          %v4412 = vadd.f32 %v4315, %v4411
          %v4413 = vpop.f32.mrb[0].mxu0
          %4414 = vmatprep.mubr.bf16.mxu0 0
          %4415 = vmatmul.mubr.bf16.gmra.mrb[0].mxu0 %v4075
          %v4416 = vpop.f32.mrb[0].mxu0
          %v4417 = vadd.f32 %v4320, %v4416
          %v4418 = vpop.f32.mrb[0].mxu0
          %v4419 = vpop.f32.mrb[0].mxu0
          %v4420 = vadd.f32 %v4323, %v4419
          %v4421 = vpop.f32.mrb[0].mxu0
          %4422 = vmatprep.mubr.bf16.mxu0 0
          %4423 = vmatmul.mubr.bf16.gmra.mrb[0].mxu0 %v4078
          %v4424 = vpop.f32.mrb[0].mxu0
          %v4425 = vadd.f32 %v4328, %v4424
          %v4426 = vpop.f32.mrb[0].mxu0
          %v4427 = vpop.f32.mrb[0].mxu0
          %v4428 = vadd.f32 %v4331, %v4427
          %v4429 = vpop.f32.mrb[0].mxu0
          %4430 = vmatprep.mubr.bf16.mxu0 0
          %4431 = vmatmul.mubr.bf16.gmra.mrb[0].mxu0 %v4081
          %v4432 = vpop.f32.mrb[0].mxu0
          %v4433 = vadd.f32 %v4336, %v4432
          %v4434 = vpop.f32.mrb[0].mxu0
          %v4435 = vpop.f32.mrb[0].mxu0
          %v4436 = vadd.f32 %v4339, %v4435
          %v4437 = vpop.f32.mrb[0].mxu0
          %4438 = vmatprep.mubr.bf16.mxu0 0
          %4439 = vmatmul.mubr.bf16.gmra.mrb[0].mxu0 %v4084
          %v4440 = vpop.f32.mrb[0].mxu0
          %v4441 = vadd.f32 %v4344, %v4440
          %v4442 = vpop.f32.mrb[0].mxu0
          %v4443 = vpop.f32.mrb[0].mxu0
          %v4444 = vadd.f32 %v4347, %v4443
          %v4445 = vpop.f32.mrb[0].mxu0
          %4446 = vdwg.mxu0
          %v4447 = vadd.f32 %v3879, %v4385
          %v4448 = vadd.f32 %v3880, %v4388
          %v4449 = vadd.f32 %v3881, %v4393
          %v4450 = vadd.f32 %v3882, %v4396
          %v4451 = vadd.f32 %v3883, %v4401
          %v4452 = vadd.f32 %v3884, %v4404
          %v4453 = vadd.f32 %v3885, %v4409
          %v4454 = vadd.f32 %v3886, %v4412
          %v4455 = vadd.f32 %v3887, %v4417
          %v4456 = vadd.f32 %v3888, %v4420
          %v4457 = vadd.f32 %v3889, %v4425
          %v4458 = vadd.f32 %v3890, %v4428
          %v4459 = vadd.f32 %v3891, %v4433
          %v4460 = vadd.f32 %v3892, %v4436
          %v4461 = vadd.f32 %v3893, %v4441
          %v4462 = vadd.f32 %v3894, %v4444
          %s4463 = sadd.s32 %s1084, 2
          %s4464 = smul.u32 %s4463, 30
          %s4465 = smul.addr %s4464, 4
          %s4466 = scalar_lea.vmem [#allocation2], %s4465
          %v4467 = vld [vmem:[%s4466] sm:$0xff]
          %v4468 = vld [vmem:[%s4466 + $0x8] sm:$0xf]
          %v4469 = vld [vmem:[%s4466 + $0xc] sm:$0xff]
          %v4470 = vld [vmem:[%s4466 + $0x14] sm:$0xf]
          %v4471 = vld [vmem:[%s4466 + $0x18] sm:$0xff]
          %v4472 = vld [vmem:[%s4466 + $0x20] sm:$0xf]
          %v4473 = vld [vmem:[%s4466 + $0x24] sm:$0xff]
          %v4474 = vld [vmem:[%s4466 + $0x2c] sm:$0xf]
          %v4475 = vld [vmem:[%s4466 + $0x30] sm:$0xff]
          %v4476 = vld [vmem:[%s4466 + $0x38] sm:$0xf]
          %v4477 = vld [vmem:[%s4466 + $0x3c] sm:$0xff]
          %v4478 = vld [vmem:[%s4466 + $0x44] sm:$0xf]
          %v4479 = vld [vmem:[%s4466 + $0x48] sm:$0xff]
          %v4480 = vld [vmem:[%s4466 + $0x50] sm:$0xf]
          %v4481 = vld [vmem:[%s4466 + $0x54] sm:$0xff]
          %v4482 = vld [vmem:[%s4466 + $0x5c] sm:$0xf]
          %v4483 = vld [vmem:[%s4466 + $0x78] sm:$0xff]
          %v4484 = vld [vmem:[%s4466 + $0x80] sm:$0xf]
          %v4485 = vld [vmem:[%s4466 + $0x84] sm:$0xff]
          %v4486 = vld [vmem:[%s4466 + $0x8c] sm:$0xf]
          %v4487 = vld [vmem:[%s4466 + $0x90] sm:$0xff]
          %v4488 = vld [vmem:[%s4466 + $0x98] sm:$0xf]
          %v4489 = vld [vmem:[%s4466 + $0x9c] sm:$0xff]
          %v4490 = vld [vmem:[%s4466 + $0xa4] sm:$0xf]
          %v4491 = vld [vmem:[%s4466 + $0xa8] sm:$0xff]
          %v4492 = vld [vmem:[%s4466 + $0xb0] sm:$0xf]
          %v4493 = vld [vmem:[%s4466 + $0xb4] sm:$0xff]
          %v4494 = vld [vmem:[%s4466 + $0xbc] sm:$0xf]
          %v4495 = vld [vmem:[%s4466 + $0xc0] sm:$0xff]
          %v4496 = vld [vmem:[%s4466 + $0xc8] sm:$0xf]
          %v4497 = vld [vmem:[%s4466 + $0xcc] sm:$0xff]
          %v4498 = vld [vmem:[%s4466 + $0xd4] sm:$0xf]
          %s4499 = sadd.s32 288, %s1121
          %s4500 = smul.addr %s4499, 4
          %s4501 = scalar_lea.vmem [#allocation4], %s4500
          %v4502 = vld [vmem:[%s4501] sm:$0xf]
          %v4503 = vld [vmem:[%s4501 + $0x4] sm:$0xf]
          %v4504 = vld [vmem:[%s4501 + $0x8] sm:$0xf]
          %v4505 = vld [vmem:[%s4501 + $0xc] sm:$0xf]
          %v4506 = vld [vmem:[%s4501 + $0x10] sm:$0xf]
          %v4507 = vld [vmem:[%s4501 + $0x14] sm:$0xf]
          %v4508 = vld [vmem:[%s4501 + $0x18] sm:$0xf]
          %v4509 = vld [vmem:[%s4501 + $0x1c] sm:$0xf]
          %v4510 = vld [vmem:[%s4501 + $0x20] sm:$0xf]
          %v4511 = vld [vmem:[%s4501 + $0x24] sm:$0xf]
          %v4512 = vld [vmem:[%s4501 + $0x28] sm:$0xf]
          %v4513 = vld [vmem:[%s4501 + $0x2c] sm:$0xf]
          %v4514 = vld [vmem:[%s4501 + $0x30] sm:$0xf]
          %v4515 = vld [vmem:[%s4501 + $0x34] sm:$0xf]
          %v4516 = vld [vmem:[%s4501 + $0x38] sm:$0xf]
          %v4517 = vld [vmem:[%s4501 + $0x3c] sm:$0xf]
          %v4518 = vld [vmem:[%s4501 + $0x40] sm:$0xf]
          %v4519 = vld [vmem:[%s4501 + $0x44] sm:$0xf]
          %v4520 = vld [vmem:[%s4501 + $0x48] sm:$0xf]
          %v4521 = vld [vmem:[%s4501 + $0x4c] sm:$0xf]
          %v4522 = vld [vmem:[%s4501 + $0x50] sm:$0xf]
          %v4523 = vld [vmem:[%s4501 + $0x54] sm:$0xf]
          %v4524 = vld [vmem:[%s4501 + $0x58] sm:$0xf]
          %v4525 = vld [vmem:[%s4501 + $0x5c] sm:$0xf]
          %v4526 = vld [vmem:[%s4501 + $0x60] sm:$0xf]
          %v4527 = vld [vmem:[%s4501 + $0x64] sm:$0xf]
          %v4528 = vld [vmem:[%s4501 + $0x68] sm:$0xf]
          %v4529 = vld [vmem:[%s4501 + $0x6c] sm:$0xf]
          %v4530 = vld [vmem:[%s4501 + $0x70] sm:$0xf]
          %v4531 = vld [vmem:[%s4501 + $0x74] sm:$0xf]
          %v4532 = vld [vmem:[%s4501 + $0x78] sm:$0xf]
          %v4533 = vld [vmem:[%s4501 + $0x7c] sm:$0xf]
          %v4534 = vld [vmem:[%s4501 + $0x80] sm:$0xf]
          %v4535 = vld [vmem:[%s4501 + $0x84] sm:$0xf]
          %v4536 = vld [vmem:[%s4501 + $0x88] sm:$0xf]
          %v4537 = vld [vmem:[%s4501 + $0x8c] sm:$0xf]
          %v4538 = vld [vmem:[%s4501 + $0x90] sm:$0xf]
          %v4539 = vld [vmem:[%s4501 + $0x94] sm:$0xf]
          %v4540 = vld [vmem:[%s4501 + $0x98] sm:$0xf]
          %v4541 = vld [vmem:[%s4501 + $0x9c] sm:$0xf]
          %v4542 = vld [vmem:[%s4501 + $0xa0] sm:$0xf]
          %v4543 = vld [vmem:[%s4501 + $0xa4] sm:$0xf]
          %v4544 = vld [vmem:[%s4501 + $0xa8] sm:$0xf]
          %v4545 = vld [vmem:[%s4501 + $0xac] sm:$0xf]
          %v4546 = vld [vmem:[%s4501 + $0xb0] sm:$0xf]
          %v4547 = vld [vmem:[%s4501 + $0xb4] sm:$0xf]
          %v4548 = vld [vmem:[%s4501 + $0xb8] sm:$0xf]
          %v4549 = vld [vmem:[%s4501 + $0xbc] sm:$0xf]
          %v4582 = vunpack.c.l.b16 %v4467
          %v4583 = vunpack.c.h.b16 %v4467
          %v4584 = vunpack.c.l.b16 %v4468
          %v4585 = vunpack.c.l.b16 %v4469
          %v4586 = vunpack.c.h.b16 %v4469
          %v4587 = vunpack.c.l.b16 %v4470
          %v4588 = vunpack.c.l.b16 %v4471
          %v4589 = vunpack.c.h.b16 %v4471
          %v4590 = vunpack.c.l.b16 %v4472
          %v4591 = vunpack.c.l.b16 %v4473
          %v4592 = vunpack.c.h.b16 %v4473
          %v4593 = vunpack.c.l.b16 %v4474
          %v4594 = vunpack.c.l.b16 %v4475
          %v4595 = vunpack.c.h.b16 %v4475
          %v4596 = vunpack.c.l.b16 %v4476
          %v4597 = vunpack.c.l.b16 %v4477
          %v4598 = vunpack.c.h.b16 %v4477
          %v4599 = vunpack.c.l.b16 %v4478
          %v4600 = vunpack.c.l.b16 %v4479
          %v4601 = vunpack.c.h.b16 %v4479
          %v4602 = vunpack.c.l.b16 %v4480
          %v4603 = vunpack.c.l.b16 %v4481
          %v4604 = vunpack.c.h.b16 %v4481
          %v4605 = vunpack.c.l.b16 %v4482
          %v4606 = vunpack.c.l.b16 %v4483
          %v4607 = vunpack.c.h.b16 %v4483
          %v4608 = vunpack.c.l.b16 %v4484
          %v4609 = vunpack.c.l.b16 %v4485
          %v4610 = vunpack.c.h.b16 %v4485
          %v4611 = vunpack.c.l.b16 %v4486
          %v4612 = vunpack.c.l.b16 %v4487
          %v4613 = vunpack.c.h.b16 %v4487
          %v4614 = vunpack.c.l.b16 %v4488
          %v4615 = vunpack.c.l.b16 %v4489
          %v4616 = vunpack.c.h.b16 %v4489
          %v4617 = vunpack.c.l.b16 %v4490
          %v4618 = vunpack.c.l.b16 %v4491
          %v4619 = vunpack.c.h.b16 %v4491
          %v4620 = vunpack.c.l.b16 %v4492
          %v4621 = vunpack.c.l.b16 %v4493
          %v4622 = vunpack.c.h.b16 %v4493
          %v4623 = vunpack.c.l.b16 %v4494
          %v4624 = vunpack.c.l.b16 %v4495
          %v4625 = vunpack.c.h.b16 %v4495
          %v4626 = vunpack.c.l.b16 %v4496
          %v4627 = vunpack.c.l.b16 %v4497
          %v4628 = vunpack.c.h.b16 %v4497
          %v4629 = vunpack.c.l.b16 %v4498
          %v4630 = vpack.c.b16 %v4585, %v4582
          %v4631 = vpack.c.b16 %v4586, %v4583
          %v4632 = vpack.c.b16 %v4587, %v4584
          %v4633 = vpack.c.b16 %v4591, %v4588
          %v4634 = vpack.c.b16 %v4592, %v4589
          %v4635 = vpack.c.b16 %v4593, %v4590
          %v4636 = vpack.c.b16 %v4597, %v4594
          %v4637 = vpack.c.b16 %v4598, %v4595
          %v4638 = vpack.c.b16 %v4599, %v4596
          %v4639 = vpack.c.b16 %v4603, %v4600
          %v4640 = vpack.c.b16 %v4604, %v4601
          %v4641 = vpack.c.b16 %v4605, %v4602
          %v4642 = vpack.c.b16 %v4609, %v4606
          %v4643 = vpack.c.b16 %v4610, %v4607
          %v4644 = vpack.c.b16 %v4611, %v4608
          %v4645 = vpack.c.b16 %v4615, %v4612
          %v4646 = vpack.c.b16 %v4616, %v4613
          %v4647 = vpack.c.b16 %v4617, %v4614
          %v4648 = vpack.c.b16 %v4621, %v4618
          %v4649 = vpack.c.b16 %v4622, %v4619
          %v4650 = vpack.c.b16 %v4623, %v4620
          %v4651 = vpack.c.b16 %v4627, %v4624
          %v4652 = vpack.c.b16 %v4628, %v4625
          %v4653 = vpack.c.b16 %v4629, %v4626
          %v4726 = vunpack.c.l.b16 %v4502
          %v4727 = vunpack.c.l.b16 %v4503
          %v4728 = vunpack.c.l.b16 %v4504
          %v4729 = vunpack.c.l.b16 %v4505
          %v4730 = vunpack.c.l.b16 %v4506
          %v4731 = vunpack.c.l.b16 %v4507
          %v4732 = vunpack.c.l.b16 %v4508
          %v4733 = vunpack.c.l.b16 %v4509
          %v4734 = vunpack.c.l.b16 %v4510
          %v4735 = vunpack.c.l.b16 %v4511
          %v4736 = vunpack.c.l.b16 %v4512
          %v4737 = vunpack.c.l.b16 %v4513
          %v4738 = vunpack.c.l.b16 %v4514
          %v4739 = vunpack.c.l.b16 %v4515
          %v4740 = vunpack.c.l.b16 %v4516
          %v4741 = vunpack.c.l.b16 %v4517
          %v4742 = vunpack.c.l.b16 %v4518
          %v4743 = vunpack.c.l.b16 %v4519
          %v4744 = vunpack.c.l.b16 %v4520
          %v4745 = vunpack.c.l.b16 %v4521
          %v4746 = vunpack.c.l.b16 %v4522
          %v4747 = vunpack.c.l.b16 %v4523
          %v4748 = vunpack.c.l.b16 %v4524
          %v4749 = vunpack.c.l.b16 %v4525
          %v4750 = vunpack.c.l.b16 %v4526
          %v4751 = vunpack.c.l.b16 %v4527
          %v4752 = vunpack.c.l.b16 %v4528
          %v4753 = vunpack.c.l.b16 %v4529
          %v4754 = vunpack.c.l.b16 %v4530
          %v4755 = vunpack.c.l.b16 %v4531
          %v4756 = vunpack.c.l.b16 %v4532
          %v4757 = vunpack.c.l.b16 %v4533
          %v4758 = vunpack.c.l.b16 %v4534
          %v4759 = vunpack.c.l.b16 %v4535
          %v4760 = vunpack.c.l.b16 %v4536
          %v4761 = vunpack.c.l.b16 %v4537
          %v4762 = vunpack.c.l.b16 %v4538
          %v4763 = vunpack.c.l.b16 %v4539
          %v4764 = vunpack.c.l.b16 %v4540
          %v4765 = vunpack.c.l.b16 %v4541
          %v4766 = vunpack.c.l.b16 %v4542
          %v4767 = vunpack.c.l.b16 %v4543
          %v4768 = vunpack.c.l.b16 %v4544
          %v4769 = vunpack.c.l.b16 %v4545
          %v4770 = vunpack.c.l.b16 %v4546
          %v4771 = vunpack.c.l.b16 %v4547
          %v4772 = vunpack.c.l.b16 %v4548
          %v4773 = vunpack.c.l.b16 %v4549
          %v4774 = vpack.c.b16 %v4727, %v4726
          %v4775 = vpack.c.b16 %v4729, %v4728
          %v4776 = vpack.c.b16 %v4731, %v4730
          %v4777 = vpack.c.b16 %v4733, %v4732
          %v4778 = vpack.c.b16 %v4735, %v4734
          %v4779 = vpack.c.b16 %v4737, %v4736
          %v4780 = vpack.c.b16 %v4739, %v4738
          %v4781 = vpack.c.b16 %v4741, %v4740
          %v4782 = vpack.c.b16 %v4743, %v4742
          %v4783 = vpack.c.b16 %v4745, %v4744
          %v4784 = vpack.c.b16 %v4747, %v4746
          %v4785 = vpack.c.b16 %v4749, %v4748
          %v4786 = vpack.c.b16 %v4751, %v4750
          %v4787 = vpack.c.b16 %v4753, %v4752
          %v4788 = vpack.c.b16 %v4755, %v4754
          %v4789 = vpack.c.b16 %v4757, %v4756
          %v4790 = vpack.c.b16 %v4759, %v4758
          %v4791 = vpack.c.b16 %v4761, %v4760
          %v4792 = vpack.c.b16 %v4763, %v4762
          %v4793 = vpack.c.b16 %v4765, %v4764
          %v4794 = vpack.c.b16 %v4767, %v4766
          %v4795 = vpack.c.b16 %v4769, %v4768
          %v4796 = vpack.c.b16 %v4771, %v4770
          %v4797 = vpack.c.b16 %v4773, %v4772
          %4822 = vmatprep.subr.bf16.mxu0 0
          %4823 = vmatpush1.bf16.msra.mxu0 %v4774
          %4824 = vmatprep.subr.bf16.mxu0 0
          %4825 = vmatpush1.bf16.msra.mxu0 %v4775
          %4826 = vmatprep.subr.bf16.mxu0 0
          %4827 = vmatpush1.bf16.msra.mxu0 %v4776
          %4828 = vmatprep.subr.bf16.mxu0 0
          %4829 = vmatpush1.bf16.msra.mxu0 %v4777
          %4830 = vmatprep.subr.bf16.mxu0 0
          %4831 = vmatpush1.bf16.msra.mxu0 %v4778
          %4832 = vmatprep.subr.bf16.mxu0 0
          %4833 = vmatpush1.bf16.msra.mxu0 %v4779
          %4834 = vmatprep.subr.bf16.mxu0 0
          %4835 = vmatpush1.bf16.msra.mxu0 %v4780
          %4836 = vmatprep.subr.bf16.mxu0 0
          %4837 = vmatpush1.bf16.msra.mxu0 %v4781
          %4838 = vmatprep.subr.bf16.mxu0 0
          %4839 = vmatpush1.bf16.msra.mxu0 %v4782
          %4840 = vmatprep.subr.bf16.mxu0 0
          %4841 = vmatpush1.bf16.msra.mxu0 %v4783
          %4842 = vmatprep.subr.bf16.mxu0 0
          %4843 = vmatpush1.bf16.msra.mxu0 %v4784
          %4844 = vmatprep.subr.bf16.mxu0 0
          %4845 = vmatpush1.bf16.msra.mxu0 %v4785
          %4846 = vmatprep.subr.bf16.mxu0 0
          %4847 = vmatpush1.bf16.msra.mxu0 %v4786
          %4848 = vmatprep.subr.bf16.mxu0 0
          %4849 = vmatpush1.bf16.msra.mxu0 %v4787
          %4850 = vmatprep.subr.bf16.mxu0 0
          %4851 = vmatpush1.bf16.msra.mxu0 %v4788
          %4852 = vmatprep.subr.bf16.mxu0 0
          %4853 = vmatpush1.bf16.msra.mxu0 %v4789
          %4854 = vmatprep.mubr.bf16.mxu0 %v4631
          %4855 = vmatmul.mubr.bf16.gmra.mrb[0].mxu0 %v4630
          %v4856 = vpop.f32.mrb[0].mxu0
          %v4857 = vadd.f32 0.0, %v4856
          %v4858 = vpop.f32.mrb[0].mxu0
          %v4859 = vpop.f32.mrb[0].mxu0
          %v4860 = vadd.f32 0.0, %v4859
          %v4861 = vpop.f32.mrb[0].mxu0
          %4862 = vmatprep.mubr.bf16.mxu0 %v4634
          %4863 = vmatmul.mubr.bf16.gmra.mrb[0].mxu0 %v4633
          %v4864 = vpop.f32.mrb[0].mxu0
          %v4865 = vadd.f32 0.0, %v4864
          %v4866 = vpop.f32.mrb[0].mxu0
          %v4867 = vpop.f32.mrb[0].mxu0
          %v4868 = vadd.f32 0.0, %v4867
          %v4869 = vpop.f32.mrb[0].mxu0
          %4870 = vmatprep.mubr.bf16.mxu0 %v4637
          %4871 = vmatmul.mubr.bf16.gmra.mrb[0].mxu0 %v4636
          %v4872 = vpop.f32.mrb[0].mxu0
          %v4873 = vadd.f32 0.0, %v4872
          %v4874 = vpop.f32.mrb[0].mxu0
          %v4875 = vpop.f32.mrb[0].mxu0
          %v4876 = vadd.f32 0.0, %v4875
          %v4877 = vpop.f32.mrb[0].mxu0
          %4878 = vmatprep.mubr.bf16.mxu0 %v4640
          %4879 = vmatmul.mubr.bf16.gmra.mrb[0].mxu0 %v4639
          %v4880 = vpop.f32.mrb[0].mxu0
          %v4881 = vadd.f32 0.0, %v4880
          %v4882 = vpop.f32.mrb[0].mxu0
          %v4883 = vpop.f32.mrb[0].mxu0
          %v4884 = vadd.f32 0.0, %v4883
          %v4885 = vpop.f32.mrb[0].mxu0
          %4886 = vmatprep.mubr.bf16.mxu0 %v4643
          %4887 = vmatmul.mubr.bf16.gmra.mrb[0].mxu0 %v4642
          %v4888 = vpop.f32.mrb[0].mxu0
          %v4889 = vadd.f32 0.0, %v4888
          %v4890 = vpop.f32.mrb[0].mxu0
          %v4891 = vpop.f32.mrb[0].mxu0
          %v4892 = vadd.f32 0.0, %v4891
          %v4893 = vpop.f32.mrb[0].mxu0
          %4894 = vmatprep.mubr.bf16.mxu0 %v4646
          %4895 = vmatmul.mubr.bf16.gmra.mrb[0].mxu0 %v4645
          %v4896 = vpop.f32.mrb[0].mxu0
          %v4897 = vadd.f32 0.0, %v4896
          %v4898 = vpop.f32.mrb[0].mxu0
          %v4899 = vpop.f32.mrb[0].mxu0
          %v4900 = vadd.f32 0.0, %v4899
          %v4901 = vpop.f32.mrb[0].mxu0
          %4902 = vmatprep.mubr.bf16.mxu0 %v4649
          %4903 = vmatmul.mubr.bf16.gmra.mrb[0].mxu0 %v4648
          %v4904 = vpop.f32.mrb[0].mxu0
          %v4905 = vadd.f32 0.0, %v4904
          %v4906 = vpop.f32.mrb[0].mxu0
          %v4907 = vpop.f32.mrb[0].mxu0
          %v4908 = vadd.f32 0.0, %v4907
          %v4909 = vpop.f32.mrb[0].mxu0
          %4910 = vmatprep.mubr.bf16.mxu0 %v4652
          %4911 = vmatmul.mubr.bf16.gmra.mrb[0].mxu0 %v4651
          %v4912 = vpop.f32.mrb[0].mxu0
          %v4913 = vadd.f32 0.0, %v4912
          %v4914 = vpop.f32.mrb[0].mxu0
          %v4915 = vpop.f32.mrb[0].mxu0
          %v4916 = vadd.f32 0.0, %v4915
          %v4917 = vpop.f32.mrb[0].mxu0
          %4918 = vdwg.mxu0
          %4919 = vmatprep.subr.bf16.mxu0 0
          %4920 = vmatpush1.bf16.msra.mxu0 %v4790
          %4921 = vmatprep.subr.bf16.mxu0 0
          %4922 = vmatpush1.bf16.msra.mxu0 %v4791
          %4923 = vmatprep.subr.bf16.mxu0 0
          %4924 = vmatpush1.bf16.msra.mxu0 %v4792
          %4925 = vmatprep.subr.bf16.mxu0 0
          %4926 = vmatpush1.bf16.msra.mxu0 %v4793
          %4927 = vmatprep.subr.bf16.mxu0 0
          %4928 = vmatpush1.bf16.msra.mxu0 %v4794
          %4929 = vmatprep.subr.bf16.mxu0 0
          %4930 = vmatpush1.bf16.msra.mxu0 %v4795
          %4931 = vmatprep.subr.bf16.mxu0 0
          %4932 = vmatpush1.bf16.msra.mxu0 %v4796
          %4933 = vmatprep.subr.bf16.mxu0 0
          %4934 = vmatpush1.bf16.msra.mxu0 %v4797
          %4935 = vmatprep.subr.bf16.mxu0 0
          %4936 = vmatpush1.bf16.msra.mxu0 0
          %4937 = vmatprep.subr.bf16.mxu0 0
          %4938 = vmatpush1.bf16.msra.mxu0 0
          %4939 = vmatprep.subr.bf16.mxu0 0
          %4940 = vmatpush1.bf16.msra.mxu0 0
          %4941 = vmatprep.subr.bf16.mxu0 0
          %4942 = vmatpush1.bf16.msra.mxu0 0
          %4943 = vmatprep.subr.bf16.mxu0 0
          %4944 = vmatpush1.bf16.msra.mxu0 0
          %4945 = vmatprep.subr.bf16.mxu0 0
          %4946 = vmatpush1.bf16.msra.mxu0 0
          %4947 = vmatprep.subr.bf16.mxu0 0
          %4948 = vmatpush1.bf16.msra.mxu0 0
          %4949 = vmatprep.subr.bf16.mxu0 0
          %4950 = vmatpush1.bf16.msra.mxu0 0
          %4951 = vmatprep.mubr.bf16.mxu0 0
          %4952 = vmatmul.mubr.bf16.gmra.mrb[0].mxu0 %v4632
          %v4953 = vpop.f32.mrb[0].mxu0
          %v4954 = vadd.f32 %v4857, %v4953
          %v4955 = vpop.f32.mrb[0].mxu0
          %v4956 = vpop.f32.mrb[0].mxu0
          %v4957 = vadd.f32 %v4860, %v4956
          %v4958 = vpop.f32.mrb[0].mxu0
          %4959 = vmatprep.mubr.bf16.mxu0 0
          %4960 = vmatmul.mubr.bf16.gmra.mrb[0].mxu0 %v4635
          %v4961 = vpop.f32.mrb[0].mxu0
          %v4962 = vadd.f32 %v4865, %v4961
          %v4963 = vpop.f32.mrb[0].mxu0
          %v4964 = vpop.f32.mrb[0].mxu0
          %v4965 = vadd.f32 %v4868, %v4964
          %v4966 = vpop.f32.mrb[0].mxu0
          %4967 = vmatprep.mubr.bf16.mxu0 0
          %4968 = vmatmul.mubr.bf16.gmra.mrb[0].mxu0 %v4638
          %v4969 = vpop.f32.mrb[0].mxu0
          %v4970 = vadd.f32 %v4873, %v4969
          %v4971 = vpop.f32.mrb[0].mxu0
          %v4972 = vpop.f32.mrb[0].mxu0
          %v4973 = vadd.f32 %v4876, %v4972
          %v4974 = vpop.f32.mrb[0].mxu0
          %4975 = vmatprep.mubr.bf16.mxu0 0
          %4976 = vmatmul.mubr.bf16.gmra.mrb[0].mxu0 %v4641
          %v4977 = vpop.f32.mrb[0].mxu0
          %v4978 = vadd.f32 %v4881, %v4977
          %v4979 = vpop.f32.mrb[0].mxu0
          %v4980 = vpop.f32.mrb[0].mxu0
          %v4981 = vadd.f32 %v4884, %v4980
          %v4982 = vpop.f32.mrb[0].mxu0
          %4983 = vmatprep.mubr.bf16.mxu0 0
          %4984 = vmatmul.mubr.bf16.gmra.mrb[0].mxu0 %v4644
          %v4985 = vpop.f32.mrb[0].mxu0
          %v4986 = vadd.f32 %v4889, %v4985
          %v4987 = vpop.f32.mrb[0].mxu0
          %v4988 = vpop.f32.mrb[0].mxu0
          %v4989 = vadd.f32 %v4892, %v4988
          %v4990 = vpop.f32.mrb[0].mxu0
          %4991 = vmatprep.mubr.bf16.mxu0 0
          %4992 = vmatmul.mubr.bf16.gmra.mrb[0].mxu0 %v4647
          %v4993 = vpop.f32.mrb[0].mxu0
          %v4994 = vadd.f32 %v4897, %v4993
          %v4995 = vpop.f32.mrb[0].mxu0
          %v4996 = vpop.f32.mrb[0].mxu0
          %v4997 = vadd.f32 %v4900, %v4996
          %v4998 = vpop.f32.mrb[0].mxu0
          %4999 = vmatprep.mubr.bf16.mxu0 0
          %5000 = vmatmul.mubr.bf16.gmra.mrb[0].mxu0 %v4650
          %v5001 = vpop.f32.mrb[0].mxu0
          %v5002 = vadd.f32 %v4905, %v5001
          %v5003 = vpop.f32.mrb[0].mxu0
          %v5004 = vpop.f32.mrb[0].mxu0
          %v5005 = vadd.f32 %v4908, %v5004
          %v5006 = vpop.f32.mrb[0].mxu0
          %5007 = vmatprep.mubr.bf16.mxu0 0
          %5008 = vmatmul.mubr.bf16.gmra.mrb[0].mxu0 %v4653
          %v5009 = vpop.f32.mrb[0].mxu0
          %v5010 = vadd.f32 %v4913, %v5009
          %v5011 = vpop.f32.mrb[0].mxu0
          %v5012 = vpop.f32.mrb[0].mxu0
          %v5013 = vadd.f32 %v4916, %v5012
          %v5014 = vpop.f32.mrb[0].mxu0
          %5015 = vdwg.mxu0
          %v5016 = vadd.f32 %v4447, %v4954
          %v5017 = vadd.f32 %v4448, %v4957
          %v5018 = vadd.f32 %v4449, %v4962
          %v5019 = vadd.f32 %v4450, %v4965
          %v5020 = vadd.f32 %v4451, %v4970
          %v5021 = vadd.f32 %v4452, %v4973
          %v5022 = vadd.f32 %v4453, %v4978
          %v5023 = vadd.f32 %v4454, %v4981
          %v5024 = vadd.f32 %v4455, %v4986
          %v5025 = vadd.f32 %v4456, %v4989
          %v5026 = vadd.f32 %v4457, %v4994
          %v5027 = vadd.f32 %v4458, %v4997
          %v5028 = vadd.f32 %v4459, %v5002
          %v5029 = vadd.f32 %v4460, %v5005
          %v5030 = vadd.f32 %v4461, %v5010
          %v5031 = vadd.f32 %v4462, %v5013
          %s5032 = sadd.s32 3, %s4464
          %s5033 = smul.addr %s5032, 4
          %s5034 = scalar_lea.vmem [#allocation2], %s5033
          %v5035 = vld [vmem:[%s5034] sm:$0xff]
          %v5036 = vld [vmem:[%s5034 + $0x8] sm:$0xf]
          %v5037 = vld [vmem:[%s5034 + $0xc] sm:$0xff]
          %v5038 = vld [vmem:[%s5034 + $0x14] sm:$0xf]
          %v5039 = vld [vmem:[%s5034 + $0x18] sm:$0xff]
          %v5040 = vld [vmem:[%s5034 + $0x20] sm:$0xf]
          %v5041 = vld [vmem:[%s5034 + $0x24] sm:$0xff]
          %v5042 = vld [vmem:[%s5034 + $0x2c] sm:$0xf]
          %v5043 = vld [vmem:[%s5034 + $0x30] sm:$0xff]
          %v5044 = vld [vmem:[%s5034 + $0x38] sm:$0xf]
          %v5045 = vld [vmem:[%s5034 + $0x3c] sm:$0xff]
          %v5046 = vld [vmem:[%s5034 + $0x44] sm:$0xf]
          %v5047 = vld [vmem:[%s5034 + $0x48] sm:$0xff]
          %v5048 = vld [vmem:[%s5034 + $0x50] sm:$0xf]
          %v5049 = vld [vmem:[%s5034 + $0x54] sm:$0xff]
          %v5050 = vld [vmem:[%s5034 + $0x5c] sm:$0xf]
          %v5051 = vld [vmem:[%s5034 + $0x78] sm:$0xff]
          %v5052 = vld [vmem:[%s5034 + $0x80] sm:$0xf]
          %v5053 = vld [vmem:[%s5034 + $0x84] sm:$0xff]
          %v5054 = vld [vmem:[%s5034 + $0x8c] sm:$0xf]
          %v5055 = vld [vmem:[%s5034 + $0x90] sm:$0xff]
          %v5056 = vld [vmem:[%s5034 + $0x98] sm:$0xf]
          %v5057 = vld [vmem:[%s5034 + $0x9c] sm:$0xff]
          %v5058 = vld [vmem:[%s5034 + $0xa4] sm:$0xf]
          %v5059 = vld [vmem:[%s5034 + $0xa8] sm:$0xff]
          %v5060 = vld [vmem:[%s5034 + $0xb0] sm:$0xf]
          %v5061 = vld [vmem:[%s5034 + $0xb4] sm:$0xff]
          %v5062 = vld [vmem:[%s5034 + $0xbc] sm:$0xf]
          %v5063 = vld [vmem:[%s5034 + $0xc0] sm:$0xff]
          %v5064 = vld [vmem:[%s5034 + $0xc8] sm:$0xf]
          %v5065 = vld [vmem:[%s5034 + $0xcc] sm:$0xff]
          %v5066 = vld [vmem:[%s5034 + $0xd4] sm:$0xf]
          %s5067 = sadd.s32 336, %s1121
          %s5068 = smul.addr %s5067, 4
          %s5069 = scalar_lea.vmem [#allocation4], %s5068
          %v5070 = vld [vmem:[%s5069] sm:$0xf]
          %v5071 = vld [vmem:[%s5069 + $0x4] sm:$0xf]
          %v5072 = vld [vmem:[%s5069 + $0x8] sm:$0xf]
          %v5073 = vld [vmem:[%s5069 + $0xc] sm:$0xf]
          %v5074 = vld [vmem:[%s5069 + $0x10] sm:$0xf]
          %v5075 = vld [vmem:[%s5069 + $0x14] sm:$0xf]
          %v5076 = vld [vmem:[%s5069 + $0x18] sm:$0xf]
          %v5077 = vld [vmem:[%s5069 + $0x1c] sm:$0xf]
          %v5078 = vld [vmem:[%s5069 + $0x20] sm:$0xf]
          %v5079 = vld [vmem:[%s5069 + $0x24] sm:$0xf]
          %v5080 = vld [vmem:[%s5069 + $0x28] sm:$0xf]
          %v5081 = vld [vmem:[%s5069 + $0x2c] sm:$0xf]
          %v5082 = vld [vmem:[%s5069 + $0x30] sm:$0xf]
          %v5083 = vld [vmem:[%s5069 + $0x34] sm:$0xf]
          %v5084 = vld [vmem:[%s5069 + $0x38] sm:$0xf]
          %v5085 = vld [vmem:[%s5069 + $0x3c] sm:$0xf]
          %v5086 = vld [vmem:[%s5069 + $0x40] sm:$0xf]
          %v5087 = vld [vmem:[%s5069 + $0x44] sm:$0xf]
          %v5088 = vld [vmem:[%s5069 + $0x48] sm:$0xf]
          %v5089 = vld [vmem:[%s5069 + $0x4c] sm:$0xf]
          %v5090 = vld [vmem:[%s5069 + $0x50] sm:$0xf]
          %v5091 = vld [vmem:[%s5069 + $0x54] sm:$0xf]
          %v5092 = vld [vmem:[%s5069 + $0x58] sm:$0xf]
          %v5093 = vld [vmem:[%s5069 + $0x5c] sm:$0xf]
          %v5094 = vld [vmem:[%s5069 + $0x60] sm:$0xf]
          %v5095 = vld [vmem:[%s5069 + $0x64] sm:$0xf]
          %v5096 = vld [vmem:[%s5069 + $0x68] sm:$0xf]
          %v5097 = vld [vmem:[%s5069 + $0x6c] sm:$0xf]
          %v5098 = vld [vmem:[%s5069 + $0x70] sm:$0xf]
          %v5099 = vld [vmem:[%s5069 + $0x74] sm:$0xf]
          %v5100 = vld [vmem:[%s5069 + $0x78] sm:$0xf]
          %v5101 = vld [vmem:[%s5069 + $0x7c] sm:$0xf]
          %v5102 = vld [vmem:[%s5069 + $0x80] sm:$0xf]
          %v5103 = vld [vmem:[%s5069 + $0x84] sm:$0xf]
          %v5104 = vld [vmem:[%s5069 + $0x88] sm:$0xf]
          %v5105 = vld [vmem:[%s5069 + $0x8c] sm:$0xf]
          %v5106 = vld [vmem:[%s5069 + $0x90] sm:$0xf]
          %v5107 = vld [vmem:[%s5069 + $0x94] sm:$0xf]
          %v5108 = vld [vmem:[%s5069 + $0x98] sm:$0xf]
          %v5109 = vld [vmem:[%s5069 + $0x9c] sm:$0xf]
          %v5110 = vld [vmem:[%s5069 + $0xa0] sm:$0xf]
          %v5111 = vld [vmem:[%s5069 + $0xa4] sm:$0xf]
          %v5112 = vld [vmem:[%s5069 + $0xa8] sm:$0xf]
          %v5113 = vld [vmem:[%s5069 + $0xac] sm:$0xf]
          %v5114 = vld [vmem:[%s5069 + $0xb0] sm:$0xf]
          %v5115 = vld [vmem:[%s5069 + $0xb4] sm:$0xf]
          %v5116 = vld [vmem:[%s5069 + $0xb8] sm:$0xf]
          %v5117 = vld [vmem:[%s5069 + $0xbc] sm:$0xf]
          %v5150 = vunpack.c.l.b16 %v5035
          %v5151 = vunpack.c.h.b16 %v5035
          %v5152 = vunpack.c.l.b16 %v5036
          %v5153 = vunpack.c.l.b16 %v5037
          %v5154 = vunpack.c.h.b16 %v5037
          %v5155 = vunpack.c.l.b16 %v5038
          %v5156 = vunpack.c.l.b16 %v5039
          %v5157 = vunpack.c.h.b16 %v5039
          %v5158 = vunpack.c.l.b16 %v5040
          %v5159 = vunpack.c.l.b16 %v5041
          %v5160 = vunpack.c.h.b16 %v5041
          %v5161 = vunpack.c.l.b16 %v5042
          %v5162 = vunpack.c.l.b16 %v5043
          %v5163 = vunpack.c.h.b16 %v5043
          %v5164 = vunpack.c.l.b16 %v5044
          %v5165 = vunpack.c.l.b16 %v5045
          %v5166 = vunpack.c.h.b16 %v5045
          %v5167 = vunpack.c.l.b16 %v5046
          %v5168 = vunpack.c.l.b16 %v5047
          %v5169 = vunpack.c.h.b16 %v5047
          %v5170 = vunpack.c.l.b16 %v5048
          %v5171 = vunpack.c.l.b16 %v5049
          %v5172 = vunpack.c.h.b16 %v5049
          %v5173 = vunpack.c.l.b16 %v5050
          %v5174 = vunpack.c.l.b16 %v5051
          %v5175 = vunpack.c.h.b16 %v5051
          %v5176 = vunpack.c.l.b16 %v5052
          %v5177 = vunpack.c.l.b16 %v5053
          %v5178 = vunpack.c.h.b16 %v5053
          %v5179 = vunpack.c.l.b16 %v5054
          %v5180 = vunpack.c.l.b16 %v5055
          %v5181 = vunpack.c.h.b16 %v5055
          %v5182 = vunpack.c.l.b16 %v5056
          %v5183 = vunpack.c.l.b16 %v5057
          %v5184 = vunpack.c.h.b16 %v5057
          %v5185 = vunpack.c.l.b16 %v5058
          %v5186 = vunpack.c.l.b16 %v5059
          %v5187 = vunpack.c.h.b16 %v5059
          %v5188 = vunpack.c.l.b16 %v5060
          %v5189 = vunpack.c.l.b16 %v5061
          %v5190 = vunpack.c.h.b16 %v5061
          %v5191 = vunpack.c.l.b16 %v5062
          %v5192 = vunpack.c.l.b16 %v5063
          %v5193 = vunpack.c.h.b16 %v5063
          %v5194 = vunpack.c.l.b16 %v5064
          %v5195 = vunpack.c.l.b16 %v5065
          %v5196 = vunpack.c.h.b16 %v5065
          %v5197 = vunpack.c.l.b16 %v5066
          %v5198 = vpack.c.b16 %v5153, %v5150
          %v5199 = vpack.c.b16 %v5154, %v5151
          %v5200 = vpack.c.b16 %v5155, %v5152
          %v5201 = vpack.c.b16 %v5159, %v5156
          %v5202 = vpack.c.b16 %v5160, %v5157
          %v5203 = vpack.c.b16 %v5161, %v5158
          %v5204 = vpack.c.b16 %v5165, %v5162
          %v5205 = vpack.c.b16 %v5166, %v5163
          %v5206 = vpack.c.b16 %v5167, %v5164
          %v5207 = vpack.c.b16 %v5171, %v5168
          %v5208 = vpack.c.b16 %v5172, %v5169
          %v5209 = vpack.c.b16 %v5173, %v5170
          %v5210 = vpack.c.b16 %v5177, %v5174
          %v5211 = vpack.c.b16 %v5178, %v5175
          %v5212 = vpack.c.b16 %v5179, %v5176
          %v5213 = vpack.c.b16 %v5183, %v5180
          %v5214 = vpack.c.b16 %v5184, %v5181
          %v5215 = vpack.c.b16 %v5185, %v5182
          %v5216 = vpack.c.b16 %v5189, %v5186
          %v5217 = vpack.c.b16 %v5190, %v5187
          %v5218 = vpack.c.b16 %v5191, %v5188
          %v5219 = vpack.c.b16 %v5195, %v5192
          %v5220 = vpack.c.b16 %v5196, %v5193
          %v5221 = vpack.c.b16 %v5197, %v5194
          %v5294 = vunpack.c.l.b16 %v5070
          %v5295 = vunpack.c.l.b16 %v5071
          %v5296 = vunpack.c.l.b16 %v5072
          %v5297 = vunpack.c.l.b16 %v5073
          %v5298 = vunpack.c.l.b16 %v5074
          %v5299 = vunpack.c.l.b16 %v5075
          %v5300 = vunpack.c.l.b16 %v5076
          %v5301 = vunpack.c.l.b16 %v5077
          %v5302 = vunpack.c.l.b16 %v5078
          %v5303 = vunpack.c.l.b16 %v5079
          %v5304 = vunpack.c.l.b16 %v5080
          %v5305 = vunpack.c.l.b16 %v5081
          %v5306 = vunpack.c.l.b16 %v5082
          %v5307 = vunpack.c.l.b16 %v5083
          %v5308 = vunpack.c.l.b16 %v5084
          %v5309 = vunpack.c.l.b16 %v5085
          %v5310 = vunpack.c.l.b16 %v5086
          %v5311 = vunpack.c.l.b16 %v5087
          %v5312 = vunpack.c.l.b16 %v5088
          %v5313 = vunpack.c.l.b16 %v5089
          %v5314 = vunpack.c.l.b16 %v5090
          %v5315 = vunpack.c.l.b16 %v5091
          %v5316 = vunpack.c.l.b16 %v5092
          %v5317 = vunpack.c.l.b16 %v5093
          %v5318 = vunpack.c.l.b16 %v5094
          %v5319 = vunpack.c.l.b16 %v5095
          %v5320 = vunpack.c.l.b16 %v5096
          %v5321 = vunpack.c.l.b16 %v5097
          %v5322 = vunpack.c.l.b16 %v5098
          %v5323 = vunpack.c.l.b16 %v5099
          %v5324 = vunpack.c.l.b16 %v5100
          %v5325 = vunpack.c.l.b16 %v5101
          %v5326 = vunpack.c.l.b16 %v5102
          %v5327 = vunpack.c.l.b16 %v5103
          %v5328 = vunpack.c.l.b16 %v5104
          %v5329 = vunpack.c.l.b16 %v5105
          %v5330 = vunpack.c.l.b16 %v5106
          %v5331 = vunpack.c.l.b16 %v5107
          %v5332 = vunpack.c.l.b16 %v5108
          %v5333 = vunpack.c.l.b16 %v5109
          %v5334 = vunpack.c.l.b16 %v5110
          %v5335 = vunpack.c.l.b16 %v5111
          %v5336 = vunpack.c.l.b16 %v5112
          %v5337 = vunpack.c.l.b16 %v5113
          %v5338 = vunpack.c.l.b16 %v5114
          %v5339 = vunpack.c.l.b16 %v5115
          %v5340 = vunpack.c.l.b16 %v5116
          %v5341 = vunpack.c.l.b16 %v5117
          %v5342 = vpack.c.b16 %v5295, %v5294
          %v5343 = vpack.c.b16 %v5297, %v5296
          %v5344 = vpack.c.b16 %v5299, %v5298
          %v5345 = vpack.c.b16 %v5301, %v5300
          %v5346 = vpack.c.b16 %v5303, %v5302
          %v5347 = vpack.c.b16 %v5305, %v5304
          %v5348 = vpack.c.b16 %v5307, %v5306
          %v5349 = vpack.c.b16 %v5309, %v5308
          %v5350 = vpack.c.b16 %v5311, %v5310
          %v5351 = vpack.c.b16 %v5313, %v5312
          %v5352 = vpack.c.b16 %v5315, %v5314
          %v5353 = vpack.c.b16 %v5317, %v5316
          %v5354 = vpack.c.b16 %v5319, %v5318
          %v5355 = vpack.c.b16 %v5321, %v5320
          %v5356 = vpack.c.b16 %v5323, %v5322
          %v5357 = vpack.c.b16 %v5325, %v5324
          %v5358 = vpack.c.b16 %v5327, %v5326
          %v5359 = vpack.c.b16 %v5329, %v5328
          %v5360 = vpack.c.b16 %v5331, %v5330
          %v5361 = vpack.c.b16 %v5333, %v5332
          %v5362 = vpack.c.b16 %v5335, %v5334
          %v5363 = vpack.c.b16 %v5337, %v5336
          %v5364 = vpack.c.b16 %v5339, %v5338
          %v5365 = vpack.c.b16 %v5341, %v5340
          %5390 = vmatprep.subr.bf16.mxu0 0
          %5391 = vmatpush1.bf16.msra.mxu0 %v5342
          %5392 = vmatprep.subr.bf16.mxu0 0
          %5393 = vmatpush1.bf16.msra.mxu0 %v5343
          %5394 = vmatprep.subr.bf16.mxu0 0
          %5395 = vmatpush1.bf16.msra.mxu0 %v5344
          %5396 = vmatprep.subr.bf16.mxu0 0
          %5397 = vmatpush1.bf16.msra.mxu0 %v5345
          %5398 = vmatprep.subr.bf16.mxu0 0
          %5399 = vmatpush1.bf16.msra.mxu0 %v5346
          %5400 = vmatprep.subr.bf16.mxu0 0
          %5401 = vmatpush1.bf16.msra.mxu0 %v5347
          %5402 = vmatprep.subr.bf16.mxu0 0
          %5403 = vmatpush1.bf16.msra.mxu0 %v5348
          %5404 = vmatprep.subr.bf16.mxu0 0
          %5405 = vmatpush1.bf16.msra.mxu0 %v5349
          %5406 = vmatprep.subr.bf16.mxu0 0
          %5407 = vmatpush1.bf16.msra.mxu0 %v5350
          %5408 = vmatprep.subr.bf16.mxu0 0
          %5409 = vmatpush1.bf16.msra.mxu0 %v5351
          %5410 = vmatprep.subr.bf16.mxu0 0
          %5411 = vmatpush1.bf16.msra.mxu0 %v5352
          %5412 = vmatprep.subr.bf16.mxu0 0
          %5413 = vmatpush1.bf16.msra.mxu0 %v5353
          %5414 = vmatprep.subr.bf16.mxu0 0
          %5415 = vmatpush1.bf16.msra.mxu0 %v5354
          %5416 = vmatprep.subr.bf16.mxu0 0
          %5417 = vmatpush1.bf16.msra.mxu0 %v5355
          %5418 = vmatprep.subr.bf16.mxu0 0
          %5419 = vmatpush1.bf16.msra.mxu0 %v5356
          %5420 = vmatprep.subr.bf16.mxu0 0
          %5421 = vmatpush1.bf16.msra.mxu0 %v5357
          %5422 = vmatprep.mubr.bf16.mxu0 %v5199
          %5423 = vmatmul.mubr.bf16.gmra.mrb[0].mxu0 %v5198
          %v5424 = vpop.f32.mrb[0].mxu0
          %v5425 = vadd.f32 0.0, %v5424
          %v5426 = vpop.f32.mrb[0].mxu0
          %v5427 = vpop.f32.mrb[0].mxu0
          %v5428 = vadd.f32 0.0, %v5427
          %v5429 = vpop.f32.mrb[0].mxu0
          %5430 = vmatprep.mubr.bf16.mxu0 %v5202
          %5431 = vmatmul.mubr.bf16.gmra.mrb[0].mxu0 %v5201
          %v5432 = vpop.f32.mrb[0].mxu0
          %v5433 = vadd.f32 0.0, %v5432
          %v5434 = vpop.f32.mrb[0].mxu0
          %v5435 = vpop.f32.mrb[0].mxu0
          %v5436 = vadd.f32 0.0, %v5435
          %v5437 = vpop.f32.mrb[0].mxu0
          %5438 = vmatprep.mubr.bf16.mxu0 %v5205
          %5439 = vmatmul.mubr.bf16.gmra.mrb[0].mxu0 %v5204
          %v5440 = vpop.f32.mrb[0].mxu0
          %v5441 = vadd.f32 0.0, %v5440
          %v5442 = vpop.f32.mrb[0].mxu0
          %v5443 = vpop.f32.mrb[0].mxu0
          %v5444 = vadd.f32 0.0, %v5443
          %v5445 = vpop.f32.mrb[0].mxu0
          %5446 = vmatprep.mubr.bf16.mxu0 %v5208
          %5447 = vmatmul.mubr.bf16.gmra.mrb[0].mxu0 %v5207
          %v5448 = vpop.f32.mrb[0].mxu0
          %v5449 = vadd.f32 0.0, %v5448
          %v5450 = vpop.f32.mrb[0].mxu0
          %v5451 = vpop.f32.mrb[0].mxu0
          %v5452 = vadd.f32 0.0, %v5451
          %v5453 = vpop.f32.mrb[0].mxu0
          %5454 = vmatprep.mubr.bf16.mxu0 %v5211
          %5455 = vmatmul.mubr.bf16.gmra.mrb[0].mxu0 %v5210
          %v5456 = vpop.f32.mrb[0].mxu0
          %v5457 = vadd.f32 0.0, %v5456
          %v5458 = vpop.f32.mrb[0].mxu0
          %v5459 = vpop.f32.mrb[0].mxu0
          %v5460 = vadd.f32 0.0, %v5459
          %v5461 = vpop.f32.mrb[0].mxu0
          %5462 = vmatprep.mubr.bf16.mxu0 %v5214
          %5463 = vmatmul.mubr.bf16.gmra.mrb[0].mxu0 %v5213
          %v5464 = vpop.f32.mrb[0].mxu0
          %v5465 = vadd.f32 0.0, %v5464
          %v5466 = vpop.f32.mrb[0].mxu0
          %v5467 = vpop.f32.mrb[0].mxu0
          %v5468 = vadd.f32 0.0, %v5467
          %v5469 = vpop.f32.mrb[0].mxu0
          %5470 = vmatprep.mubr.bf16.mxu0 %v5217
          %5471 = vmatmul.mubr.bf16.gmra.mrb[0].mxu0 %v5216
          %v5472 = vpop.f32.mrb[0].mxu0
          %v5473 = vadd.f32 0.0, %v5472
          %v5474 = vpop.f32.mrb[0].mxu0
          %v5475 = vpop.f32.mrb[0].mxu0
          %v5476 = vadd.f32 0.0, %v5475
          %v5477 = vpop.f32.mrb[0].mxu0
          %5478 = vmatprep.mubr.bf16.mxu0 %v5220
          %5479 = vmatmul.mubr.bf16.gmra.mrb[0].mxu0 %v5219
          %v5480 = vpop.f32.mrb[0].mxu0
          %v5481 = vadd.f32 0.0, %v5480
          %v5482 = vpop.f32.mrb[0].mxu0
          %v5483 = vpop.f32.mrb[0].mxu0
          %v5484 = vadd.f32 0.0, %v5483
          %v5485 = vpop.f32.mrb[0].mxu0
          %5486 = vdwg.mxu0
          %5487 = vmatprep.subr.bf16.mxu0 0
          %5488 = vmatpush1.bf16.msra.mxu0 %v5358
          %5489 = vmatprep.subr.bf16.mxu0 0
          %5490 = vmatpush1.bf16.msra.mxu0 %v5359
          %5491 = vmatprep.subr.bf16.mxu0 0
          %5492 = vmatpush1.bf16.msra.mxu0 %v5360
          %5493 = vmatprep.subr.bf16.mxu0 0
          %5494 = vmatpush1.bf16.msra.mxu0 %v5361
          %5495 = vmatprep.subr.bf16.mxu0 0
          %5496 = vmatpush1.bf16.msra.mxu0 %v5362
          %5497 = vmatprep.subr.bf16.mxu0 0
          %5498 = vmatpush1.bf16.msra.mxu0 %v5363
          %5499 = vmatprep.subr.bf16.mxu0 0
          %5500 = vmatpush1.bf16.msra.mxu0 %v5364
          %5501 = vmatprep.subr.bf16.mxu0 0
          %5502 = vmatpush1.bf16.msra.mxu0 %v5365
          %5503 = vmatprep.subr.bf16.mxu0 0
          %5504 = vmatpush1.bf16.msra.mxu0 0
          %5505 = vmatprep.subr.bf16.mxu0 0
          %5506 = vmatpush1.bf16.msra.mxu0 0
          %5507 = vmatprep.subr.bf16.mxu0 0
          %5508 = vmatpush1.bf16.msra.mxu0 0
          %5509 = vmatprep.subr.bf16.mxu0 0
          %5510 = vmatpush1.bf16.msra.mxu0 0
          %5511 = vmatprep.subr.bf16.mxu0 0
          %5512 = vmatpush1.bf16.msra.mxu0 0
          %5513 = vmatprep.subr.bf16.mxu0 0
          %5514 = vmatpush1.bf16.msra.mxu0 0
          %5515 = vmatprep.subr.bf16.mxu0 0
          %5516 = vmatpush1.bf16.msra.mxu0 0
          %5517 = vmatprep.subr.bf16.mxu0 0
          %5518 = vmatpush1.bf16.msra.mxu0 0
          %5519 = vmatprep.mubr.bf16.mxu0 0
          %5520 = vmatmul.mubr.bf16.gmra.mrb[0].mxu0 %v5200
          %v5521 = vpop.f32.mrb[0].mxu0
          %v5522 = vadd.f32 %v5425, %v5521
          %v5523 = vpop.f32.mrb[0].mxu0
          %v5524 = vpop.f32.mrb[0].mxu0
          %v5525 = vadd.f32 %v5428, %v5524
          %v5526 = vpop.f32.mrb[0].mxu0
          %5527 = vmatprep.mubr.bf16.mxu0 0
          %5528 = vmatmul.mubr.bf16.gmra.mrb[0].mxu0 %v5203
          %v5529 = vpop.f32.mrb[0].mxu0
          %v5530 = vadd.f32 %v5433, %v5529
          %v5531 = vpop.f32.mrb[0].mxu0
          %v5532 = vpop.f32.mrb[0].mxu0
          %v5533 = vadd.f32 %v5436, %v5532
          %v5534 = vpop.f32.mrb[0].mxu0
          %5535 = vmatprep.mubr.bf16.mxu0 0
          %5536 = vmatmul.mubr.bf16.gmra.mrb[0].mxu0 %v5206
          %v5537 = vpop.f32.mrb[0].mxu0
          %v5538 = vadd.f32 %v5441, %v5537
          %v5539 = vpop.f32.mrb[0].mxu0
          %v5540 = vpop.f32.mrb[0].mxu0
          %v5541 = vadd.f32 %v5444, %v5540
          %v5542 = vpop.f32.mrb[0].mxu0
          %5543 = vmatprep.mubr.bf16.mxu0 0
          %5544 = vmatmul.mubr.bf16.gmra.mrb[0].mxu0 %v5209
          %v5545 = vpop.f32.mrb[0].mxu0
          %v5546 = vadd.f32 %v5449, %v5545
          %v5547 = vpop.f32.mrb[0].mxu0
          %v5548 = vpop.f32.mrb[0].mxu0
          %v5549 = vadd.f32 %v5452, %v5548
          %v5550 = vpop.f32.mrb[0].mxu0
          %5551 = vmatprep.mubr.bf16.mxu0 0
          %5552 = vmatmul.mubr.bf16.gmra.mrb[0].mxu0 %v5212
          %v5553 = vpop.f32.mrb[0].mxu0
          %v5554 = vadd.f32 %v5457, %v5553
          %v5555 = vpop.f32.mrb[0].mxu0
          %v5556 = vpop.f32.mrb[0].mxu0
          %v5557 = vadd.f32 %v5460, %v5556
          %v5558 = vpop.f32.mrb[0].mxu0
          %5559 = vmatprep.mubr.bf16.mxu0 0
          %5560 = vmatmul.mubr.bf16.gmra.mrb[0].mxu0 %v5215
          %v5561 = vpop.f32.mrb[0].mxu0
          %v5562 = vadd.f32 %v5465, %v5561
          %v5563 = vpop.f32.mrb[0].mxu0
          %v5564 = vpop.f32.mrb[0].mxu0
          %v5565 = vadd.f32 %v5468, %v5564
          %v5566 = vpop.f32.mrb[0].mxu0
          %5567 = vmatprep.mubr.bf16.mxu0 0
          %5568 = vmatmul.mubr.bf16.gmra.mrb[0].mxu0 %v5218
          %v5569 = vpop.f32.mrb[0].mxu0
          %v5570 = vadd.f32 %v5473, %v5569
          %v5571 = vpop.f32.mrb[0].mxu0
          %v5572 = vpop.f32.mrb[0].mxu0
          %v5573 = vadd.f32 %v5476, %v5572
          %v5574 = vpop.f32.mrb[0].mxu0
          %5575 = vmatprep.mubr.bf16.mxu0 0
          %5576 = vmatmul.mubr.bf16.gmra.mrb[0].mxu0 %v5221
          %v5577 = vpop.f32.mrb[0].mxu0
          %v5578 = vadd.f32 %v5481, %v5577
          %v5579 = vpop.f32.mrb[0].mxu0
          %v5580 = vpop.f32.mrb[0].mxu0
          %v5581 = vadd.f32 %v5484, %v5580
          %v5582 = vpop.f32.mrb[0].mxu0
          %5583 = vdwg.mxu0
          %v5584 = vadd.f32 %v5016, %v5522
          %v5585 = vadd.f32 %v5017, %v5525
          %v5586 = vadd.f32 %v5018, %v5530
          %v5587 = vadd.f32 %v5019, %v5533
          %v5588 = vadd.f32 %v5020, %v5538
          %v5589 = vadd.f32 %v5021, %v5541
          %v5590 = vadd.f32 %v5022, %v5546
          %v5591 = vadd.f32 %v5023, %v5549
          %v5592 = vadd.f32 %v5024, %v5554
          %v5593 = vadd.f32 %v5025, %v5557
          %v5594 = vadd.f32 %v5026, %v5562
          %v5595 = vadd.f32 %v5027, %v5565
          %v5596 = vadd.f32 %v5028, %v5570
          %v5597 = vadd.f32 %v5029, %v5573
          %v5598 = vadd.f32 %v5030, %v5578
          %v5599 = vadd.f32 %v5031, %v5581
          %s5600 = sadd.s32 6, %s4464
          %s5601 = smul.addr %s5600, 4
          %s5602 = scalar_lea.vmem [#allocation2], %s5601
          %v5603 = vld [vmem:[%s5602] sm:$0xff]
          %v5604 = vld [vmem:[%s5602 + $0x8] sm:$0xf]
          %v5605 = vld [vmem:[%s5602 + $0xc] sm:$0xff]
          %v5606 = vld [vmem:[%s5602 + $0x14] sm:$0xf]
          %v5607 = vld [vmem:[%s5602 + $0x18] sm:$0xff]
          %v5608 = vld [vmem:[%s5602 + $0x20] sm:$0xf]
          %v5609 = vld [vmem:[%s5602 + $0x24] sm:$0xff]
          %v5610 = vld [vmem:[%s5602 + $0x2c] sm:$0xf]
          %v5611 = vld [vmem:[%s5602 + $0x30] sm:$0xff]
          %v5612 = vld [vmem:[%s5602 + $0x38] sm:$0xf]
          %v5613 = vld [vmem:[%s5602 + $0x3c] sm:$0xff]
          %v5614 = vld [vmem:[%s5602 + $0x44] sm:$0xf]
          %v5615 = vld [vmem:[%s5602 + $0x48] sm:$0xff]
          %v5616 = vld [vmem:[%s5602 + $0x50] sm:$0xf]
          %v5617 = vld [vmem:[%s5602 + $0x54] sm:$0xff]
          %v5618 = vld [vmem:[%s5602 + $0x5c] sm:$0xf]
          %v5619 = vld [vmem:[%s5602 + $0x78] sm:$0xff]
          %v5620 = vld [vmem:[%s5602 + $0x80] sm:$0xf]
          %v5621 = vld [vmem:[%s5602 + $0x84] sm:$0xff]
          %v5622 = vld [vmem:[%s5602 + $0x8c] sm:$0xf]
          %v5623 = vld [vmem:[%s5602 + $0x90] sm:$0xff]
          %v5624 = vld [vmem:[%s5602 + $0x98] sm:$0xf]
          %v5625 = vld [vmem:[%s5602 + $0x9c] sm:$0xff]
          %v5626 = vld [vmem:[%s5602 + $0xa4] sm:$0xf]
          %v5627 = vld [vmem:[%s5602 + $0xa8] sm:$0xff]
          %v5628 = vld [vmem:[%s5602 + $0xb0] sm:$0xf]
          %v5629 = vld [vmem:[%s5602 + $0xb4] sm:$0xff]
          %v5630 = vld [vmem:[%s5602 + $0xbc] sm:$0xf]
          %v5631 = vld [vmem:[%s5602 + $0xc0] sm:$0xff]
          %v5632 = vld [vmem:[%s5602 + $0xc8] sm:$0xf]
          %v5633 = vld [vmem:[%s5602 + $0xcc] sm:$0xff]
          %v5634 = vld [vmem:[%s5602 + $0xd4] sm:$0xf]
          %s5635 = sadd.s32 384, %s1121
          %s5636 = smul.addr %s5635, 4
          %s5637 = scalar_lea.vmem [#allocation4], %s5636
          %v5638 = vld [vmem:[%s5637] sm:$0xf]
          %v5639 = vld [vmem:[%s5637 + $0x4] sm:$0xf]
          %v5640 = vld [vmem:[%s5637 + $0x8] sm:$0xf]
          %v5641 = vld [vmem:[%s5637 + $0xc] sm:$0xf]
          %v5642 = vld [vmem:[%s5637 + $0x10] sm:$0xf]
          %v5643 = vld [vmem:[%s5637 + $0x14] sm:$0xf]
          %v5644 = vld [vmem:[%s5637 + $0x18] sm:$0xf]
          %v5645 = vld [vmem:[%s5637 + $0x1c] sm:$0xf]
          %v5646 = vld [vmem:[%s5637 + $0x20] sm:$0xf]
          %v5647 = vld [vmem:[%s5637 + $0x24] sm:$0xf]
          %v5648 = vld [vmem:[%s5637 + $0x28] sm:$0xf]
          %v5649 = vld [vmem:[%s5637 + $0x2c] sm:$0xf]
          %v5650 = vld [vmem:[%s5637 + $0x30] sm:$0xf]
          %v5651 = vld [vmem:[%s5637 + $0x34] sm:$0xf]
          %v5652 = vld [vmem:[%s5637 + $0x38] sm:$0xf]
          %v5653 = vld [vmem:[%s5637 + $0x3c] sm:$0xf]
          %v5654 = vld [vmem:[%s5637 + $0x40] sm:$0xf]
          %v5655 = vld [vmem:[%s5637 + $0x44] sm:$0xf]
          %v5656 = vld [vmem:[%s5637 + $0x48] sm:$0xf]
          %v5657 = vld [vmem:[%s5637 + $0x4c] sm:$0xf]
          %v5658 = vld [vmem:[%s5637 + $0x50] sm:$0xf]
          %v5659 = vld [vmem:[%s5637 + $0x54] sm:$0xf]
          %v5660 = vld [vmem:[%s5637 + $0x58] sm:$0xf]
          %v5661 = vld [vmem:[%s5637 + $0x5c] sm:$0xf]
          %v5662 = vld [vmem:[%s5637 + $0x60] sm:$0xf]
          %v5663 = vld [vmem:[%s5637 + $0x64] sm:$0xf]
          %v5664 = vld [vmem:[%s5637 + $0x68] sm:$0xf]
          %v5665 = vld [vmem:[%s5637 + $0x6c] sm:$0xf]
          %v5666 = vld [vmem:[%s5637 + $0x70] sm:$0xf]
          %v5667 = vld [vmem:[%s5637 + $0x74] sm:$0xf]
          %v5668 = vld [vmem:[%s5637 + $0x78] sm:$0xf]
          %v5669 = vld [vmem:[%s5637 + $0x7c] sm:$0xf]
          %v5670 = vld [vmem:[%s5637 + $0x80] sm:$0xf]
          %v5671 = vld [vmem:[%s5637 + $0x84] sm:$0xf]
          %v5672 = vld [vmem:[%s5637 + $0x88] sm:$0xf]
          %v5673 = vld [vmem:[%s5637 + $0x8c] sm:$0xf]
          %v5674 = vld [vmem:[%s5637 + $0x90] sm:$0xf]
          %v5675 = vld [vmem:[%s5637 + $0x94] sm:$0xf]
          %v5676 = vld [vmem:[%s5637 + $0x98] sm:$0xf]
          %v5677 = vld [vmem:[%s5637 + $0x9c] sm:$0xf]
          %v5678 = vld [vmem:[%s5637 + $0xa0] sm:$0xf]
          %v5679 = vld [vmem:[%s5637 + $0xa4] sm:$0xf]
          %v5680 = vld [vmem:[%s5637 + $0xa8] sm:$0xf]
          %v5681 = vld [vmem:[%s5637 + $0xac] sm:$0xf]
          %v5682 = vld [vmem:[%s5637 + $0xb0] sm:$0xf]
          %v5683 = vld [vmem:[%s5637 + $0xb4] sm:$0xf]
          %v5684 = vld [vmem:[%s5637 + $0xb8] sm:$0xf]
          %v5685 = vld [vmem:[%s5637 + $0xbc] sm:$0xf]
          %v5718 = vunpack.c.l.b16 %v5603
          %v5719 = vunpack.c.h.b16 %v5603
          %v5720 = vunpack.c.l.b16 %v5604
          %v5721 = vunpack.c.l.b16 %v5605
          %v5722 = vunpack.c.h.b16 %v5605
          %v5723 = vunpack.c.l.b16 %v5606
          %v5724 = vunpack.c.l.b16 %v5607
          %v5725 = vunpack.c.h.b16 %v5607
          %v5726 = vunpack.c.l.b16 %v5608
          %v5727 = vunpack.c.l.b16 %v5609
          %v5728 = vunpack.c.h.b16 %v5609
          %v5729 = vunpack.c.l.b16 %v5610
          %v5730 = vunpack.c.l.b16 %v5611
          %v5731 = vunpack.c.h.b16 %v5611
          %v5732 = vunpack.c.l.b16 %v5612
          %v5733 = vunpack.c.l.b16 %v5613
          %v5734 = vunpack.c.h.b16 %v5613
          %v5735 = vunpack.c.l.b16 %v5614
          %v5736 = vunpack.c.l.b16 %v5615
          %v5737 = vunpack.c.h.b16 %v5615
          %v5738 = vunpack.c.l.b16 %v5616
          %v5739 = vunpack.c.l.b16 %v5617
          %v5740 = vunpack.c.h.b16 %v5617
          %v5741 = vunpack.c.l.b16 %v5618
          %v5742 = vunpack.c.l.b16 %v5619
          %v5743 = vunpack.c.h.b16 %v5619
          %v5744 = vunpack.c.l.b16 %v5620
          %v5745 = vunpack.c.l.b16 %v5621
          %v5746 = vunpack.c.h.b16 %v5621
          %v5747 = vunpack.c.l.b16 %v5622
          %v5748 = vunpack.c.l.b16 %v5623
          %v5749 = vunpack.c.h.b16 %v5623
          %v5750 = vunpack.c.l.b16 %v5624
          %v5751 = vunpack.c.l.b16 %v5625
          %v5752 = vunpack.c.h.b16 %v5625
          %v5753 = vunpack.c.l.b16 %v5626
          %v5754 = vunpack.c.l.b16 %v5627
          %v5755 = vunpack.c.h.b16 %v5627
          %v5756 = vunpack.c.l.b16 %v5628
          %v5757 = vunpack.c.l.b16 %v5629
          %v5758 = vunpack.c.h.b16 %v5629
          %v5759 = vunpack.c.l.b16 %v5630
          %v5760 = vunpack.c.l.b16 %v5631
          %v5761 = vunpack.c.h.b16 %v5631
          %v5762 = vunpack.c.l.b16 %v5632
          %v5763 = vunpack.c.l.b16 %v5633
          %v5764 = vunpack.c.h.b16 %v5633
          %v5765 = vunpack.c.l.b16 %v5634
          %v5766 = vpack.c.b16 %v5721, %v5718
          %v5767 = vpack.c.b16 %v5722, %v5719
          %v5768 = vpack.c.b16 %v5723, %v5720
          %v5769 = vpack.c.b16 %v5727, %v5724
          %v5770 = vpack.c.b16 %v5728, %v5725
          %v5771 = vpack.c.b16 %v5729, %v5726
          %v5772 = vpack.c.b16 %v5733, %v5730
          %v5773 = vpack.c.b16 %v5734, %v5731
          %v5774 = vpack.c.b16 %v5735, %v5732
          %v5775 = vpack.c.b16 %v5739, %v5736
          %v5776 = vpack.c.b16 %v5740, %v5737
          %v5777 = vpack.c.b16 %v5741, %v5738
          %v5778 = vpack.c.b16 %v5745, %v5742
          %v5779 = vpack.c.b16 %v5746, %v5743
          %v5780 = vpack.c.b16 %v5747, %v5744
          %v5781 = vpack.c.b16 %v5751, %v5748
          %v5782 = vpack.c.b16 %v5752, %v5749
          %v5783 = vpack.c.b16 %v5753, %v5750
          %v5784 = vpack.c.b16 %v5757, %v5754
          %v5785 = vpack.c.b16 %v5758, %v5755
          %v5786 = vpack.c.b16 %v5759, %v5756
          %v5787 = vpack.c.b16 %v5763, %v5760
          %v5788 = vpack.c.b16 %v5764, %v5761
          %v5789 = vpack.c.b16 %v5765, %v5762
          %v5862 = vunpack.c.l.b16 %v5638
          %v5863 = vunpack.c.l.b16 %v5639
          %v5864 = vunpack.c.l.b16 %v5640
          %v5865 = vunpack.c.l.b16 %v5641
          %v5866 = vunpack.c.l.b16 %v5642
          %v5867 = vunpack.c.l.b16 %v5643
          %v5868 = vunpack.c.l.b16 %v5644
          %v5869 = vunpack.c.l.b16 %v5645
          %v5870 = vunpack.c.l.b16 %v5646
          %v5871 = vunpack.c.l.b16 %v5647
          %v5872 = vunpack.c.l.b16 %v5648
          %v5873 = vunpack.c.l.b16 %v5649
          %v5874 = vunpack.c.l.b16 %v5650
          %v5875 = vunpack.c.l.b16 %v5651
          %v5876 = vunpack.c.l.b16 %v5652
          %v5877 = vunpack.c.l.b16 %v5653
          %v5878 = vunpack.c.l.b16 %v5654
          %v5879 = vunpack.c.l.b16 %v5655
          %v5880 = vunpack.c.l.b16 %v5656
          %v5881 = vunpack.c.l.b16 %v5657
          %v5882 = vunpack.c.l.b16 %v5658
          %v5883 = vunpack.c.l.b16 %v5659
          %v5884 = vunpack.c.l.b16 %v5660
          %v5885 = vunpack.c.l.b16 %v5661
          %v5886 = vunpack.c.l.b16 %v5662
          %v5887 = vunpack.c.l.b16 %v5663
          %v5888 = vunpack.c.l.b16 %v5664
          %v5889 = vunpack.c.l.b16 %v5665
          %v5890 = vunpack.c.l.b16 %v5666
          %v5891 = vunpack.c.l.b16 %v5667
          %v5892 = vunpack.c.l.b16 %v5668
          %v5893 = vunpack.c.l.b16 %v5669
          %v5894 = vunpack.c.l.b16 %v5670
          %v5895 = vunpack.c.l.b16 %v5671
          %v5896 = vunpack.c.l.b16 %v5672
          %v5897 = vunpack.c.l.b16 %v5673
          %v5898 = vunpack.c.l.b16 %v5674
          %v5899 = vunpack.c.l.b16 %v5675
          %v5900 = vunpack.c.l.b16 %v5676
          %v5901 = vunpack.c.l.b16 %v5677
          %v5902 = vunpack.c.l.b16 %v5678
          %v5903 = vunpack.c.l.b16 %v5679
          %v5904 = vunpack.c.l.b16 %v5680
          %v5905 = vunpack.c.l.b16 %v5681
          %v5906 = vunpack.c.l.b16 %v5682
          %v5907 = vunpack.c.l.b16 %v5683
          %v5908 = vunpack.c.l.b16 %v5684
          %v5909 = vunpack.c.l.b16 %v5685
          %v5910 = vpack.c.b16 %v5863, %v5862
          %v5911 = vpack.c.b16 %v5865, %v5864
          %v5912 = vpack.c.b16 %v5867, %v5866
          %v5913 = vpack.c.b16 %v5869, %v5868
          %v5914 = vpack.c.b16 %v5871, %v5870
          %v5915 = vpack.c.b16 %v5873, %v5872
          %v5916 = vpack.c.b16 %v5875, %v5874
          %v5917 = vpack.c.b16 %v5877, %v5876
          %v5918 = vpack.c.b16 %v5879, %v5878
          %v5919 = vpack.c.b16 %v5881, %v5880
          %v5920 = vpack.c.b16 %v5883, %v5882
          %v5921 = vpack.c.b16 %v5885, %v5884
          %v5922 = vpack.c.b16 %v5887, %v5886
          %v5923 = vpack.c.b16 %v5889, %v5888
          %v5924 = vpack.c.b16 %v5891, %v5890
          %v5925 = vpack.c.b16 %v5893, %v5892
          %v5926 = vpack.c.b16 %v5895, %v5894
          %v5927 = vpack.c.b16 %v5897, %v5896
          %v5928 = vpack.c.b16 %v5899, %v5898
          %v5929 = vpack.c.b16 %v5901, %v5900
          %v5930 = vpack.c.b16 %v5903, %v5902
          %v5931 = vpack.c.b16 %v5905, %v5904
          %v5932 = vpack.c.b16 %v5907, %v5906
          %v5933 = vpack.c.b16 %v5909, %v5908
          %5958 = vmatprep.subr.bf16.mxu0 0
          %5959 = vmatpush1.bf16.msra.mxu0 %v5910
          %5960 = vmatprep.subr.bf16.mxu0 0
          %5961 = vmatpush1.bf16.msra.mxu0 %v5911
          %5962 = vmatprep.subr.bf16.mxu0 0
          %5963 = vmatpush1.bf16.msra.mxu0 %v5912
          %5964 = vmatprep.subr.bf16.mxu0 0
          %5965 = vmatpush1.bf16.msra.mxu0 %v5913
          %5966 = vmatprep.subr.bf16.mxu0 0
          %5967 = vmatpush1.bf16.msra.mxu0 %v5914
          %5968 = vmatprep.subr.bf16.mxu0 0
          %5969 = vmatpush1.bf16.msra.mxu0 %v5915
          %5970 = vmatprep.subr.bf16.mxu0 0
          %5971 = vmatpush1.bf16.msra.mxu0 %v5916
          %5972 = vmatprep.subr.bf16.mxu0 0
          %5973 = vmatpush1.bf16.msra.mxu0 %v5917
          %5974 = vmatprep.subr.bf16.mxu0 0
          %5975 = vmatpush1.bf16.msra.mxu0 %v5918
          %5976 = vmatprep.subr.bf16.mxu0 0
          %5977 = vmatpush1.bf16.msra.mxu0 %v5919
          %5978 = vmatprep.subr.bf16.mxu0 0
          %5979 = vmatpush1.bf16.msra.mxu0 %v5920
          %5980 = vmatprep.subr.bf16.mxu0 0
          %5981 = vmatpush1.bf16.msra.mxu0 %v5921
          %5982 = vmatprep.subr.bf16.mxu0 0
          %5983 = vmatpush1.bf16.msra.mxu0 %v5922
          %5984 = vmatprep.subr.bf16.mxu0 0
          %5985 = vmatpush1.bf16.msra.mxu0 %v5923
          %5986 = vmatprep.subr.bf16.mxu0 0
          %5987 = vmatpush1.bf16.msra.mxu0 %v5924
          %5988 = vmatprep.subr.bf16.mxu0 0
          %5989 = vmatpush1.bf16.msra.mxu0 %v5925
          %5990 = vmatprep.mubr.bf16.mxu0 %v5767
          %5991 = vmatmul.mubr.bf16.gmra.mrb[0].mxu0 %v5766
          %v5992 = vpop.f32.mrb[0].mxu0
          %v5993 = vadd.f32 0.0, %v5992
          %v5994 = vpop.f32.mrb[0].mxu0
          %v5995 = vpop.f32.mrb[0].mxu0
          %v5996 = vadd.f32 0.0, %v5995
          %v5997 = vpop.f32.mrb[0].mxu0
          %5998 = vmatprep.mubr.bf16.mxu0 %v5770
          %5999 = vmatmul.mubr.bf16.gmra.mrb[0].mxu0 %v5769
          %v6000 = vpop.f32.mrb[0].mxu0
          %v6001 = vadd.f32 0.0, %v6000
          %v6002 = vpop.f32.mrb[0].mxu0
          %v6003 = vpop.f32.mrb[0].mxu0
          %v6004 = vadd.f32 0.0, %v6003
          %v6005 = vpop.f32.mrb[0].mxu0
          %6006 = vmatprep.mubr.bf16.mxu0 %v5773
          %6007 = vmatmul.mubr.bf16.gmra.mrb[0].mxu0 %v5772
          %v6008 = vpop.f32.mrb[0].mxu0
          %v6009 = vadd.f32 0.0, %v6008
          %v6010 = vpop.f32.mrb[0].mxu0
          %v6011 = vpop.f32.mrb[0].mxu0
          %v6012 = vadd.f32 0.0, %v6011
          %v6013 = vpop.f32.mrb[0].mxu0
          %6014 = vmatprep.mubr.bf16.mxu0 %v5776
          %6015 = vmatmul.mubr.bf16.gmra.mrb[0].mxu0 %v5775
          %v6016 = vpop.f32.mrb[0].mxu0
          %v6017 = vadd.f32 0.0, %v6016
          %v6018 = vpop.f32.mrb[0].mxu0
          %v6019 = vpop.f32.mrb[0].mxu0
          %v6020 = vadd.f32 0.0, %v6019
          %v6021 = vpop.f32.mrb[0].mxu0
          %6022 = vmatprep.mubr.bf16.mxu0 %v5779
          %6023 = vmatmul.mubr.bf16.gmra.mrb[0].mxu0 %v5778
          %v6024 = vpop.f32.mrb[0].mxu0
          %v6025 = vadd.f32 0.0, %v6024
          %v6026 = vpop.f32.mrb[0].mxu0
          %v6027 = vpop.f32.mrb[0].mxu0
          %v6028 = vadd.f32 0.0, %v6027
          %v6029 = vpop.f32.mrb[0].mxu0
          %6030 = vmatprep.mubr.bf16.mxu0 %v5782
          %6031 = vmatmul.mubr.bf16.gmra.mrb[0].mxu0 %v5781
          %v6032 = vpop.f32.mrb[0].mxu0
          %v6033 = vadd.f32 0.0, %v6032
          %v6034 = vpop.f32.mrb[0].mxu0
          %v6035 = vpop.f32.mrb[0].mxu0
          %v6036 = vadd.f32 0.0, %v6035
          %v6037 = vpop.f32.mrb[0].mxu0
          %6038 = vmatprep.mubr.bf16.mxu0 %v5785
          %6039 = vmatmul.mubr.bf16.gmra.mrb[0].mxu0 %v5784
          %v6040 = vpop.f32.mrb[0].mxu0
          %v6041 = vadd.f32 0.0, %v6040
          %v6042 = vpop.f32.mrb[0].mxu0
          %v6043 = vpop.f32.mrb[0].mxu0
          %v6044 = vadd.f32 0.0, %v6043
          %v6045 = vpop.f32.mrb[0].mxu0
          %6046 = vmatprep.mubr.bf16.mxu0 %v5788
          %6047 = vmatmul.mubr.bf16.gmra.mrb[0].mxu0 %v5787
          %v6048 = vpop.f32.mrb[0].mxu0
          %v6049 = vadd.f32 0.0, %v6048
          %v6050 = vpop.f32.mrb[0].mxu0
          %v6051 = vpop.f32.mrb[0].mxu0
          %v6052 = vadd.f32 0.0, %v6051
          %v6053 = vpop.f32.mrb[0].mxu0
          %6054 = vdwg.mxu0
          %6055 = vmatprep.subr.bf16.mxu0 0
          %6056 = vmatpush1.bf16.msra.mxu0 %v5926
          %6057 = vmatprep.subr.bf16.mxu0 0
          %6058 = vmatpush1.bf16.msra.mxu0 %v5927
          %6059 = vmatprep.subr.bf16.mxu0 0
          %6060 = vmatpush1.bf16.msra.mxu0 %v5928
          %6061 = vmatprep.subr.bf16.mxu0 0
          %6062 = vmatpush1.bf16.msra.mxu0 %v5929
          %6063 = vmatprep.subr.bf16.mxu0 0
          %6064 = vmatpush1.bf16.msra.mxu0 %v5930
          %6065 = vmatprep.subr.bf16.mxu0 0
          %6066 = vmatpush1.bf16.msra.mxu0 %v5931
          %6067 = vmatprep.subr.bf16.mxu0 0
          %6068 = vmatpush1.bf16.msra.mxu0 %v5932
          %6069 = vmatprep.subr.bf16.mxu0 0
          %6070 = vmatpush1.bf16.msra.mxu0 %v5933
          %6071 = vmatprep.subr.bf16.mxu0 0
          %6072 = vmatpush1.bf16.msra.mxu0 0
          %6073 = vmatprep.subr.bf16.mxu0 0
          %6074 = vmatpush1.bf16.msra.mxu0 0
          %6075 = vmatprep.subr.bf16.mxu0 0
          %6076 = vmatpush1.bf16.msra.mxu0 0
          %6077 = vmatprep.subr.bf16.mxu0 0
          %6078 = vmatpush1.bf16.msra.mxu0 0
          %6079 = vmatprep.subr.bf16.mxu0 0
          %6080 = vmatpush1.bf16.msra.mxu0 0
          %6081 = vmatprep.subr.bf16.mxu0 0
          %6082 = vmatpush1.bf16.msra.mxu0 0
          %6083 = vmatprep.subr.bf16.mxu0 0
          %6084 = vmatpush1.bf16.msra.mxu0 0
          %6085 = vmatprep.subr.bf16.mxu0 0
          %6086 = vmatpush1.bf16.msra.mxu0 0
          %6087 = vmatprep.mubr.bf16.mxu0 0
          %6088 = vmatmul.mubr.bf16.gmra.mrb[0].mxu0 %v5768
          %v6089 = vpop.f32.mrb[0].mxu0
          %v6090 = vadd.f32 %v5993, %v6089
          %v6091 = vpop.f32.mrb[0].mxu0
          %v6092 = vpop.f32.mrb[0].mxu0
          %v6093 = vadd.f32 %v5996, %v6092
          %v6094 = vpop.f32.mrb[0].mxu0
          %6095 = vmatprep.mubr.bf16.mxu0 0
          %6096 = vmatmul.mubr.bf16.gmra.mrb[0].mxu0 %v5771
          %v6097 = vpop.f32.mrb[0].mxu0
          %v6098 = vadd.f32 %v6001, %v6097
          %v6099 = vpop.f32.mrb[0].mxu0
          %v6100 = vpop.f32.mrb[0].mxu0
          %v6101 = vadd.f32 %v6004, %v6100
          %v6102 = vpop.f32.mrb[0].mxu0
          %6103 = vmatprep.mubr.bf16.mxu0 0
          %6104 = vmatmul.mubr.bf16.gmra.mrb[0].mxu0 %v5774
          %v6105 = vpop.f32.mrb[0].mxu0
          %v6106 = vadd.f32 %v6009, %v6105
          %v6107 = vpop.f32.mrb[0].mxu0
          %v6108 = vpop.f32.mrb[0].mxu0
          %v6109 = vadd.f32 %v6012, %v6108
          %v6110 = vpop.f32.mrb[0].mxu0
          %6111 = vmatprep.mubr.bf16.mxu0 0
          %6112 = vmatmul.mubr.bf16.gmra.mrb[0].mxu0 %v5777
          %v6113 = vpop.f32.mrb[0].mxu0
          %v6114 = vadd.f32 %v6017, %v6113
          %v6115 = vpop.f32.mrb[0].mxu0
          %v6116 = vpop.f32.mrb[0].mxu0
          %v6117 = vadd.f32 %v6020, %v6116
          %v6118 = vpop.f32.mrb[0].mxu0
          %6119 = vmatprep.mubr.bf16.mxu0 0
          %6120 = vmatmul.mubr.bf16.gmra.mrb[0].mxu0 %v5780
          %v6121 = vpop.f32.mrb[0].mxu0
          %v6122 = vadd.f32 %v6025, %v6121
          %v6123 = vpop.f32.mrb[0].mxu0
          %v6124 = vpop.f32.mrb[0].mxu0
          %v6125 = vadd.f32 %v6028, %v6124
          %v6126 = vpop.f32.mrb[0].mxu0
          %6127 = vmatprep.mubr.bf16.mxu0 0
          %6128 = vmatmul.mubr.bf16.gmra.mrb[0].mxu0 %v5783
          %v6129 = vpop.f32.mrb[0].mxu0
          %v6130 = vadd.f32 %v6033, %v6129
          %v6131 = vpop.f32.mrb[0].mxu0
          %v6132 = vpop.f32.mrb[0].mxu0
          %v6133 = vadd.f32 %v6036, %v6132
          %v6134 = vpop.f32.mrb[0].mxu0
          %6135 = vmatprep.mubr.bf16.mxu0 0
          %6136 = vmatmul.mubr.bf16.gmra.mrb[0].mxu0 %v5786
          %v6137 = vpop.f32.mrb[0].mxu0
          %v6138 = vadd.f32 %v6041, %v6137
          %v6139 = vpop.f32.mrb[0].mxu0
          %v6140 = vpop.f32.mrb[0].mxu0
          %v6141 = vadd.f32 %v6044, %v6140
          %v6142 = vpop.f32.mrb[0].mxu0
          %6143 = vmatprep.mubr.bf16.mxu0 0
          %6144 = vmatmul.mubr.bf16.gmra.mrb[0].mxu0 %v5789
          %v6145 = vpop.f32.mrb[0].mxu0
          %v6146 = vadd.f32 %v6049, %v6145
          %v6147 = vpop.f32.mrb[0].mxu0
          %v6148 = vpop.f32.mrb[0].mxu0
          %v6149 = vadd.f32 %v6052, %v6148
          %v6150 = vpop.f32.mrb[0].mxu0
          %6151 = vdwg.mxu0
          %v6152 = vadd.f32 %v5584, %v6090
          %v6153 = vadd.f32 %v5585, %v6093
          %v6154 = vadd.f32 %v5586, %v6098
          %v6155 = vadd.f32 %v5587, %v6101
          %v6156 = vadd.f32 %v5588, %v6106
          %v6157 = vadd.f32 %v5589, %v6109
          %v6158 = vadd.f32 %v5590, %v6114
          %v6159 = vadd.f32 %v5591, %v6117
          %v6160 = vadd.f32 %v5592, %v6122
          %v6161 = vadd.f32 %v5593, %v6125
          %v6162 = vadd.f32 %v5594, %v6130
          %v6163 = vadd.f32 %v5595, %v6133
          %v6164 = vadd.f32 %v5596, %v6138
          %v6165 = vadd.f32 %v5597, %v6141
          %v6166 = vadd.f32 %v5598, %v6146
          %v6167 = vadd.f32 %v5599, %v6149
          %s6168 = scalar_lea.vmem [#allocation3], %s1085
          %6169 = vst [vmem:[%s6168] sm:$0xff] %v6152
          %6170 = vst [vmem:[%s6168 + $0x8] sm:$0xff] %v6153
          %6171 = vst [vmem:[%s6168 + $0x10] sm:$0xff] %v6154
          %6172 = vst [vmem:[%s6168 + $0x18] sm:$0xff] %v6155
          %6173 = vst [vmem:[%s6168 + $0x20] sm:$0xff] %v6156
          %6174 = vst [vmem:[%s6168 + $0x28] sm:$0xff] %v6157
          %6175 = vst [vmem:[%s6168 + $0x30] sm:$0xff] %v6158
          %6176 = vst [vmem:[%s6168 + $0x38] sm:$0xff] %v6159
          %6177 = vst [vmem:[%s6168 + $0x40] sm:$0xff] %v6160
          %6178 = vst [vmem:[%s6168 + $0x48] sm:$0xff] %v6161
          %6179 = vst [vmem:[%s6168 + $0x50] sm:$0xff] %v6162
          %6180 = vst [vmem:[%s6168 + $0x58] sm:$0xff] %v6163
          %6181 = vst [vmem:[%s6168 + $0x60] sm:$0xff] %v6164
          %6182 = vst [vmem:[%s6168 + $0x68] sm:$0xff] %v6165
          %6183 = vst [vmem:[%s6168 + $0x70] sm:$0xff] %v6166
          %6184 = vst [vmem:[%s6168 + $0x78] sm:$0xff] %v6167
        $region48: #{net_s_forward.1} parent=27 // loop_footer
          %s1083 = sadd.s32 1, %s1079
        $region49: #{net_s_forward.1} parent=27 // loop_footer_branch
          %1078 = sbr.rel target = $region45
        $region50: #{net_s_forward.1} parent=27 // loop_exit
          _
        %p6185 = scmp.eq.s32.totalorder %s19, 7
        // Predicated region
        $region51: #{net_s_forward.1} parent=27 // pred_check
          %p6186 = pneg %p6185
        $region52: #{net_s_forward.1} parent=27 // pred_check_branch
          %6188 = sbr.rel (%p6186) target = $region54
        $region53: #{net_s_forward.1} parent=27 // pred_region
          %v6189 = vld [vmem:[%s165] sm:$0xff]
          %v6190 = vld [vmem:[%s165 + $0x8] sm:$0xff]
          %v6191 = vld [vmem:[%s165 + $0x10] sm:$0xff]
          %v6192 = vld [vmem:[%s165 + $0x18] sm:$0xff]
          %v6193 = vld [vmem:[%s165 + $0x20] sm:$0xff]
          %v6194 = vld [vmem:[%s165 + $0x28] sm:$0xff]
          %v6195 = vld [vmem:[%s165 + $0x30] sm:$0xff]
          %v6196 = vld [vmem:[%s165 + $0x38] sm:$0xff]
          %v6197 = vld [vmem:[%s165 + $0x40] sm:$0xff]
          %v6198 = vld [vmem:[%s165 + $0x48] sm:$0xff]
          %v6199 = vld [vmem:[%s165 + $0x50] sm:$0xff]
          %v6200 = vld [vmem:[%s165 + $0x58] sm:$0xff]
          %v6201 = vld [vmem:[%s165 + $0x60] sm:$0xff]
          %v6202 = vld [vmem:[%s165 + $0x68] sm:$0xff]
          %v6203 = vld [vmem:[%s165 + $0x70] sm:$0xff]
          %v6204 = vld [vmem:[%s165 + $0x78] sm:$0xff]
          %v6205 = vld [vmem:[%s165 + $0x80] sm:$0xff]
          %v6206 = vld [vmem:[%s165 + $0x88] sm:$0xff]
          %v6207 = vld [vmem:[%s165 + $0x90] sm:$0xff]
          %v6208 = vld [vmem:[%s165 + $0x98] sm:$0xff]
          %v6209 = vld [vmem:[%s165 + $0xa0] sm:$0xff]
          %v6210 = vld [vmem:[%s165 + $0xa8] sm:$0xff]
          %v6211 = vld [vmem:[%s165 + $0xb0] sm:$0xff]
          %v6212 = vld [vmem:[%s165 + $0xb8] sm:$0xff]
          %v6213 = vld [vmem:[%s165 + $0xc0] sm:$0xff]
          %v6214 = vld [vmem:[%s165 + $0xc8] sm:$0xff]
          %v6215 = vld [vmem:[%s165 + $0xd0] sm:$0xff]
          %v6216 = vld [vmem:[%s165 + $0xd8] sm:$0xff]
          %v6217 = vld [vmem:[%s165 + $0xe0] sm:$0xff]
          %v6218 = vld [vmem:[%s165 + $0xe8] sm:$0xff]
          %v6219 = vld [vmem:[%s165 + $0xf0] sm:$0xff]
          %v6220 = vld [vmem:[%s165 + $0xf8] sm:$0xff]
          %v6221 = vld [vmem:[%s165 + $0x100] sm:$0xff]
          %v6222 = vld [vmem:[%s165 + $0x108] sm:$0xff]
          %v6223 = vld [vmem:[%s165 + $0x110] sm:$0xff]
          %v6224 = vld [vmem:[%s165 + $0x118] sm:$0xff]
          %v6225 = vld [vmem:[%s165 + $0x120] sm:$0xff]
          %v6226 = vld [vmem:[%s165 + $0x128] sm:$0xff]
          %v6227 = vld [vmem:[%s165 + $0x130] sm:$0xff]
          %v6228 = vld [vmem:[%s165 + $0x138] sm:$0xff]
          %v6229 = vld [vmem:[%s165 + $0x140] sm:$0xff]
          %v6230 = vld [vmem:[%s165 + $0x148] sm:$0xff]
          %v6231 = vld [vmem:[%s165 + $0x150] sm:$0xff]
          %v6232 = vld [vmem:[%s165 + $0x158] sm:$0xff]
          %v6233 = vld [vmem:[%s165 + $0x160] sm:$0xff]
          %v6234 = vld [vmem:[%s165 + $0x168] sm:$0xff]
          %v6235 = vld [vmem:[%s165 + $0x170] sm:$0xff]
          %v6236 = vld [vmem:[%s165 + $0x178] sm:$0xff]
          %v6237 = vld [vmem:[%s165 + $0x180] sm:$0xff]
          %v6238 = vld [vmem:[%s165 + $0x188] sm:$0xff]
          %v6239 = vld [vmem:[%s165 + $0x190] sm:$0xff]
          %v6240 = vld [vmem:[%s165 + $0x198] sm:$0xff]
          %v6241 = vld [vmem:[%s165 + $0x1a0] sm:$0xff]
          %v6242 = vld [vmem:[%s165 + $0x1a8] sm:$0xff]
          %v6243 = vld [vmem:[%s165 + $0x1b0] sm:$0xff]
          %v6244 = vld [vmem:[%s165 + $0x1b8] sm:$0xff]
          %v6245 = vld [vmem:[%s165 + $0x1c0] sm:$0xff]
          %v6246 = vld [vmem:[%s165 + $0x1c8] sm:$0xff]
          %v6247 = vld [vmem:[%s165 + $0x1d0] sm:$0xff]
          %v6248 = vld [vmem:[%s165 + $0x1d8] sm:$0xff]
          %v6249 = vld [vmem:[%s165 + $0x1e0] sm:$0xff]
          %v6250 = vld [vmem:[%s165 + $0x1e8] sm:$0xff]
          %v6251 = vld [vmem:[%s165 + $0x1f0] sm:$0xff]
          %v6252 = vld [vmem:[%s165 + $0x1f8] sm:$0xff]
          %v6253 = vld [vmem:[#allocation3] sm:$0xff]
          %v6254 = vld [vmem:[#allocation3 + $0x8] sm:$0xff]
          %v6255 = vld [vmem:[#allocation3 + $0x10] sm:$0xff]
          %v6256 = vld [vmem:[#allocation3 + $0x18] sm:$0xff]
          %v6257 = vld [vmem:[#allocation3 + $0x20] sm:$0xff]
          %v6258 = vld [vmem:[#allocation3 + $0x28] sm:$0xff]
          %v6259 = vld [vmem:[#allocation3 + $0x30] sm:$0xff]
          %v6260 = vld [vmem:[#allocation3 + $0x38] sm:$0xff]
          %v6261 = vld [vmem:[#allocation3 + $0x40] sm:$0xff]
          %v6262 = vld [vmem:[#allocation3 + $0x48] sm:$0xff]
          %v6263 = vld [vmem:[#allocation3 + $0x50] sm:$0xff]
          %v6264 = vld [vmem:[#allocation3 + $0x58] sm:$0xff]
          %v6265 = vld [vmem:[#allocation3 + $0x60] sm:$0xff]
          %v6266 = vld [vmem:[#allocation3 + $0x68] sm:$0xff]
          %v6267 = vld [vmem:[#allocation3 + $0x70] sm:$0xff]
          %v6268 = vld [vmem:[#allocation3 + $0x78] sm:$0xff]
          %v6269 = vld [vmem:[#allocation3 + $0x80] sm:$0xff]
          %v6270 = vld [vmem:[#allocation3 + $0x88] sm:$0xff]
          %v6271 = vld [vmem:[#allocation3 + $0x90] sm:$0xff]
          %v6272 = vld [vmem:[#allocation3 + $0x98] sm:$0xff]
          %v6273 = vld [vmem:[#allocation3 + $0xa0] sm:$0xff]
          %v6274 = vld [vmem:[#allocation3 + $0xa8] sm:$0xff]
          %v6275 = vld [vmem:[#allocation3 + $0xb0] sm:$0xff]
          %v6276 = vld [vmem:[#allocation3 + $0xb8] sm:$0xff]
          %v6277 = vld [vmem:[#allocation3 + $0xc0] sm:$0xff]
          %v6278 = vld [vmem:[#allocation3 + $0xc8] sm:$0xff]
          %v6279 = vld [vmem:[#allocation3 + $0xd0] sm:$0xff]
          %v6280 = vld [vmem:[#allocation3 + $0xd8] sm:$0xff]
          %v6281 = vld [vmem:[#allocation3 + $0xe0] sm:$0xff]
          %v6282 = vld [vmem:[#allocation3 + $0xe8] sm:$0xff]
          %v6283 = vld [vmem:[#allocation3 + $0xf0] sm:$0xff]
          %v6284 = vld [vmem:[#allocation3 + $0xf8] sm:$0xff]
          %v6285 = vld [vmem:[#allocation3 + $0x100] sm:$0xff]
          %v6286 = vld [vmem:[#allocation3 + $0x108] sm:$0xff]
          %v6287 = vld [vmem:[#allocation3 + $0x110] sm:$0xff]
          %v6288 = vld [vmem:[#allocation3 + $0x118] sm:$0xff]
          %v6289 = vld [vmem:[#allocation3 + $0x120] sm:$0xff]
          %v6290 = vld [vmem:[#allocation3 + $0x128] sm:$0xff]
          %v6291 = vld [vmem:[#allocation3 + $0x130] sm:$0xff]
          %v6292 = vld [vmem:[#allocation3 + $0x138] sm:$0xff]
          %v6293 = vld [vmem:[#allocation3 + $0x140] sm:$0xff]
          %v6294 = vld [vmem:[#allocation3 + $0x148] sm:$0xff]
          %v6295 = vld [vmem:[#allocation3 + $0x150] sm:$0xff]
          %v6296 = vld [vmem:[#allocation3 + $0x158] sm:$0xff]
          %v6297 = vld [vmem:[#allocation3 + $0x160] sm:$0xff]
          %v6298 = vld [vmem:[#allocation3 + $0x168] sm:$0xff]
          %v6299 = vld [vmem:[#allocation3 + $0x170] sm:$0xff]
          %v6300 = vld [vmem:[#allocation3 + $0x178] sm:$0xff]
          %v6301 = vld [vmem:[#allocation3 + $0x180] sm:$0xff]
          %v6302 = vld [vmem:[#allocation3 + $0x188] sm:$0xff]
          %v6303 = vld [vmem:[#allocation3 + $0x190] sm:$0xff]
          %v6304 = vld [vmem:[#allocation3 + $0x198] sm:$0xff]
          %v6305 = vld [vmem:[#allocation3 + $0x1a0] sm:$0xff]
          %v6306 = vld [vmem:[#allocation3 + $0x1a8] sm:$0xff]
          %v6307 = vld [vmem:[#allocation3 + $0x1b0] sm:$0xff]
          %v6308 = vld [vmem:[#allocation3 + $0x1b8] sm:$0xff]
          %v6309 = vld [vmem:[#allocation3 + $0x1c0] sm:$0xff]
          %v6310 = vld [vmem:[#allocation3 + $0x1c8] sm:$0xff]
          %v6311 = vld [vmem:[#allocation3 + $0x1d0] sm:$0xff]
          %v6312 = vld [vmem:[#allocation3 + $0x1d8] sm:$0xff]
          %v6313 = vld [vmem:[#allocation3 + $0x1e0] sm:$0xff]
          %v6314 = vld [vmem:[#allocation3 + $0x1e8] sm:$0xff]
          %v6315 = vld [vmem:[#allocation3 + $0x1f0] sm:$0xff]
          %v6316 = vld [vmem:[#allocation3 + $0x1f8] sm:$0xff]
          %v6317 = vmax.f32 %v6189, 0.0
          %v6318 = vmax.f32 %v6190, 0.0
          %v6319 = vmax.f32 %v6191, 0.0
          %v6320 = vmax.f32 %v6192, 0.0
          %v6321 = vmax.f32 %v6193, 0.0
          %v6322 = vmax.f32 %v6194, 0.0
          %v6323 = vmax.f32 %v6195, 0.0
          %v6324 = vmax.f32 %v6196, 0.0
          %v6325 = vmax.f32 %v6197, 0.0
          %v6326 = vmax.f32 %v6198, 0.0
          %v6327 = vmax.f32 %v6199, 0.0
          %v6328 = vmax.f32 %v6200, 0.0
          %v6329 = vmax.f32 %v6201, 0.0
          %v6330 = vmax.f32 %v6202, 0.0
          %v6331 = vmax.f32 %v6203, 0.0
          %v6332 = vmax.f32 %v6204, 0.0
          %v6333 = vmax.f32 %v6205, 0.0
          %v6334 = vmax.f32 %v6206, 0.0
          %v6335 = vmax.f32 %v6207, 0.0
          %v6336 = vmax.f32 %v6208, 0.0
          %v6337 = vmax.f32 %v6209, 0.0
          %v6338 = vmax.f32 %v6210, 0.0
          %v6339 = vmax.f32 %v6211, 0.0
          %v6340 = vmax.f32 %v6212, 0.0
          %v6341 = vmax.f32 %v6213, 0.0
          %v6342 = vmax.f32 %v6214, 0.0
          %v6343 = vmax.f32 %v6215, 0.0
          %v6344 = vmax.f32 %v6216, 0.0
          %v6345 = vmax.f32 %v6217, 0.0
          %v6346 = vmax.f32 %v6218, 0.0
          %v6347 = vmax.f32 %v6219, 0.0
          %v6348 = vmax.f32 %v6220, 0.0
          %v6349 = vmax.f32 %v6221, 0.0
          %v6350 = vmax.f32 %v6222, 0.0
          %v6351 = vmax.f32 %v6223, 0.0
          %v6352 = vmax.f32 %v6224, 0.0
          %v6353 = vmax.f32 %v6225, 0.0
          %v6354 = vmax.f32 %v6226, 0.0
          %v6355 = vmax.f32 %v6227, 0.0
          %v6356 = vmax.f32 %v6228, 0.0
          %v6357 = vmax.f32 %v6229, 0.0
          %v6358 = vmax.f32 %v6230, 0.0
          %v6359 = vmax.f32 %v6231, 0.0
          %v6360 = vmax.f32 %v6232, 0.0
          %v6361 = vmax.f32 %v6233, 0.0
          %v6362 = vmax.f32 %v6234, 0.0
          %v6363 = vmax.f32 %v6235, 0.0
          %v6364 = vmax.f32 %v6236, 0.0
          %v6365 = vmax.f32 %v6237, 0.0
          %v6366 = vmax.f32 %v6238, 0.0
          %v6367 = vmax.f32 %v6239, 0.0
          %v6368 = vmax.f32 %v6240, 0.0
          %v6369 = vmax.f32 %v6241, 0.0
          %v6370 = vmax.f32 %v6242, 0.0
          %v6371 = vmax.f32 %v6243, 0.0
          %v6372 = vmax.f32 %v6244, 0.0
          %v6373 = vmax.f32 %v6245, 0.0
          %v6374 = vmax.f32 %v6246, 0.0
          %v6375 = vmax.f32 %v6247, 0.0
          %v6376 = vmax.f32 %v6248, 0.0
          %v6377 = vmax.f32 %v6249, 0.0
          %v6378 = vmax.f32 %v6250, 0.0
          %v6379 = vmax.f32 %v6251, 0.0
          %v6380 = vmax.f32 %v6252, 0.0
          %6382 = vset.pattern.permute.xlu0 0
          %6383 = vperm.xlu0 %6382, %v6317
          %v6384 = vpop.permute.xlu0 %6383
          %6387 = vset.pattern.permute.xlu0 0
          %6388 = vperm.xlu0 %6387, %v6318
          %v6389 = vpop.permute.xlu0 %6388
          %6392 = vset.pattern.permute.xlu0 0
          %6393 = vperm.xlu0 %6392, %v6319
          %v6394 = vpop.permute.xlu0 %6393
          %6397 = vset.pattern.permute.xlu0 0
          %6398 = vperm.xlu0 %6397, %v6320
          %v6399 = vpop.permute.xlu0 %6398
          %6402 = vset.pattern.permute.xlu0 0
          %6403 = vperm.xlu0 %6402, %v6321
          %v6404 = vpop.permute.xlu0 %6403
          %6407 = vset.pattern.permute.xlu0 0
          %6408 = vperm.xlu0 %6407, %v6322
          %v6409 = vpop.permute.xlu0 %6408
          %6412 = vset.pattern.permute.xlu0 0
          %6413 = vperm.xlu0 %6412, %v6323
          %v6414 = vpop.permute.xlu0 %6413
          %6417 = vset.pattern.permute.xlu0 0
          %6418 = vperm.xlu0 %6417, %v6324
          %v6419 = vpop.permute.xlu0 %6418
          %6422 = vset.pattern.permute.xlu0 0
          %6423 = vperm.xlu0 %6422, %v6325
          %v6424 = vpop.permute.xlu0 %6423
          %6427 = vset.pattern.permute.xlu0 0
          %6428 = vperm.xlu0 %6427, %v6326
          %v6429 = vpop.permute.xlu0 %6428
          %6432 = vset.pattern.permute.xlu0 0
          %6433 = vperm.xlu0 %6432, %v6327
          %v6434 = vpop.permute.xlu0 %6433
          %6437 = vset.pattern.permute.xlu0 0
          %6438 = vperm.xlu0 %6437, %v6328
          %v6439 = vpop.permute.xlu0 %6438
          %6442 = vset.pattern.permute.xlu0 0
          %6443 = vperm.xlu0 %6442, %v6329
          %v6444 = vpop.permute.xlu0 %6443
          %6447 = vset.pattern.permute.xlu0 0
          %6448 = vperm.xlu0 %6447, %v6330
          %v6449 = vpop.permute.xlu0 %6448
          %6452 = vset.pattern.permute.xlu0 0
          %6453 = vperm.xlu0 %6452, %v6331
          %v6454 = vpop.permute.xlu0 %6453
          %6457 = vset.pattern.permute.xlu0 0
          %6458 = vperm.xlu0 %6457, %v6332
          %v6459 = vpop.permute.xlu0 %6458
          %6462 = vset.pattern.permute.xlu0 0
          %6463 = vperm.xlu0 %6462, %v6333
          %v6464 = vpop.permute.xlu0 %6463
          %6467 = vset.pattern.permute.xlu0 0
          %6468 = vperm.xlu0 %6467, %v6334
          %v6469 = vpop.permute.xlu0 %6468
          %6472 = vset.pattern.permute.xlu0 0
          %6473 = vperm.xlu0 %6472, %v6335
          %v6474 = vpop.permute.xlu0 %6473
          %6477 = vset.pattern.permute.xlu0 0
          %6478 = vperm.xlu0 %6477, %v6336
          %v6479 = vpop.permute.xlu0 %6478
          %6482 = vset.pattern.permute.xlu0 0
          %6483 = vperm.xlu0 %6482, %v6337
          %v6484 = vpop.permute.xlu0 %6483
          %6487 = vset.pattern.permute.xlu0 0
          %6488 = vperm.xlu0 %6487, %v6338
          %v6489 = vpop.permute.xlu0 %6488
          %6492 = vset.pattern.permute.xlu0 0
          %6493 = vperm.xlu0 %6492, %v6339
          %v6494 = vpop.permute.xlu0 %6493
          %6497 = vset.pattern.permute.xlu0 0
          %6498 = vperm.xlu0 %6497, %v6340
          %v6499 = vpop.permute.xlu0 %6498
          %6502 = vset.pattern.permute.xlu0 0
          %6503 = vperm.xlu0 %6502, %v6341
          %v6504 = vpop.permute.xlu0 %6503
          %6507 = vset.pattern.permute.xlu0 0
          %6508 = vperm.xlu0 %6507, %v6342
          %v6509 = vpop.permute.xlu0 %6508
          %6512 = vset.pattern.permute.xlu0 0
          %6513 = vperm.xlu0 %6512, %v6343
          %v6514 = vpop.permute.xlu0 %6513
          %6517 = vset.pattern.permute.xlu0 0
          %6518 = vperm.xlu0 %6517, %v6344
          %v6519 = vpop.permute.xlu0 %6518
          %6522 = vset.pattern.permute.xlu0 0
          %6523 = vperm.xlu0 %6522, %v6345
          %v6524 = vpop.permute.xlu0 %6523
          %6527 = vset.pattern.permute.xlu0 0
          %6528 = vperm.xlu0 %6527, %v6346
          %v6529 = vpop.permute.xlu0 %6528
          %6532 = vset.pattern.permute.xlu0 0
          %6533 = vperm.xlu0 %6532, %v6347
          %v6534 = vpop.permute.xlu0 %6533
          %6537 = vset.pattern.permute.xlu0 0
          %6538 = vperm.xlu0 %6537, %v6348
          %v6539 = vpop.permute.xlu0 %6538
          %6542 = vset.pattern.permute.xlu0 0
          %6543 = vperm.xlu0 %6542, %v6349
          %v6544 = vpop.permute.xlu0 %6543
          %6547 = vset.pattern.permute.xlu0 0
          %6548 = vperm.xlu0 %6547, %v6350
          %v6549 = vpop.permute.xlu0 %6548
          %6552 = vset.pattern.permute.xlu0 0
          %6553 = vperm.xlu0 %6552, %v6351
          %v6554 = vpop.permute.xlu0 %6553
          %6557 = vset.pattern.permute.xlu0 0
          %6558 = vperm.xlu0 %6557, %v6352
          %v6559 = vpop.permute.xlu0 %6558
          %6562 = vset.pattern.permute.xlu0 0
          %6563 = vperm.xlu0 %6562, %v6353
          %v6564 = vpop.permute.xlu0 %6563
          %6567 = vset.pattern.permute.xlu0 0
          %6568 = vperm.xlu0 %6567, %v6354
          %v6569 = vpop.permute.xlu0 %6568
          %6572 = vset.pattern.permute.xlu0 0
          %6573 = vperm.xlu0 %6572, %v6355
          %v6574 = vpop.permute.xlu0 %6573
          %6577 = vset.pattern.permute.xlu0 0
          %6578 = vperm.xlu0 %6577, %v6356
          %v6579 = vpop.permute.xlu0 %6578
          %6582 = vset.pattern.permute.xlu0 0
          %6583 = vperm.xlu0 %6582, %v6357
          %v6584 = vpop.permute.xlu0 %6583
          %6587 = vset.pattern.permute.xlu0 0
          %6588 = vperm.xlu0 %6587, %v6358
          %v6589 = vpop.permute.xlu0 %6588
          %6592 = vset.pattern.permute.xlu0 0
          %6593 = vperm.xlu0 %6592, %v6359
          %v6594 = vpop.permute.xlu0 %6593
          %6597 = vset.pattern.permute.xlu0 0
          %6598 = vperm.xlu0 %6597, %v6360
          %v6599 = vpop.permute.xlu0 %6598
          %6602 = vset.pattern.permute.xlu0 0
          %6603 = vperm.xlu0 %6602, %v6361
          %v6604 = vpop.permute.xlu0 %6603
          %6607 = vset.pattern.permute.xlu0 0
          %6608 = vperm.xlu0 %6607, %v6362
          %v6609 = vpop.permute.xlu0 %6608
          %6612 = vset.pattern.permute.xlu0 0
          %6613 = vperm.xlu0 %6612, %v6363
          %v6614 = vpop.permute.xlu0 %6613
          %6617 = vset.pattern.permute.xlu0 0
          %6618 = vperm.xlu0 %6617, %v6364
          %v6619 = vpop.permute.xlu0 %6618
          %6622 = vset.pattern.permute.xlu0 0
          %6623 = vperm.xlu0 %6622, %v6365
          %v6624 = vpop.permute.xlu0 %6623
          %6627 = vset.pattern.permute.xlu0 0
          %6628 = vperm.xlu0 %6627, %v6366
          %v6629 = vpop.permute.xlu0 %6628
          %6632 = vset.pattern.permute.xlu0 0
          %6633 = vperm.xlu0 %6632, %v6367
          %v6634 = vpop.permute.xlu0 %6633
          %6637 = vset.pattern.permute.xlu0 0
          %6638 = vperm.xlu0 %6637, %v6368
          %v6639 = vpop.permute.xlu0 %6638
          %6642 = vset.pattern.permute.xlu0 0
          %6643 = vperm.xlu0 %6642, %v6369
          %v6644 = vpop.permute.xlu0 %6643
          %6647 = vset.pattern.permute.xlu0 0
          %6648 = vperm.xlu0 %6647, %v6370
          %v6649 = vpop.permute.xlu0 %6648
          %6652 = vset.pattern.permute.xlu0 0
          %6653 = vperm.xlu0 %6652, %v6371
          %v6654 = vpop.permute.xlu0 %6653
          %6657 = vset.pattern.permute.xlu0 0
          %6658 = vperm.xlu0 %6657, %v6372
          %v6659 = vpop.permute.xlu0 %6658
          %6662 = vset.pattern.permute.xlu0 0
          %6663 = vperm.xlu0 %6662, %v6373
          %v6664 = vpop.permute.xlu0 %6663
          %6667 = vset.pattern.permute.xlu0 0
          %6668 = vperm.xlu0 %6667, %v6374
          %v6669 = vpop.permute.xlu0 %6668
          %6672 = vset.pattern.permute.xlu0 0
          %6673 = vperm.xlu0 %6672, %v6375
          %v6674 = vpop.permute.xlu0 %6673
          %6677 = vset.pattern.permute.xlu0 0
          %6678 = vperm.xlu0 %6677, %v6376
          %v6679 = vpop.permute.xlu0 %6678
          %6682 = vset.pattern.permute.xlu0 0
          %6683 = vperm.xlu0 %6682, %v6377
          %v6684 = vpop.permute.xlu0 %6683
          %6687 = vset.pattern.permute.xlu0 0
          %6688 = vperm.xlu0 %6687, %v6378
          %v6689 = vpop.permute.xlu0 %6688
          %6692 = vset.pattern.permute.xlu0 0
          %6693 = vperm.xlu0 %6692, %v6379
          %v6694 = vpop.permute.xlu0 %6693
          %6697 = vset.pattern.permute.xlu0 0
          %6698 = vperm.xlu0 %6697, %v6380
          %v6699 = vpop.permute.xlu0 %6698
          %v6701 = vadd.f32 %v6253, %v6384
          %v6702 = vadd.f32 %v6254, %v6389
          %v6703 = vadd.f32 %v6255, %v6394
          %v6704 = vadd.f32 %v6256, %v6399
          %v6705 = vadd.f32 %v6257, %v6404
          %v6706 = vadd.f32 %v6258, %v6409
          %v6707 = vadd.f32 %v6259, %v6414
          %v6708 = vadd.f32 %v6260, %v6419
          %v6709 = vadd.f32 %v6261, %v6424
          %v6710 = vadd.f32 %v6262, %v6429
          %v6711 = vadd.f32 %v6263, %v6434
          %v6712 = vadd.f32 %v6264, %v6439
          %v6713 = vadd.f32 %v6265, %v6444
          %v6714 = vadd.f32 %v6266, %v6449
          %v6715 = vadd.f32 %v6267, %v6454
          %v6716 = vadd.f32 %v6268, %v6459
          %v6717 = vadd.f32 %v6269, %v6464
          %v6718 = vadd.f32 %v6270, %v6469
          %v6719 = vadd.f32 %v6271, %v6474
          %v6720 = vadd.f32 %v6272, %v6479
          %v6721 = vadd.f32 %v6273, %v6484
          %v6722 = vadd.f32 %v6274, %v6489
          %v6723 = vadd.f32 %v6275, %v6494
          %v6724 = vadd.f32 %v6276, %v6499
          %v6725 = vadd.f32 %v6277, %v6504
          %v6726 = vadd.f32 %v6278, %v6509
          %v6727 = vadd.f32 %v6279, %v6514
          %v6728 = vadd.f32 %v6280, %v6519
          %v6729 = vadd.f32 %v6281, %v6524
          %v6730 = vadd.f32 %v6282, %v6529
          %v6731 = vadd.f32 %v6283, %v6534
          %v6732 = vadd.f32 %v6284, %v6539
          %v6733 = vadd.f32 %v6285, %v6544
          %v6734 = vadd.f32 %v6286, %v6549
          %v6735 = vadd.f32 %v6287, %v6554
          %v6736 = vadd.f32 %v6288, %v6559
          %v6737 = vadd.f32 %v6289, %v6564
          %v6738 = vadd.f32 %v6290, %v6569
          %v6739 = vadd.f32 %v6291, %v6574
          %v6740 = vadd.f32 %v6292, %v6579
          %v6741 = vadd.f32 %v6293, %v6584
          %v6742 = vadd.f32 %v6294, %v6589
          %v6743 = vadd.f32 %v6295, %v6594
          %v6744 = vadd.f32 %v6296, %v6599
          %v6745 = vadd.f32 %v6297, %v6604
          %v6746 = vadd.f32 %v6298, %v6609
          %v6747 = vadd.f32 %v6299, %v6614
          %v6748 = vadd.f32 %v6300, %v6619
          %v6749 = vadd.f32 %v6301, %v6624
          %v6750 = vadd.f32 %v6302, %v6629
          %v6751 = vadd.f32 %v6303, %v6634
          %v6752 = vadd.f32 %v6304, %v6639
          %v6753 = vadd.f32 %v6305, %v6644
          %v6754 = vadd.f32 %v6306, %v6649
          %v6755 = vadd.f32 %v6307, %v6654
          %v6756 = vadd.f32 %v6308, %v6659
          %v6757 = vadd.f32 %v6309, %v6664
          %v6758 = vadd.f32 %v6310, %v6669
          %v6759 = vadd.f32 %v6311, %v6674
          %v6760 = vadd.f32 %v6312, %v6679
          %v6761 = vadd.f32 %v6313, %v6684
          %v6762 = vadd.f32 %v6314, %v6689
          %v6763 = vadd.f32 %v6315, %v6694
          %v6764 = vadd.f32 %v6316, %v6699
          %6765 = vst [vmem:[%s170] sm:$0xff] %v6701
          %6766 = vst [vmem:[%s170 + $0x8] sm:$0xff] %v6702
          %6767 = vst [vmem:[%s170 + $0x10] sm:$0xff] %v6703
          %6768 = vst [vmem:[%s170 + $0x18] sm:$0xff] %v6704
          %6769 = vst [vmem:[%s170 + $0x20] sm:$0xff] %v6705
          %6770 = vst [vmem:[%s170 + $0x28] sm:$0xff] %v6706
          %6771 = vst [vmem:[%s170 + $0x30] sm:$0xff] %v6707
          %6772 = vst [vmem:[%s170 + $0x38] sm:$0xff] %v6708
          %6773 = vst [vmem:[%s170 + $0x40] sm:$0xff] %v6709
          %6774 = vst [vmem:[%s170 + $0x48] sm:$0xff] %v6710
          %6775 = vst [vmem:[%s170 + $0x50] sm:$0xff] %v6711
          %6776 = vst [vmem:[%s170 + $0x58] sm:$0xff] %v6712
          %6777 = vst [vmem:[%s170 + $0x60] sm:$0xff] %v6713
          %6778 = vst [vmem:[%s170 + $0x68] sm:$0xff] %v6714
          %6779 = vst [vmem:[%s170 + $0x70] sm:$0xff] %v6715
          %6780 = vst [vmem:[%s170 + $0x78] sm:$0xff] %v6716
          %6781 = vst [vmem:[%s170 + $0x80] sm:$0xff] %v6717
          %6782 = vst [vmem:[%s170 + $0x88] sm:$0xff] %v6718
          %6783 = vst [vmem:[%s170 + $0x90] sm:$0xff] %v6719
          %6784 = vst [vmem:[%s170 + $0x98] sm:$0xff] %v6720
          %6785 = vst [vmem:[%s170 + $0xa0] sm:$0xff] %v6721
          %6786 = vst [vmem:[%s170 + $0xa8] sm:$0xff] %v6722
          %6787 = vst [vmem:[%s170 + $0xb0] sm:$0xff] %v6723
          %6788 = vst [vmem:[%s170 + $0xb8] sm:$0xff] %v6724
          %6789 = vst [vmem:[%s170 + $0xc0] sm:$0xff] %v6725
          %6790 = vst [vmem:[%s170 + $0xc8] sm:$0xff] %v6726
          %6791 = vst [vmem:[%s170 + $0xd0] sm:$0xff] %v6727
          %6792 = vst [vmem:[%s170 + $0xd8] sm:$0xff] %v6728
          %6793 = vst [vmem:[%s170 + $0xe0] sm:$0xff] %v6729
          %6794 = vst [vmem:[%s170 + $0xe8] sm:$0xff] %v6730
          %6795 = vst [vmem:[%s170 + $0xf0] sm:$0xff] %v6731
          %6796 = vst [vmem:[%s170 + $0xf8] sm:$0xff] %v6732
          %6797 = vst [vmem:[%s170 + $0x100] sm:$0xff] %v6733
          %6798 = vst [vmem:[%s170 + $0x108] sm:$0xff] %v6734
          %6799 = vst [vmem:[%s170 + $0x110] sm:$0xff] %v6735
          %6800 = vst [vmem:[%s170 + $0x118] sm:$0xff] %v6736
          %6801 = vst [vmem:[%s170 + $0x120] sm:$0xff] %v6737
          %6802 = vst [vmem:[%s170 + $0x128] sm:$0xff] %v6738
          %6803 = vst [vmem:[%s170 + $0x130] sm:$0xff] %v6739
          %6804 = vst [vmem:[%s170 + $0x138] sm:$0xff] %v6740
          %6805 = vst [vmem:[%s170 + $0x140] sm:$0xff] %v6741
          %6806 = vst [vmem:[%s170 + $0x148] sm:$0xff] %v6742
          %6807 = vst [vmem:[%s170 + $0x150] sm:$0xff] %v6743
          %6808 = vst [vmem:[%s170 + $0x158] sm:$0xff] %v6744
          %6809 = vst [vmem:[%s170 + $0x160] sm:$0xff] %v6745
          %6810 = vst [vmem:[%s170 + $0x168] sm:$0xff] %v6746
          %6811 = vst [vmem:[%s170 + $0x170] sm:$0xff] %v6747
          %6812 = vst [vmem:[%s170 + $0x178] sm:$0xff] %v6748
          %6813 = vst [vmem:[%s170 + $0x180] sm:$0xff] %v6749
          %6814 = vst [vmem:[%s170 + $0x188] sm:$0xff] %v6750
          %6815 = vst [vmem:[%s170 + $0x190] sm:$0xff] %v6751
          %6816 = vst [vmem:[%s170 + $0x198] sm:$0xff] %v6752
          %6817 = vst [vmem:[%s170 + $0x1a0] sm:$0xff] %v6753
          %6818 = vst [vmem:[%s170 + $0x1a8] sm:$0xff] %v6754
          %6819 = vst [vmem:[%s170 + $0x1b0] sm:$0xff] %v6755
          %6820 = vst [vmem:[%s170 + $0x1b8] sm:$0xff] %v6756
          %6821 = vst [vmem:[%s170 + $0x1c0] sm:$0xff] %v6757
          %6822 = vst [vmem:[%s170 + $0x1c8] sm:$0xff] %v6758
          %6823 = vst [vmem:[%s170 + $0x1d0] sm:$0xff] %v6759
          %6824 = vst [vmem:[%s170 + $0x1d8] sm:$0xff] %v6760
          %6825 = vst [vmem:[%s170 + $0x1e0] sm:$0xff] %v6761
          %6826 = vst [vmem:[%s170 + $0x1e8] sm:$0xff] %v6762
          %6827 = vst [vmem:[%s170 + $0x1f0] sm:$0xff] %v6763
          %6828 = vst [vmem:[%s170 + $0x1f8] sm:$0xff] %v6764
        $region54: #{net_s_forward.1} parent=27 // pred_fallthru
          _
        %p6829 = scmp.lt.s32.totalorder %s18, 1
        %s6830 = scalar_select %p6829, %s18, 1
        %s6831 = smul.addr %s6830, 64
        %s6832 = smul.addr %s6831, 8
        %s6833 = scalar_lea.vmem %s2, %s6832
        // Predicated region
        $region55: #{net_s_forward.1} parent=27 // pred_check
          %p6834 = pneg %p91
        $region56: #{net_s_forward.1} parent=27 // pred_check_branch
          %6836 = sbr.rel (%p6834) target = $region58
        $region57: #{net_s_forward.1} parent=27 // pred_region
          _
        $region58: #{net_s_forward.1} parent=27 // pred_fallthru
          _
      $region28: #{net_s_forward.1} parent=5 // pred_fallthru
        _
      %p6837 = scmp.le.s32.totalorder 2, %s9
      // Predicated region
      $region59: #{net_s_forward.1} parent=5 // pred_check
        %p6838 = pneg %p6837
      $region60: #{net_s_forward.1} parent=5 // pred_check_branch
        %6840 = sbr.rel (%p6838) target = $region62
      $region61: #{net_s_forward.1} parent=5 // pred_region
        %s6841 = ssub.s32 %s9, 2
        // Predicated region
        $region63: #{net_s_forward.1} parent=61 // pred_check
          %p6842 = pneg %p97
        $region64: #{net_s_forward.1} parent=61 // pred_check_branch
          %6844 = sbr.rel (%p6842) target = $region66
        $region65: #{net_s_forward.1} parent=61 // pred_region
          %p6845 = scmp.lt.s32.totalorder %s20, 1
          %s6846 = scalar_select %p6845, %s20, 1
          %s6847 = smul.addr %s6846, 64
          %s6848 = smul.addr %s6847, 8
          %s6849 = scalar_lea.vmem %s2, %s6848
        $region66: #{net_s_forward.1} parent=61 // pred_fallthru
          _
      $region62: #{net_s_forward.1} parent=5 // pred_fallthru
        _
    $region6: #{net_s_forward.1} parent=1 // loop_footer
      %s13 = sadd.s32 1, %s9
    $region7: #{net_s_forward.1} parent=1 // loop_footer_branch
      %8 = sbr.rel target = $region3
    $region8: #{net_s_forward.1} parent=1 // loop_exit
      _
    %6850 = vsyncpa [#allocation5], 1
    %s6851 = scalar_lea.sflag [#allocation5], 1
    %6852 = vsyncpa %s6851, 1

</llo_original>
